<compile_context>
chip_gen: v5e
topology: v5e:2x2
jax: 0.10.0
libtpu: 0.0.40
codegen_flags: <defaults>
</compile_context>

<pallas_src>
import jax
import jax.numpy as jnp
from jax import lax
from jax.experimental import pallas as pl
from jax.experimental.pallas import tpu as pltpu

NUM_CLASSES = 10


def _round_up(x, m):
    return (x + m - 1) // m * m


# ----------------------------------------------------------------------------
# Fused kernel: one grid step == BB images through the whole network.
# ----------------------------------------------------------------------------
def _cnn_kernel(xe_ref, xo_ref, w1_ref, b1_ref, w2_ref, b2_ref,
                wf1_ref, bf1_ref, wf2_ref, bf2_ref, wf3_ref, bf3_ref,
                o_ref, p1_s, p2_s):
    BB = xe_ref.shape[0] // 14          # images per grid step
    NE = BB * 7 - 2                     # conv2 output-slab rows (7/image, junk tail)

    # ---- conv1 + bias + ReLU + 2x2 maxpool --------------------------------
    # xe/xo: H-banded LHS for even / odd conv-output rows (K = 480).
    # Weight columns: even-W conv outputs in lanes [0,128), odd-W in [128,256).
    acc_e = jnp.dot(xe_ref[...], w1_ref[...], preferred_element_type=jnp.float32)
    acc_o = jnp.dot(xo_ref[...], w1_ref[...], preferred_element_type=jnp.float32)
    m1 = jnp.maximum(jnp.maximum(acc_e[:, :128], acc_e[:, 128:]),
                     jnp.maximum(acc_o[:, :128], acc_o[:, 128:]))
    # pooled activation, lane = jw*6 + c (84 valid lanes, rest exactly 0)
    p1_s[...] = jnp.maximum(m1 + b1_ref[...], 0.0)            # (BB*14, 128) f32

    # ---- conv2 + bias + ReLU + 2x2 maxpool --------------------------------
    # Banded matmuls over strided row windows of p1: stride-2 row selection
    # gives even / odd conv2-output rows (H pool pairing); W pooling comes from
    # the two 128-lane weight halves again.
    acc2e = jnp.zeros((NE, 256), jnp.float32)
    acc2o = jnp.zeros((NE, 256), jnp.float32)
    for di in range(5):                                        # kernel rows (unrolled)
        w2d = w2_ref[di]                                       # (128, 256) bf16
        lhs_e = p1_s[pl.ds(di, NE, 2), :].astype(jnp.bfloat16)
        lhs_o = p1_s[pl.ds(di + 1, NE, 2), :].astype(jnp.bfloat16)
        acc2e = acc2e + jnp.dot(lhs_e, w2d, preferred_element_type=jnp.float32)
        acc2o = acc2o + jnp.dot(lhs_o, w2d, preferred_element_type=jnp.float32)
    m2 = jnp.maximum(jnp.maximum(acc2e[:, :128], acc2e[:, 128:]),
                     jnp.maximum(acc2o[:, :128], acc2o[:, 128:]))
    # pooled activation, lane = j*16 + c; valid rows are b*7 + i, i in [0, 5)
    p2_s[...] = jnp.maximum(m2 + b2_ref[...], 0.0)             # (NE, 128) f32

    # ---- fc1 + ReLU (pool compaction + NCHW flatten folded into wf1) ------
    acc = bf1_ref[...]                                         # (1, 128), broadcasts
    for h in range(5):                                         # pooled rows (unrolled)
        lhs = p2_s[pl.ds(h, BB, 7), :].astype(jnp.bfloat16)    # (BB, 128)
        acc = acc + jnp.dot(lhs, wf1_ref[h], preferred_element_type=jnp.float32)
    h1 = jnp.maximum(acc, 0.0)

    # ---- fc2 + ReLU, fc3 (lane-dense (BB, 128) output store) --------------
    h2 = jnp.maximum(
        jnp.dot(h1.astype(jnp.bfloat16), wf2_ref[...],
                preferred_element_type=jnp.float32) + bf2_ref[...], 0.0)
    o_ref[...] = jnp.dot(h2.astype(jnp.bfloat16), wf3_ref[...],
                         preferred_element_type=jnp.float32) + bf3_ref[...]


# ----------------------------------------------------------------------------
# Weight packing (plain JAX, done once outside the forward pass).
# ----------------------------------------------------------------------------
def _conv_pool_cols(w, w_in):
    """Pack conv weight (Cout,Cin,kh,kw) into kh banded matrices whose output
    columns are conv outputs at even W (lanes [0,128)) and odd W ([128,256)),
    so a fused 2x2 W-maxpool is max of the two aligned halves.

    Returns (kh, w_in*Cin, 256) f32 with
      M[di, wi*Cin + ci, {0,128} + jw*Cout + co] = w[co, ci, di, wi - (2*jw + {0,1})]
    (zero where the kw index is out of range)."""
    cout, cin, kh, kw = w.shape
    w_pool = (w_in - kw + 1) // 2
    wi = jnp.arange(w_in)
    wt = jnp.transpose(w, (2, 3, 1, 0)).astype(jnp.float32)   # (kh, kw, cin, cout)
    halves = []
    for parity in (0, 1):
        wo = 2 * jnp.arange(w_pool) + parity                  # conv output columns
        dj = wi[:, None] - wo[None, :]                        # (w_in, w_pool)
        valid = (dj >= 0) & (dj < kw)
        vals = wt[:, jnp.clip(dj, 0, kw - 1)]                 # (kh, w_in, w_pool, cin, cout)
        vals = jnp.where(valid[None, :, :, None, None], vals, 0.0)
        vals = jnp.transpose(vals, (0, 1, 3, 2, 4))           # (kh, w_in, cin, w_pool, cout)
        vals = vals.reshape(kh, w_in * cin, w_pool * cout)
        halves.append(jnp.pad(vals, ((0, 0), (0, 0), (0, 128 - w_pool * cout))))
    return jnp.concatenate(halves, axis=-1)                   # (kh, w_in*cin, 256)


def pack_params(params):
    """Repack torch-layout parameters for the fused kernel (done once)."""
    w1, b1, w2, b2, wf1, bf1, wf2, bf2, wf3, bf3 = params

    # conv1: 5 bands fused along K -> (480, 256) bf16; bias tiled over pooled W.
    w1p = _conv_pool_cols(w1, 32).reshape(5 * 96, 256).astype(jnp.bfloat16)
    b1p = jnp.pad(jnp.tile(b1, 14), (0, 128 - 84))[None, :].astype(jnp.float32)

    # conv2: (5, 84, 256) -> pad K rows to 128 (p1 scratch is 128 lanes wide).
    w2p = jnp.pad(_conv_pool_cols(w2, 14), ((0, 0), (0, 128 - 84), (0, 0)))
    w2p = w2p.astype(jnp.bfloat16)                            # (5, 128, 256)
    b2p = jnp.pad(jnp.tile(b2, 5), (0, 128 - 80))[None, :].astype(jnp.float32)

    # fc1: fold torch's NCHW flatten (k = c*25 + h*5 + j) and the pool-2 lane
    # layout (lane = j*16 + c) into per-pooled-row (128, 128) blocks.
    wf1p = wf1.reshape(120, 16, 5, 5).transpose(2, 3, 1, 0)   # (h, j, c, out)
    wf1p = wf1p.reshape(5, 80, 120)
    wf1p = jnp.pad(wf1p, ((0, 0), (0, 128 - 80), (0, 128 - 120))).astype(jnp.bfloat16)
    bf1p = jnp.pad(bf1, (0, 128 - 120))[None, :].astype(jnp.float32)

    wf2p = jnp.pad(wf2.T, ((0, 128 - 120), (0, 128 - 84))).astype(jnp.bfloat16)
    bf2p = jnp.pad(bf2, (0, 128 - 84))[None, :].astype(jnp.float32)
    wf3p = jnp.pad(wf3.T, ((0, 128 - 84), (0, 128 - NUM_CLASSES))).astype(jnp.bfloat16)
    bf3p = jnp.pad(bf3, (0, 128 - NUM_CLASSES))[None, :].astype(jnp.float32)
    return (w1p, b1p, w2p, b2p, wf1p, bf1p, wf2p, bf2p, wf3p, bf3p)


# ----------------------------------------------------------------------------
# Forward pass (single pallas_call, batch-blocked grid).
# ----------------------------------------------------------------------------
def cnn_cifar_forward(x, kparams, block_b=32):
    (w1p, b1p, w2p, b2p, wf1p, bf1p, wf2p, bf2p, wf3p, bf3p) = kparams
    x = x.reshape(-1, 3, 32, 32).astype(jnp.float32)
    B = x.shape[0]
    BB = _round_up(min(block_b, B), 8)            # images per grid step (mult. of 8)
    B_pad = _round_up(B, BB)
    if B_pad != B:
        x = jnp.pad(x, ((0, B_pad - B), (0, 0), (0, 0), (0, 0)))

    # NCHW -> NHWC -> width*channel lane packing (lane = w*3 + c), then build the
    # H-banded conv1 LHS (K = 5*96) and split it into even / odd conv-output rows
    # so the kernel's max over the two dot results realizes the H pooling.
    xp = jnp.transpose(x, (0, 2, 3, 1)).reshape(B_pad, 32, 96)
    xb = jnp.concatenate([xp[:, di:di + 28, :] for di in range(5)], axis=-1)
    xe = xb[:, 0::2, :].reshape(B_pad * 14, 480).astype(jnp.bfloat16)
    xo = xb[:, 1::2, :].reshape(B_pad * 14, 480).astype(jnp.bfloat16)

    out = pl.pallas_call(
        _cnn_kernel,
        out_shape=jax.ShapeDtypeStruct((B_pad, 128), jnp.float32),
        grid=(B_pad // BB,),
        in_specs=[
            pl.BlockSpec((BB * 14, 480), lambda s: (s, 0)),    # conv1 LHS, even rows
            pl.BlockSpec((BB * 14, 480), lambda s: (s, 0)),    # conv1 LHS, odd rows
            pl.BlockSpec((480, 256), lambda s: (0, 0)),        # conv1 weights (fused K)
            pl.BlockSpec((1, 128), lambda s: (0, 0)),          # conv1 bias
            pl.BlockSpec((5, 128, 256), lambda s: (0, 0, 0)),  # conv2 band weights
            pl.BlockSpec((1, 128), lambda s: (0, 0)),          # conv2 bias
            pl.BlockSpec((5, 128, 128), lambda s: (0, 0, 0)),  # fc1 weights
            pl.BlockSpec((1, 128), lambda s: (0, 0)),          # fc1 bias
            pl.BlockSpec((128, 128), lambda s: (0, 0)),        # fc2 weight
            pl.BlockSpec((1, 128), lambda s: (0, 0)),          # fc2 bias
            pl.BlockSpec((128, 128), lambda s: (0, 0)),        # fc3 weight
            pl.BlockSpec((1, 128), lambda s: (0, 0)),          # fc3 bias
        ],
        out_specs=pl.BlockSpec((BB, 128), lambda s: (s, 0)),
        scratch_shapes=[
            pltpu.VMEM((BB * 14, 128), jnp.float32),           # pooled conv1 activations
            pltpu.VMEM((BB * 7 - 2, 128), jnp.float32),        # pooled conv2 activations
        ],
        compiler_params=pltpu.CompilerParams(
            dimension_semantics=("parallel",)),
    )(xe, xo, w1p, b1p, w2p, b2p, wf1p, bf1p, wf2p, bf2p, wf3p, bf3p)

    return out[:B, :NUM_CLASSES]


# ----------------------------------------------------------------------------
# Torch-style init + pure-JAX reference (for correctness check).
# ----------------------------------------------------------------------------
def init_params(key):
    ks = jax.random.split(key, 10)

    def u(k, shape, fan_in):
        bound = 1.0 / float(fan_in) ** 0.5
        return jax.random.uniform(k, shape, jnp.float32, -bound, bound)

    w1 = u(ks[0], (6, 3, 5, 5), 3 * 5 * 5); b1 = u(ks[1], (6,), 3 * 5 * 5)
    w2 = u(ks[2], (16, 6, 5, 5), 6 * 5 * 5); b2 = u(ks[3], (16,), 6 * 5 * 5)
    wf1 = u(ks[4], (120, 400), 400); bf1 = u(ks[5], (120,), 400)
    wf2 = u(ks[6], (84, 120), 120); bf2 = u(ks[7], (84,), 120)
    wf3 = u(ks[8], (NUM_CLASSES, 84), 84); bf3 = u(ks[9], (NUM_CLASSES,), 84)
    return (w1, b1, w2, b2, wf1, bf1, wf2, bf2, wf3, bf3)


def reference_forward(x, params):
    w1, b1, w2, b2, wf1, bf1, wf2, bf2, wf3, bf3 = params
    x = x.reshape(-1, 3, 32, 32).astype(jnp.float32)
    dn = ("NCHW", "OIHW", "NCHW")
    y = lax.conv_general_dilated(x, w1, (1, 1), "VALID", dimension_numbers=dn)
    y = jax.nn.relu(y + b1[None, :, None, None])
    y = lax.reduce_window(y, -jnp.inf, lax.max, (1, 1, 2, 2), (1, 1, 2, 2), "VALID")
    y = lax.conv_general_dilated(y, w2, (1, 1), "VALID", dimension_numbers=dn)
    y = jax.nn.relu(y + b2[None, :, None, None])
    y = lax.reduce_window(y, -jnp.inf, lax.max, (1, 1, 2, 2), (1, 1, 2, 2), "VALID")
    f = y.reshape(y.shape[0], -1)                 # NCHW flatten, like torch .view
    h = jax.nn.relu(f @ wf1.T + bf1)
    h = jax.nn.relu(h @ wf2.T + bf2)
    return h @ wf3.T + bf3


if __name__ == "__main__":
    key = jax.random.PRNGKey(0)
    pkey, xkey = jax.random.split(key)
    params = init_params(pkey)
    kparams = pack_params(params)                 # packed once; VMEM-resident in kernel

    x = jax.random.normal(xkey, (2, 3, 32, 32), jnp.float32)

    fwd = jax.jit(cnn_cifar_forward)
    out = jax.block_until_ready(fwd(x, kparams))
    assert out.shape == (2, NUM_CLASSES), out.shape
    assert out.dtype == jnp.float32

    ref = reference_forward(x, params)
    max_err = float(jnp.max(jnp.abs(out - ref)))
    # bf16 MXU operands -> tolerance loosened accordingly.
    assert bool(jnp.allclose(out, ref, atol=2e-2, rtol=2e-2)), max_err
    print("KERNEL_OK")
</pallas_src>

<mosaic_0001>
module attributes {stable_mosaic.version = 11 : i64} {
  func.func @_cnn_kernel(%arg0: i32, %arg1: memref<112x480xbf16, #tpu.memory_space<vmem>>, %arg2: memref<112x480xbf16, #tpu.memory_space<vmem>>, %arg3: memref<480x256xbf16, #tpu.memory_space<vmem>>, %arg4: memref<1x128xf32, #tpu.memory_space<vmem>>, %arg5: memref<5x128x256xbf16, #tpu.memory_space<vmem>>, %arg6: memref<1x128xf32, #tpu.memory_space<vmem>>, %arg7: memref<5x128x128xbf16, #tpu.memory_space<vmem>>, %arg8: memref<1x128xf32, #tpu.memory_space<vmem>>, %arg9: memref<128x128xbf16, #tpu.memory_space<vmem>>, %arg10: memref<1x128xf32, #tpu.memory_space<vmem>>, %arg11: memref<128x128xbf16, #tpu.memory_space<vmem>>, %arg12: memref<1x128xf32, #tpu.memory_space<vmem>>, %arg13: memref<8x128xf32, #tpu.memory_space<vmem>>, %arg14: memref<112x128xf32, #tpu.memory_space<vmem>>, %arg15: memref<54x128xf32, #tpu.memory_space<vmem>>) attributes {dimension_semantics = [#tpu.dimension_semantics<parallel>], iteration_bounds = array<i64: 1>, scalar_prefetch = 0 : i64, scratch_operands = 2 : i64, tpu.core_type = #tpu.core_type<tc>, window_params = [{transform_indices = @transform_0, window_bounds = array<i64: 112, 480>}, {transform_indices = @transform_1, window_bounds = array<i64: 112, 480>}, {pipeline_mode = #tpu.pipeline_mode<synchronous>, transform_indices = @transform_2, window_bounds = array<i64: 480, 256>}, {pipeline_mode = #tpu.pipeline_mode<synchronous>, transform_indices = @transform_3, window_bounds = array<i64: 1, 128>}, {pipeline_mode = #tpu.pipeline_mode<synchronous>, transform_indices = @transform_4, window_bounds = array<i64: 5, 128, 256>}, {pipeline_mode = #tpu.pipeline_mode<synchronous>, transform_indices = @transform_5, window_bounds = array<i64: 1, 128>}, {pipeline_mode = #tpu.pipeline_mode<synchronous>, transform_indices = @transform_6, window_bounds = array<i64: 5, 128, 128>}, {pipeline_mode = #tpu.pipeline_mode<synchronous>, transform_indices = @transform_7, window_bounds = array<i64: 1, 128>}, {pipeline_mode = #tpu.pipeline_mode<synchronous>, transform_indices = @transform_8, window_bounds = array<i64: 128, 128>}, {pipeline_mode = #tpu.pipeline_mode<synchronous>, transform_indices = @transform_9, window_bounds = array<i64: 1, 128>}, {pipeline_mode = #tpu.pipeline_mode<synchronous>, transform_indices = @transform_10, window_bounds = array<i64: 128, 128>}, {pipeline_mode = #tpu.pipeline_mode<synchronous>, transform_indices = @transform_11, window_bounds = array<i64: 1, 128>}, {transform_indices = @transform_12, window_bounds = array<i64: 8, 128>}]} {
    %c0 = arith.constant 0 : index
    %c0_0 = arith.constant 0 : index
    %0 = vector.load %arg1[%c0, %c0_0] : memref<112x480xbf16, #tpu.memory_space<vmem>>, vector<112x480xbf16>
    %c0_1 = arith.constant 0 : index
    %c0_2 = arith.constant 0 : index
    %1 = vector.load %arg3[%c0_1, %c0_2] : memref<480x256xbf16, #tpu.memory_space<vmem>>, vector<480x256xbf16>
    %cst = arith.constant dense<0.000000e+00> : vector<112x256xf32>
    %2 = tpu.matmul %0, %1, %cst {dimension_numbers = #tpu.dot_dimension_numbers<[1], [0], [0], [1], [0, 0, 1, 1], [], []>} : vector<112x480xbf16>, vector<480x256xbf16>, vector<112x256xf32> -> vector<112x256xf32>
    %c0_3 = arith.constant 0 : index
    %c0_4 = arith.constant 0 : index
    %3 = vector.load %arg2[%c0_3, %c0_4] : memref<112x480xbf16, #tpu.memory_space<vmem>>, vector<112x480xbf16>
    %c0_5 = arith.constant 0 : index
    %c0_6 = arith.constant 0 : index
    %4 = vector.load %arg3[%c0_5, %c0_6] : memref<480x256xbf16, #tpu.memory_space<vmem>>, vector<480x256xbf16>
    %cst_7 = arith.constant dense<0.000000e+00> : vector<112x256xf32>
    %5 = tpu.matmul %3, %4, %cst_7 {dimension_numbers = #tpu.dot_dimension_numbers<[1], [0], [0], [1], [0, 0, 1, 1], [], []>} : vector<112x480xbf16>, vector<480x256xbf16>, vector<112x256xf32> -> vector<112x256xf32>
    %6 = vector.extract_strided_slice %2 {offsets = [0, 0], sizes = [112, 128], strides = [1, 1]} : vector<112x256xf32> to vector<112x128xf32>
    %7 = vector.extract_strided_slice %2 {offsets = [0, 128], sizes = [112, 128], strides = [1, 1]} : vector<112x256xf32> to vector<112x128xf32>
    %8 = arith.maximumf %6, %7 : vector<112x128xf32>
    %9 = vector.extract_strided_slice %5 {offsets = [0, 0], sizes = [112, 128], strides = [1, 1]} : vector<112x256xf32> to vector<112x128xf32>
    %10 = vector.extract_strided_slice %5 {offsets = [0, 128], sizes = [112, 128], strides = [1, 1]} : vector<112x256xf32> to vector<112x128xf32>
    %11 = arith.maximumf %9, %10 : vector<112x128xf32>
    %12 = arith.maximumf %8, %11 : vector<112x128xf32>
    %c0_8 = arith.constant 0 : index
    %c0_9 = arith.constant 0 : index
    %13 = vector.load %arg4[%c0_8, %c0_9] : memref<1x128xf32, #tpu.memory_space<vmem>>, vector<1x128xf32>
    %14 = vector.broadcast %13 : vector<1x128xf32> to vector<112x128xf32>
    %15 = arith.addf %12, %14 : vector<112x128xf32>
    %cst_10 = arith.constant 0.000000e+00 : f32
    %16 = vector.broadcast %cst_10 : f32 to vector<112x128xf32>
    %17 = arith.maximumf %15, %16 : vector<112x128xf32>
    %c0_11 = arith.constant 0 : index
    %c0_12 = arith.constant 0 : index
    %18 = vector.load %arg14[%c0_11, %c0_12] : memref<112x128xf32, #tpu.memory_space<vmem>>, vector<112x128xf32>
    tpu.vector_store %arg14[%c0_11, %c0_12], %17 {strides = array<i32>} : memref<112x128xf32, #tpu.memory_space<vmem>>, vector<112x128xf32>,
    %cst_13 = arith.constant 0.000000e+00 : f32
    %19 = vector.broadcast %cst_13 : f32 to vector<54x256xf32>
    %cst_14 = arith.constant 0.000000e+00 : f32
    %20 = vector.broadcast %cst_14 : f32 to vector<54x256xf32>
    %c0_15 = arith.constant 0 : index
    %c0_16 = arith.constant 0 : index
    %c0_17 = arith.constant 0 : index
    %21 = vector.load %arg5[%c0_15, %c0_16, %c0_17] : memref<5x128x256xbf16, #tpu.memory_space<vmem>>, vector<1x128x256xbf16>
    %22 = vector.shape_cast %21 : vector<1x128x256xbf16> to vector<128x256xbf16>
    %c0_18 = arith.constant 0 : index
    %c0_19 = arith.constant 0 : index
    %23 = tpu.strided_load %arg14[%c0_18, %c0_19] {strides = array<i32: 2, 1>} : memref<112x128xf32, #tpu.memory_space<vmem>>, vector<54x128xf32>
    %24 = arith.truncf %23 : vector<54x128xf32> to vector<54x128xbf16>
    %c1 = arith.constant 1 : index
    %c0_20 = arith.constant 0 : index
    %25 = tpu.strided_load %arg14[%c1, %c0_20] {strides = array<i32: 2, 1>} : memref<112x128xf32, #tpu.memory_space<vmem>>, vector<54x128xf32>
    %26 = arith.truncf %25 : vector<54x128xf32> to vector<54x128xbf16>
    %cst_21 = arith.constant dense<0.000000e+00> : vector<54x256xf32>
    %27 = tpu.matmul %24, %22, %cst_21 {dimension_numbers = #tpu.dot_dimension_numbers<[1], [0], [0], [1], [0, 0, 1, 1], [], []>} : vector<54x128xbf16>, vector<128x256xbf16>, vector<54x256xf32> -> vector<54x256xf32>
    %28 = arith.addf %19, %27 : vector<54x256xf32>
    %cst_22 = arith.constant dense<0.000000e+00> : vector<54x256xf32>
    %29 = tpu.matmul %26, %22, %cst_22 {dimension_numbers = #tpu.dot_dimension_numbers<[1], [0], [0], [1], [0, 0, 1, 1], [], []>} : vector<54x128xbf16>, vector<128x256xbf16>, vector<54x256xf32> -> vector<54x256xf32>
    %30 = arith.addf %20, %29 : vector<54x256xf32>
    %c1_23 = arith.constant 1 : index
    %c0_24 = arith.constant 0 : index
    %c0_25 = arith.constant 0 : index
    %31 = vector.load %arg5[%c1_23, %c0_24, %c0_25] : memref<5x128x256xbf16, #tpu.memory_space<vmem>>, vector<1x128x256xbf16>
    %32 = vector.shape_cast %31 : vector<1x128x256xbf16> to vector<128x256xbf16>
    %c1_26 = arith.constant 1 : index
    %c0_27 = arith.constant 0 : index
    %33 = tpu.strided_load %arg14[%c1_26, %c0_27] {strides = array<i32: 2, 1>} : memref<112x128xf32, #tpu.memory_space<vmem>>, vector<54x128xf32>
    %34 = arith.truncf %33 : vector<54x128xf32> to vector<54x128xbf16>
    %c2 = arith.constant 2 : index
    %c0_28 = arith.constant 0 : index
    %35 = tpu.strided_load %arg14[%c2, %c0_28] {strides = array<i32: 2, 1>} : memref<112x128xf32, #tpu.memory_space<vmem>>, vector<54x128xf32>
    %36 = arith.truncf %35 : vector<54x128xf32> to vector<54x128xbf16>
    %cst_29 = arith.constant dense<0.000000e+00> : vector<54x256xf32>
    %37 = tpu.matmul %34, %32, %cst_29 {dimension_numbers = #tpu.dot_dimension_numbers<[1], [0], [0], [1], [0, 0, 1, 1], [], []>} : vector<54x128xbf16>, vector<128x256xbf16>, vector<54x256xf32> -> vector<54x256xf32>
    %38 = arith.addf %28, %37 : vector<54x256xf32>
    %cst_30 = arith.constant dense<0.000000e+00> : vector<54x256xf32>
    %39 = tpu.matmul %36, %32, %cst_30 {dimension_numbers = #tpu.dot_dimension_numbers<[1], [0], [0], [1], [0, 0, 1, 1], [], []>} : vector<54x128xbf16>, vector<128x256xbf16>, vector<54x256xf32> -> vector<54x256xf32>
    %40 = arith.addf %30, %39 : vector<54x256xf32>
    %c2_31 = arith.constant 2 : index
    %c0_32 = arith.constant 0 : index
    %c0_33 = arith.constant 0 : index
    %41 = vector.load %arg5[%c2_31, %c0_32, %c0_33] : memref<5x128x256xbf16, #tpu.memory_space<vmem>>, vector<1x128x256xbf16>
    %42 = vector.shape_cast %41 : vector<1x128x256xbf16> to vector<128x256xbf16>
    %c2_34 = arith.constant 2 : index
    %c0_35 = arith.constant 0 : index
    %43 = tpu.strided_load %arg14[%c2_34, %c0_35] {strides = array<i32: 2, 1>} : memref<112x128xf32, #tpu.memory_space<vmem>>, vector<54x128xf32>
    %44 = arith.truncf %43 : vector<54x128xf32> to vector<54x128xbf16>
    %c3 = arith.constant 3 : index
    %c0_36 = arith.constant 0 : index
    %45 = tpu.strided_load %arg14[%c3, %c0_36] {strides = array<i32: 2, 1>} : memref<112x128xf32, #tpu.memory_space<vmem>>, vector<54x128xf32>
    %46 = arith.truncf %45 : vector<54x128xf32> to vector<54x128xbf16>
    %cst_37 = arith.constant dense<0.000000e+00> : vector<54x256xf32>
    %47 = tpu.matmul %44, %42, %cst_37 {dimension_numbers = #tpu.dot_dimension_numbers<[1], [0], [0], [1], [0, 0, 1, 1], [], []>} : vector<54x128xbf16>, vector<128x256xbf16>, vector<54x256xf32> -> vector<54x256xf32>
    %48 = arith.addf %38, %47 : vector<54x256xf32>
    %cst_38 = arith.constant dense<0.000000e+00> : vector<54x256xf32>
    %49 = tpu.matmul %46, %42, %cst_38 {dimension_numbers = #tpu.dot_dimension_numbers<[1], [0], [0], [1], [0, 0, 1, 1], [], []>} : vector<54x128xbf16>, vector<128x256xbf16>, vector<54x256xf32> -> vector<54x256xf32>
    %50 = arith.addf %40, %49 : vector<54x256xf32>
    %c3_39 = arith.constant 3 : index
    %c0_40 = arith.constant 0 : index
    %c0_41 = arith.constant 0 : index
    %51 = vector.load %arg5[%c3_39, %c0_40, %c0_41] : memref<5x128x256xbf16, #tpu.memory_space<vmem>>, vector<1x128x256xbf16>
    %52 = vector.shape_cast %51 : vector<1x128x256xbf16> to vector<128x256xbf16>
    %c3_42 = arith.constant 3 : index
    %c0_43 = arith.constant 0 : index
    %53 = tpu.strided_load %arg14[%c3_42, %c0_43] {strides = array<i32: 2, 1>} : memref<112x128xf32, #tpu.memory_space<vmem>>, vector<54x128xf32>
    %54 = arith.truncf %53 : vector<54x128xf32> to vector<54x128xbf16>
    %c4 = arith.constant 4 : index
    %c0_44 = arith.constant 0 : index
    %55 = tpu.strided_load %arg14[%c4, %c0_44] {strides = array<i32: 2, 1>} : memref<112x128xf32, #tpu.memory_space<vmem>>, vector<54x128xf32>
    %56 = arith.truncf %55 : vector<54x128xf32> to vector<54x128xbf16>
    %cst_45 = arith.constant dense<0.000000e+00> : vector<54x256xf32>
    %57 = tpu.matmul %54, %52, %cst_45 {dimension_numbers = #tpu.dot_dimension_numbers<[1], [0], [0], [1], [0, 0, 1, 1], [], []>} : vector<54x128xbf16>, vector<128x256xbf16>, vector<54x256xf32> -> vector<54x256xf32>
    %58 = arith.addf %48, %57 : vector<54x256xf32>
    %cst_46 = arith.constant dense<0.000000e+00> : vector<54x256xf32>
    %59 = tpu.matmul %56, %52, %cst_46 {dimension_numbers = #tpu.dot_dimension_numbers<[1], [0], [0], [1], [0, 0, 1, 1], [], []>} : vector<54x128xbf16>, vector<128x256xbf16>, vector<54x256xf32> -> vector<54x256xf32>
    %60 = arith.addf %50, %59 : vector<54x256xf32>
    %c4_47 = arith.constant 4 : index
    %c0_48 = arith.constant 0 : index
    %c0_49 = arith.constant 0 : index
    %61 = vector.load %arg5[%c4_47, %c0_48, %c0_49] : memref<5x128x256xbf16, #tpu.memory_space<vmem>>, vector<1x128x256xbf16>
    %62 = vector.shape_cast %61 : vector<1x128x256xbf16> to vector<128x256xbf16>
    %c4_50 = arith.constant 4 : index
    %c0_51 = arith.constant 0 : index
    %63 = tpu.strided_load %arg14[%c4_50, %c0_51] {strides = array<i32: 2, 1>} : memref<112x128xf32, #tpu.memory_space<vmem>>, vector<54x128xf32>
    %64 = arith.truncf %63 : vector<54x128xf32> to vector<54x128xbf16>
    %c5 = arith.constant 5 : index
    %c0_52 = arith.constant 0 : index
    %65 = tpu.strided_load %arg14[%c5, %c0_52] {strides = array<i32: 2, 1>} : memref<112x128xf32, #tpu.memory_space<vmem>>, vector<54x128xf32>
    %66 = arith.truncf %65 : vector<54x128xf32> to vector<54x128xbf16>
    %cst_53 = arith.constant dense<0.000000e+00> : vector<54x256xf32>
    %67 = tpu.matmul %64, %62, %cst_53 {dimension_numbers = #tpu.dot_dimension_numbers<[1], [0], [0], [1], [0, 0, 1, 1], [], []>} : vector<54x128xbf16>, vector<128x256xbf16>, vector<54x256xf32> -> vector<54x256xf32>
    %68 = arith.addf %58, %67 : vector<54x256xf32>
    %cst_54 = arith.constant dense<0.000000e+00> : vector<54x256xf32>
    %69 = tpu.matmul %66, %62, %cst_54 {dimension_numbers = #tpu.dot_dimension_numbers<[1], [0], [0], [1], [0, 0, 1, 1], [], []>} : vector<54x128xbf16>, vector<128x256xbf16>, vector<54x256xf32> -> vector<54x256xf32>
    %70 = arith.addf %60, %69 : vector<54x256xf32>
    %71 = vector.extract_strided_slice %68 {offsets = [0, 0], sizes = [54, 128], strides = [1, 1]} : vector<54x256xf32> to vector<54x128xf32>
    %72 = vector.extract_strided_slice %68 {offsets = [0, 128], sizes = [54, 128], strides = [1, 1]} : vector<54x256xf32> to vector<54x128xf32>
    %73 = arith.maximumf %71, %72 : vector<54x128xf32>
    %74 = vector.extract_strided_slice %70 {offsets = [0, 0], sizes = [54, 128], strides = [1, 1]} : vector<54x256xf32> to vector<54x128xf32>
    %75 = vector.extract_strided_slice %70 {offsets = [0, 128], sizes = [54, 128], strides = [1, 1]} : vector<54x256xf32> to vector<54x128xf32>
    %76 = arith.maximumf %74, %75 : vector<54x128xf32>
    %77 = arith.maximumf %73, %76 : vector<54x128xf32>
    %c0_55 = arith.constant 0 : index
    %c0_56 = arith.constant 0 : index
    %78 = vector.load %arg6[%c0_55, %c0_56] : memref<1x128xf32, #tpu.memory_space<vmem>>, vector<1x128xf32>
    %79 = vector.broadcast %78 : vector<1x128xf32> to vector<54x128xf32>
    %80 = arith.addf %77, %79 : vector<54x128xf32>
    %cst_57 = arith.constant 0.000000e+00 : f32
    %81 = vector.broadcast %cst_57 : f32 to vector<54x128xf32>
    %82 = arith.maximumf %80, %81 : vector<54x128xf32>
    %c0_58 = arith.constant 0 : index
    %c0_59 = arith.constant 0 : index
    %83 = vector.load %arg15[%c0_58, %c0_59] : memref<54x128xf32, #tpu.memory_space<vmem>>, vector<54x128xf32>
    tpu.vector_store %arg15[%c0_58, %c0_59], %82 {strides = array<i32>} : memref<54x128xf32, #tpu.memory_space<vmem>>, vector<54x128xf32>,
    %c0_60 = arith.constant 0 : index
    %c0_61 = arith.constant 0 : index
    %84 = vector.load %arg8[%c0_60, %c0_61] : memref<1x128xf32, #tpu.memory_space<vmem>>, vector<1x128xf32>
    %c0_62 = arith.constant 0 : index
    %c0_63 = arith.constant 0 : index
    %85 = tpu.strided_load %arg15[%c0_62, %c0_63] {strides = array<i32: 7, 1>} : memref<54x128xf32, #tpu.memory_space<vmem>>, vector<8x128xf32>
    %86 = arith.truncf %85 : vector<8x128xf32> to vector<8x128xbf16>
    %c0_64 = arith.constant 0 : index
    %c0_65 = arith.constant 0 : index
    %c0_66 = arith.constant 0 : index
    %87 = vector.load %arg7[%c0_64, %c0_65, %c0_66] : memref<5x128x128xbf16, #tpu.memory_space<vmem>>, vector<1x128x128xbf16>
    %88 = vector.shape_cast %87 : vector<1x128x128xbf16> to vector<128x128xbf16>
    %cst_67 = arith.constant dense<0.000000e+00> : vector<8x128xf32>
    %89 = tpu.matmul %86, %88, %cst_67 {dimension_numbers = #tpu.dot_dimension_numbers<[1], [0], [0], [1], [0, 0, 1, 1], [], []>} : vector<8x128xbf16>, vector<128x128xbf16>, vector<8x128xf32> -> vector<8x128xf32>
    %90 = vector.broadcast %84 : vector<1x128xf32> to vector<8x128xf32>
    %91 = arith.addf %90, %89 : vector<8x128xf32>
    %c1_68 = arith.constant 1 : index
    %c0_69 = arith.constant 0 : index
    %92 = tpu.strided_load %arg15[%c1_68, %c0_69] {strides = array<i32: 7, 1>} : memref<54x128xf32, #tpu.memory_space<vmem>>, vector<8x128xf32>
    %93 = arith.truncf %92 : vector<8x128xf32> to vector<8x128xbf16>
    %c1_70 = arith.constant 1 : index
    %c0_71 = arith.constant 0 : index
    %c0_72 = arith.constant 0 : index
    %94 = vector.load %arg7[%c1_70, %c0_71, %c0_72] : memref<5x128x128xbf16, #tpu.memory_space<vmem>>, vector<1x128x128xbf16>
    %95 = vector.shape_cast %94 : vector<1x128x128xbf16> to vector<128x128xbf16>
    %cst_73 = arith.constant dense<0.000000e+00> : vector<8x128xf32>
    %96 = tpu.matmul %93, %95, %cst_73 {dimension_numbers = #tpu.dot_dimension_numbers<[1], [0], [0], [1], [0, 0, 1, 1], [], []>} : vector<8x128xbf16>, vector<128x128xbf16>, vector<8x128xf32> -> vector<8x128xf32>
    %97 = arith.addf %91, %96 : vector<8x128xf32>
    %c2_74 = arith.constant 2 : index
    %c0_75 = arith.constant 0 : index
    %98 = tpu.strided_load %arg15[%c2_74, %c0_75] {strides = array<i32: 7, 1>} : memref<54x128xf32, #tpu.memory_space<vmem>>, vector<8x128xf32>
    %99 = arith.truncf %98 : vector<8x128xf32> to vector<8x128xbf16>
    %c2_76 = arith.constant 2 : index
    %c0_77 = arith.constant 0 : index
    %c0_78 = arith.constant 0 : index
    %100 = vector.load %arg7[%c2_76, %c0_77, %c0_78] : memref<5x128x128xbf16, #tpu.memory_space<vmem>>, vector<1x128x128xbf16>
    %101 = vector.shape_cast %100 : vector<1x128x128xbf16> to vector<128x128xbf16>
    %cst_79 = arith.constant dense<0.000000e+00> : vector<8x128xf32>
    %102 = tpu.matmul %99, %101, %cst_79 {dimension_numbers = #tpu.dot_dimension_numbers<[1], [0], [0], [1], [0, 0, 1, 1], [], []>} : vector<8x128xbf16>, vector<128x128xbf16>, vector<8x128xf32> -> vector<8x128xf32>
    %103 = arith.addf %97, %102 : vector<8x128xf32>
    %c3_80 = arith.constant 3 : index
    %c0_81 = arith.constant 0 : index
    %104 = tpu.strided_load %arg15[%c3_80, %c0_81] {strides = array<i32: 7, 1>} : memref<54x128xf32, #tpu.memory_space<vmem>>, vector<8x128xf32>
    %105 = arith.truncf %104 : vector<8x128xf32> to vector<8x128xbf16>
    %c3_82 = arith.constant 3 : index
    %c0_83 = arith.constant 0 : index
    %c0_84 = arith.constant 0 : index
    %106 = vector.load %arg7[%c3_82, %c0_83, %c0_84] : memref<5x128x128xbf16, #tpu.memory_space<vmem>>, vector<1x128x128xbf16>
    %107 = vector.shape_cast %106 : vector<1x128x128xbf16> to vector<128x128xbf16>
    %cst_85 = arith.constant dense<0.000000e+00> : vector<8x128xf32>
    %108 = tpu.matmul %105, %107, %cst_85 {dimension_numbers = #tpu.dot_dimension_numbers<[1], [0], [0], [1], [0, 0, 1, 1], [], []>} : vector<8x128xbf16>, vector<128x128xbf16>, vector<8x128xf32> -> vector<8x128xf32>
    %109 = arith.addf %103, %108 : vector<8x128xf32>
    %c4_86 = arith.constant 4 : index
    %c0_87 = arith.constant 0 : index
    %110 = tpu.strided_load %arg15[%c4_86, %c0_87] {strides = array<i32: 7, 1>} : memref<54x128xf32, #tpu.memory_space<vmem>>, vector<8x128xf32>
    %111 = arith.truncf %110 : vector<8x128xf32> to vector<8x128xbf16>
    %c4_88 = arith.constant 4 : index
    %c0_89 = arith.constant 0 : index
    %c0_90 = arith.constant 0 : index
    %112 = vector.load %arg7[%c4_88, %c0_89, %c0_90] : memref<5x128x128xbf16, #tpu.memory_space<vmem>>, vector<1x128x128xbf16>
    %113 = vector.shape_cast %112 : vector<1x128x128xbf16> to vector<128x128xbf16>
    %cst_91 = arith.constant dense<0.000000e+00> : vector<8x128xf32>
    %114 = tpu.matmul %111, %113, %cst_91 {dimension_numbers = #tpu.dot_dimension_numbers<[1], [0], [0], [1], [0, 0, 1, 1], [], []>} : vector<8x128xbf16>, vector<128x128xbf16>, vector<8x128xf32> -> vector<8x128xf32>
    %115 = arith.addf %109, %114 : vector<8x128xf32>
    %cst_92 = arith.constant 0.000000e+00 : f32
    %116 = vector.broadcast %cst_92 : f32 to vector<8x128xf32>
    %117 = arith.maximumf %115, %116 : vector<8x128xf32>
    %118 = arith.truncf %117 : vector<8x128xf32> to vector<8x128xbf16>
    %c0_93 = arith.constant 0 : index
    %c0_94 = arith.constant 0 : index
    %119 = vector.load %arg9[%c0_93, %c0_94] : memref<128x128xbf16, #tpu.memory_space<vmem>>, vector<128x128xbf16>
    %cst_95 = arith.constant dense<0.000000e+00> : vector<8x128xf32>
    %120 = tpu.matmul %118, %119, %cst_95 {dimension_numbers = #tpu.dot_dimension_numbers<[1], [0], [0], [1], [0, 0, 1, 1], [], []>} : vector<8x128xbf16>, vector<128x128xbf16>, vector<8x128xf32> -> vector<8x128xf32>
    %c0_96 = arith.constant 0 : index
    %c0_97 = arith.constant 0 : index
    %121 = vector.load %arg10[%c0_96, %c0_97] : memref<1x128xf32, #tpu.memory_space<vmem>>, vector<1x128xf32>
    %122 = vector.broadcast %121 : vector<1x128xf32> to vector<8x128xf32>
    %123 = arith.addf %120, %122 : vector<8x128xf32>
    %cst_98 = arith.constant 0.000000e+00 : f32
    %124 = vector.broadcast %cst_98 : f32 to vector<8x128xf32>
    %125 = arith.maximumf %123, %124 : vector<8x128xf32>
    %126 = arith.truncf %125 : vector<8x128xf32> to vector<8x128xbf16>
    %c0_99 = arith.constant 0 : index
    %c0_100 = arith.constant 0 : index
    %127 = vector.load %arg11[%c0_99, %c0_100] : memref<128x128xbf16, #tpu.memory_space<vmem>>, vector<128x128xbf16>
    %cst_101 = arith.constant dense<0.000000e+00> : vector<8x128xf32>
    %128 = tpu.matmul %126, %127, %cst_101 {dimension_numbers = #tpu.dot_dimension_numbers<[1], [0], [0], [1], [0, 0, 1, 1], [], []>} : vector<8x128xbf16>, vector<128x128xbf16>, vector<8x128xf32> -> vector<8x128xf32>
    %c0_102 = arith.constant 0 : index
    %c0_103 = arith.constant 0 : index
    %129 = vector.load %arg12[%c0_102, %c0_103] : memref<1x128xf32, #tpu.memory_space<vmem>>, vector<1x128xf32>
    %130 = vector.broadcast %129 : vector<1x128xf32> to vector<8x128xf32>
    %131 = arith.addf %128, %130 : vector<8x128xf32>
    %c0_104 = arith.constant 0 : index
    %c0_105 = arith.constant 0 : index
    %132 = vector.load %arg13[%c0_104, %c0_105] : memref<8x128xf32, #tpu.memory_space<vmem>>, vector<8x128xf32>
    tpu.vector_store %arg13[%c0_104, %c0_105], %131 {strides = array<i32>} : memref<8x128xf32, #tpu.memory_space<vmem>>, vector<8x128xf32>,
    return
  }
  func.func @transform_0(%arg0: i32) -> (i32, i32) {
    %c0_i32 = arith.constant 0 : i32
    %c0_i32_0 = arith.constant 0 : i32
    return %arg0, %c0_i32 : i32, i32
  }
  func.func @transform_1(%arg0: i32) -> (i32, i32) {
    %c0_i32 = arith.constant 0 : i32
    %c0_i32_0 = arith.constant 0 : i32
    return %arg0, %c0_i32 : i32, i32
  }
  func.func @transform_2(%arg0: i32) -> (i32, i32) {
    %c0_i32 = arith.constant 0 : i32
    %c0_i32_0 = arith.constant 0 : i32
    %c0_i32_1 = arith.constant 0 : i32
    return %c0_i32, %c0_i32_0 : i32, i32
  }
  func.func @transform_3(%arg0: i32) -> (i32, i32) {
    %c0_i32 = arith.constant 0 : i32
    %c0_i32_0 = arith.constant 0 : i32
    %c0_i32_1 = arith.constant 0 : i32
    return %c0_i32, %c0_i32_0 : i32, i32
  }
  func.func @transform_4(%arg0: i32) -> (i32, i32, i32) {
    %c0_i32 = arith.constant 0 : i32
    %c0_i32_0 = arith.constant 0 : i32
    %c0_i32_1 = arith.constant 0 : i32
    %c0_i32_2 = arith.constant 0 : i32
    return %c0_i32, %c0_i32_0, %c0_i32_1 : i32, i32, i32
  }
  func.func @transform_5(%arg0: i32) -> (i32, i32) {
    %c0_i32 = arith.constant 0 : i32
    %c0_i32_0 = arith.constant 0 : i32
    %c0_i32_1 = arith.constant 0 : i32
    return %c0_i32, %c0_i32_0 : i32, i32
  }
  func.func @transform_6(%arg0: i32) -> (i32, i32, i32) {
    %c0_i32 = arith.constant 0 : i32
    %c0_i32_0 = arith.constant 0 : i32
    %c0_i32_1 = arith.constant 0 : i32
    %c0_i32_2 = arith.constant 0 : i32
    return %c0_i32, %c0_i32_0, %c0_i32_1 : i32, i32, i32
  }
  func.func @transform_7(%arg0: i32) -> (i32, i32) {
    %c0_i32 = arith.constant 0 : i32
    %c0_i32_0 = arith.constant 0 : i32
    %c0_i32_1 = arith.constant 0 : i32
    return %c0_i32, %c0_i32_0 : i32, i32
  }
  func.func @transform_8(%arg0: i32) -> (i32, i32) {
    %c0_i32 = arith.constant 0 : i32
    %c0_i32_0 = arith.constant 0 : i32
    %c0_i32_1 = arith.constant 0 : i32
    return %c0_i32, %c0_i32_0 : i32, i32
  }
  func.func @transform_9(%arg0: i32) -> (i32, i32) {
    %c0_i32 = arith.constant 0 : i32
    %c0_i32_0 = arith.constant 0 : i32
    %c0_i32_1 = arith.constant 0 : i32
    return %c0_i32, %c0_i32_0 : i32, i32
  }
  func.func @transform_10(%arg0: i32) -> (i32, i32) {
    %c0_i32 = arith.constant 0 : i32
    %c0_i32_0 = arith.constant 0 : i32
    %c0_i32_1 = arith.constant 0 : i32
    return %c0_i32, %c0_i32_0 : i32, i32
  }
  func.func @transform_11(%arg0: i32) -> (i32, i32) {
    %c0_i32 = arith.constant 0 : i32
    %c0_i32_0 = arith.constant 0 : i32
    %c0_i32_1 = arith.constant 0 : i32
    return %c0_i32, %c0_i32_0 : i32, i32
  }
  func.func @transform_12(%arg0: i32) -> (i32, i32) {
    %c0_i32 = arith.constant 0 : i32
    %c0_i32_0 = arith.constant 0 : i32
    return %arg0, %c0_i32 : i32, i32
  }
}

</mosaic_0001>

<llo_original>
// kernel: cnn_cifar_forward.1
$region0: #{cnn_cifar_forward.1}
  #allocation0 [shape = 'u32[]', space=smem, size = 0x4, offset = 0x4, fixed_abs, tag = 'smem constant byte address 0x4 - core index']
  #allocation1 [shape = 'u32[72,128]{1,0:T(1,128)}', space=vmem, size = 0x9000, scoped, tag = 'internal scratch']
  #allocation2 [shape = 'f32[112,128]{1,0:T(8,128)}', space=vmem, size = 0xe000, scoped, tag = 'scratch operand']
  #allocation3 [shape = 'f32[54,128]{1,0:T(8,128)}', space=vmem, size = 0x7000, scoped, tag = 'scratch operand']
  %s0 = inlined_call_operand.vmem [shape: bf16[112,480], index: 0, kind: input, shape index: {}]
  %s1 = inlined_call_operand.vmem [shape: bf16[112,480], index: 1, kind: input, shape index: {}]
  %s2 = inlined_call_operand.vmem [shape: bf16[480,256], index: 2, kind: input, shape index: {}]
  %s3 = inlined_call_operand.vmem [shape: f32[1,128], index: 3, kind: input, shape index: {}]
  %s4 = inlined_call_operand.vmem [shape: bf16[5,128,256], index: 4, kind: input, shape index: {}]
  %s5 = inlined_call_operand.vmem [shape: f32[1,128], index: 5, kind: input, shape index: {}]
  %s6 = inlined_call_operand.vmem [shape: bf16[5,128,128], index: 6, kind: input, shape index: {}]
  %s7 = inlined_call_operand.vmem [shape: f32[1,128], index: 7, kind: input, shape index: {}]
  %s8 = inlined_call_operand.vmem [shape: bf16[128,128], index: 8, kind: input, shape index: {}]
  %s9 = inlined_call_operand.vmem [shape: f32[1,128], index: 9, kind: input, shape index: {}]
  %s10 = inlined_call_operand.vmem [shape: bf16[128,128], index: 10, kind: input, shape index: {}]
  %s11 = inlined_call_operand.vmem [shape: f32[1,128], index: 11, kind: input, shape index: {}]
  %s12 = inlined_call_operand.vmem [shape: f32[8,128], index: 12, kind: output, shape index: {}]
  %s13 = sld [smem:[#allocation0]]
  $region58: #{cnn_cifar_forward.1} parent=0
    _
  %s15 = ssub.s32 1, %s13
  %s16 = scalar_select 0, %s15, %s13
  // Predicated region
  $region2: #{cnn_cifar_forward.1} parent=0 // pred_check
    _
  $region3: #{cnn_cifar_forward.1} parent=0 // pred_check_branch
    %18 = sbr.rel (0) target = $region5
  $region4: #{cnn_cifar_forward.1} parent=0 // pred_region
    _
  $region5: #{cnn_cifar_forward.1} parent=0 // pred_fallthru
    _
  // Predicated region
  $region6: #{cnn_cifar_forward.1} parent=0 // pred_check
    _
  $region7: #{cnn_cifar_forward.1} parent=0 // pred_check_branch
    %20 = sbr.rel (0) target = $region9
  $region8: #{cnn_cifar_forward.1} parent=0 // pred_region
    _
  $region9: #{cnn_cifar_forward.1} parent=0 // pred_fallthru
    _
  // Predicated region
  $region10: #{cnn_cifar_forward.1} parent=0 // pred_check
    _
  $region11: #{cnn_cifar_forward.1} parent=0 // pred_check_branch
    %22 = sbr.rel (0) target = $region13
  $region12: #{cnn_cifar_forward.1} parent=0 // pred_region
    _
  $region13: #{cnn_cifar_forward.1} parent=0 // pred_fallthru
    _
  // Predicated region
  $region14: #{cnn_cifar_forward.1} parent=0 // pred_check
    _
  $region15: #{cnn_cifar_forward.1} parent=0 // pred_check_branch
    %24 = sbr.rel (0) target = $region17
  $region16: #{cnn_cifar_forward.1} parent=0 // pred_region
    _
  $region17: #{cnn_cifar_forward.1} parent=0 // pred_fallthru
    _
  // Predicated region
  $region18: #{cnn_cifar_forward.1} parent=0 // pred_check
    _
  $region19: #{cnn_cifar_forward.1} parent=0 // pred_check_branch
    %26 = sbr.rel (0) target = $region21
  $region20: #{cnn_cifar_forward.1} parent=0 // pred_region
    _
  $region21: #{cnn_cifar_forward.1} parent=0 // pred_fallthru
    _
  // Predicated region
  $region22: #{cnn_cifar_forward.1} parent=0 // pred_check
    _
  $region23: #{cnn_cifar_forward.1} parent=0 // pred_check_branch
    %28 = sbr.rel (0) target = $region25
  $region24: #{cnn_cifar_forward.1} parent=0 // pred_region
    _
  $region25: #{cnn_cifar_forward.1} parent=0 // pred_fallthru
    _
  // Predicated region
  $region26: #{cnn_cifar_forward.1} parent=0 // pred_check
    _
  $region27: #{cnn_cifar_forward.1} parent=0 // pred_check_branch
    %30 = sbr.rel (0) target = $region29
  $region28: #{cnn_cifar_forward.1} parent=0 // pred_region
    _
  $region29: #{cnn_cifar_forward.1} parent=0 // pred_fallthru
    _
  // Predicated region
  $region30: #{cnn_cifar_forward.1} parent=0 // pred_check
    _
  $region31: #{cnn_cifar_forward.1} parent=0 // pred_check_branch
    %32 = sbr.rel (0) target = $region33
  $region32: #{cnn_cifar_forward.1} parent=0 // pred_region
    _
  $region33: #{cnn_cifar_forward.1} parent=0 // pred_fallthru
    _
  // Predicated region
  $region34: #{cnn_cifar_forward.1} parent=0 // pred_check
    _
  $region35: #{cnn_cifar_forward.1} parent=0 // pred_check_branch
    %34 = sbr.rel (0) target = $region37
  $region36: #{cnn_cifar_forward.1} parent=0 // pred_region
    _
  $region37: #{cnn_cifar_forward.1} parent=0 // pred_fallthru
    _
  // Predicated region
  $region38: #{cnn_cifar_forward.1} parent=0 // pred_check
    _
  $region39: #{cnn_cifar_forward.1} parent=0 // pred_check_branch
    %36 = sbr.rel (0) target = $region41
  $region40: #{cnn_cifar_forward.1} parent=0 // pred_region
    _
  $region41: #{cnn_cifar_forward.1} parent=0 // pred_fallthru
    _
  // Predicated region
  $region42: #{cnn_cifar_forward.1} parent=0 // pred_check
    _
  $region43: #{cnn_cifar_forward.1} parent=0 // pred_check_branch
    %38 = sbr.rel (0) target = $region45
  $region44: #{cnn_cifar_forward.1} parent=0 // pred_region
    _
  $region45: #{cnn_cifar_forward.1} parent=0 // pred_fallthru
    _
  // Predicated region
  $region46: #{cnn_cifar_forward.1} parent=0 // pred_check
    _
  $region47: #{cnn_cifar_forward.1} parent=0 // pred_check_branch
    %40 = sbr.rel (0) target = $region49
  $region48: #{cnn_cifar_forward.1} parent=0 // pred_region
    _
  $region49: #{cnn_cifar_forward.1} parent=0 // pred_fallthru
    _
  %v42 = vld [vmem:[%s0] sm:$0xff]
  %v43 = vld [vmem:[%s0 + $0x8] sm:$0xff]
  %v44 = vld [vmem:[%s0 + $0x10] sm:$0xff]
  %v45 = vld [vmem:[%s0 + $0x18] sm:$0xff]
  %v46 = vld [vmem:[%s0 + $0x20] sm:$0xff]
  %v47 = vld [vmem:[%s0 + $0x28] sm:$0xff]
  %v48 = vld [vmem:[%s0 + $0x30] sm:$0xff]
  %v49 = vld [vmem:[%s0 + $0x38] sm:$0xff]
  %v50 = vld [vmem:[%s0 + $0x40] sm:$0xff]
  %v51 = vld [vmem:[%s0 + $0x48] sm:$0xff]
  %v52 = vld [vmem:[%s0 + $0x50] sm:$0xff]
  %v53 = vld [vmem:[%s0 + $0x58] sm:$0xff]
  %v54 = vld [vmem:[%s0 + $0x60] sm:$0xff]
  %v55 = vld [vmem:[%s0 + $0x68] sm:$0xff]
  %v56 = vld [vmem:[%s0 + $0x70] sm:$0xff]
  %v57 = vld [vmem:[%s0 + $0x78] sm:$0xff]
  %v58 = vld [vmem:[%s0 + $0x80] sm:$0xff]
  %v59 = vld [vmem:[%s0 + $0x88] sm:$0xff]
  %v60 = vld [vmem:[%s0 + $0x90] sm:$0xff]
  %v61 = vld [vmem:[%s0 + $0x98] sm:$0xff]
  %v62 = vld [vmem:[%s0 + $0xa0] sm:$0xff]
  %v63 = vld [vmem:[%s0 + $0xa8] sm:$0xff]
  %v64 = vld [vmem:[%s0 + $0xb0] sm:$0xff]
  %v65 = vld [vmem:[%s0 + $0xb8] sm:$0xff]
  %v66 = vld [vmem:[%s0 + $0xc0] sm:$0xff]
  %v67 = vld [vmem:[%s0 + $0xc8] sm:$0xff]
  %v68 = vld [vmem:[%s0 + $0xd0] sm:$0xff]
  %v69 = vld [vmem:[%s0 + $0xd8] sm:$0xff]
  %v70 = vld [vmem:[%s2] sm:$0xff]
  %v71 = vld [vmem:[%s2 + $0x8] sm:$0xff]
  %v72 = vld [vmem:[%s2 + $0x10] sm:$0xff]
  %v73 = vld [vmem:[%s2 + $0x18] sm:$0xff]
  %v74 = vld [vmem:[%s2 + $0x20] sm:$0xff]
  %v75 = vld [vmem:[%s2 + $0x28] sm:$0xff]
  %v76 = vld [vmem:[%s2 + $0x30] sm:$0xff]
  %v77 = vld [vmem:[%s2 + $0x38] sm:$0xff]
  %v78 = vld [vmem:[%s2 + $0x40] sm:$0xff]
  %v79 = vld [vmem:[%s2 + $0x48] sm:$0xff]
  %v80 = vld [vmem:[%s2 + $0x50] sm:$0xff]
  %v81 = vld [vmem:[%s2 + $0x58] sm:$0xff]
  %v82 = vld [vmem:[%s2 + $0x60] sm:$0xff]
  %v83 = vld [vmem:[%s2 + $0x68] sm:$0xff]
  %v84 = vld [vmem:[%s2 + $0x70] sm:$0xff]
  %v85 = vld [vmem:[%s2 + $0x78] sm:$0xff]
  %v86 = vld [vmem:[%s2 + $0x80] sm:$0xff]
  %v87 = vld [vmem:[%s2 + $0x88] sm:$0xff]
  %v88 = vld [vmem:[%s2 + $0x90] sm:$0xff]
  %v89 = vld [vmem:[%s2 + $0x98] sm:$0xff]
  %v90 = vld [vmem:[%s2 + $0xa0] sm:$0xff]
  %v91 = vld [vmem:[%s2 + $0xa8] sm:$0xff]
  %v92 = vld [vmem:[%s2 + $0xb0] sm:$0xff]
  %v93 = vld [vmem:[%s2 + $0xb8] sm:$0xff]
  %v94 = vld [vmem:[%s2 + $0xc0] sm:$0xff]
  %v95 = vld [vmem:[%s2 + $0xc8] sm:$0xff]
  %v96 = vld [vmem:[%s2 + $0xd0] sm:$0xff]
  %v97 = vld [vmem:[%s2 + $0xd8] sm:$0xff]
  %v98 = vld [vmem:[%s2 + $0xe0] sm:$0xff]
  %v99 = vld [vmem:[%s2 + $0xe8] sm:$0xff]
  %v100 = vld [vmem:[%s2 + $0xf0] sm:$0xff]
  %v101 = vld [vmem:[%s2 + $0xf8] sm:$0xff]
  %v102 = vld [vmem:[%s2 + $0x100] sm:$0xff]
  %v103 = vld [vmem:[%s2 + $0x108] sm:$0xff]
  %v104 = vld [vmem:[%s2 + $0x110] sm:$0xff]
  %v105 = vld [vmem:[%s2 + $0x118] sm:$0xff]
  %v106 = vld [vmem:[%s2 + $0x120] sm:$0xff]
  %v107 = vld [vmem:[%s2 + $0x128] sm:$0xff]
  %v108 = vld [vmem:[%s2 + $0x130] sm:$0xff]
  %v109 = vld [vmem:[%s2 + $0x138] sm:$0xff]
  %v110 = vld [vmem:[%s2 + $0x140] sm:$0xff]
  %v111 = vld [vmem:[%s2 + $0x148] sm:$0xff]
  %v112 = vld [vmem:[%s2 + $0x150] sm:$0xff]
  %v113 = vld [vmem:[%s2 + $0x158] sm:$0xff]
  %v114 = vld [vmem:[%s2 + $0x160] sm:$0xff]
  %v115 = vld [vmem:[%s2 + $0x168] sm:$0xff]
  %v116 = vld [vmem:[%s2 + $0x170] sm:$0xff]
  %v117 = vld [vmem:[%s2 + $0x178] sm:$0xff]
  %v118 = vld [vmem:[%s2 + $0x180] sm:$0xff]
  %v119 = vld [vmem:[%s2 + $0x188] sm:$0xff]
  %v120 = vld [vmem:[%s2 + $0x190] sm:$0xff]
  %v121 = vld [vmem:[%s2 + $0x198] sm:$0xff]
  %v122 = vld [vmem:[%s2 + $0x1a0] sm:$0xff]
  %v123 = vld [vmem:[%s2 + $0x1a8] sm:$0xff]
  %v124 = vld [vmem:[%s2 + $0x1b0] sm:$0xff]
  %v125 = vld [vmem:[%s2 + $0x1b8] sm:$0xff]
  %v126 = vld [vmem:[%s2 + $0x1c0] sm:$0xff]
  %v127 = vld [vmem:[%s2 + $0x1c8] sm:$0xff]
  %v128 = vld [vmem:[%s2 + $0x1d0] sm:$0xff]
  %v129 = vld [vmem:[%s2 + $0x1d8] sm:$0xff]
  %v158 = vunpack.c.l.b16 %v42
  %v159 = vunpack.c.h.b16 %v42
  %v160 = vunpack.c.l.b16 %v43
  %v161 = vunpack.c.h.b16 %v43
  %v162 = vunpack.c.l.b16 %v44
  %v163 = vunpack.c.h.b16 %v44
  %v164 = vunpack.c.l.b16 %v45
  %v165 = vunpack.c.h.b16 %v45
  %v166 = vunpack.c.l.b16 %v46
  %v167 = vunpack.c.h.b16 %v46
  %v168 = vunpack.c.l.b16 %v47
  %v169 = vunpack.c.h.b16 %v47
  %v170 = vunpack.c.l.b16 %v48
  %v171 = vunpack.c.h.b16 %v48
  %v172 = vunpack.c.l.b16 %v49
  %v173 = vunpack.c.h.b16 %v49
  %v174 = vunpack.c.l.b16 %v50
  %v175 = vunpack.c.h.b16 %v50
  %v176 = vunpack.c.l.b16 %v51
  %v177 = vunpack.c.h.b16 %v51
  %v178 = vunpack.c.l.b16 %v52
  %v179 = vunpack.c.h.b16 %v52
  %v180 = vunpack.c.l.b16 %v53
  %v181 = vunpack.c.h.b16 %v53
  %v182 = vunpack.c.l.b16 %v54
  %v183 = vunpack.c.h.b16 %v54
  %v184 = vunpack.c.l.b16 %v55
  %v185 = vunpack.c.h.b16 %v55
  %v186 = vunpack.c.l.b16 %v56
  %v187 = vunpack.c.h.b16 %v56
  %v188 = vunpack.c.l.b16 %v57
  %v189 = vunpack.c.h.b16 %v57
  %v190 = vunpack.c.l.b16 %v58
  %v191 = vunpack.c.h.b16 %v58
  %v192 = vunpack.c.l.b16 %v59
  %v193 = vunpack.c.h.b16 %v59
  %v194 = vunpack.c.l.b16 %v60
  %v195 = vunpack.c.h.b16 %v60
  %v196 = vunpack.c.l.b16 %v61
  %v197 = vunpack.c.h.b16 %v61
  %v198 = vunpack.c.l.b16 %v62
  %v199 = vunpack.c.h.b16 %v62
  %v200 = vunpack.c.l.b16 %v63
  %v201 = vunpack.c.h.b16 %v63
  %v202 = vunpack.c.l.b16 %v64
  %v203 = vunpack.c.h.b16 %v64
  %v204 = vunpack.c.l.b16 %v65
  %v205 = vunpack.c.h.b16 %v65
  %v206 = vunpack.c.l.b16 %v66
  %v207 = vunpack.c.h.b16 %v66
  %v208 = vunpack.c.l.b16 %v67
  %v209 = vunpack.c.h.b16 %v67
  %v210 = vunpack.c.l.b16 %v68
  %v211 = vunpack.c.h.b16 %v68
  %v212 = vunpack.c.l.b16 %v69
  %v213 = vunpack.c.h.b16 %v69
  %v214 = vpack.c.b16 %v162, %v158
  %v215 = vpack.c.b16 %v163, %v159
  %v216 = vpack.c.b16 %v164, %v160
  %v217 = vpack.c.b16 %v165, %v161
  %v218 = vpack.c.b16 %v170, %v166
  %v219 = vpack.c.b16 %v171, %v167
  %v220 = vpack.c.b16 %v172, %v168
  %v221 = vpack.c.b16 %v173, %v169
  %v222 = vpack.c.b16 %v178, %v174
  %v223 = vpack.c.b16 %v179, %v175
  %v224 = vpack.c.b16 %v180, %v176
  %v225 = vpack.c.b16 %v181, %v177
  %v226 = vpack.c.b16 %v186, %v182
  %v227 = vpack.c.b16 %v187, %v183
  %v228 = vpack.c.b16 %v188, %v184
  %v229 = vpack.c.b16 %v189, %v185
  %v230 = vpack.c.b16 %v194, %v190
  %v231 = vpack.c.b16 %v195, %v191
  %v232 = vpack.c.b16 %v196, %v192
  %v233 = vpack.c.b16 %v197, %v193
  %v234 = vpack.c.b16 %v202, %v198
  %v235 = vpack.c.b16 %v203, %v199
  %v236 = vpack.c.b16 %v204, %v200
  %v237 = vpack.c.b16 %v205, %v201
  %v238 = vpack.c.b16 %v210, %v206
  %v239 = vpack.c.b16 %v211, %v207
  %v240 = vpack.c.b16 %v212, %v208
  %v241 = vpack.c.b16 %v213, %v209
  %v323 = vunpack.c.l.b16 %v70
  %v324 = vunpack.c.h.b16 %v70
  %v325 = vunpack.c.l.b16 %v71
  %v326 = vunpack.c.h.b16 %v71
  %v327 = vunpack.c.l.b16 %v72
  %v328 = vunpack.c.h.b16 %v72
  %v329 = vunpack.c.l.b16 %v73
  %v330 = vunpack.c.h.b16 %v73
  %v331 = vunpack.c.l.b16 %v74
  %v332 = vunpack.c.h.b16 %v74
  %v333 = vunpack.c.l.b16 %v75
  %v334 = vunpack.c.h.b16 %v75
  %v335 = vunpack.c.l.b16 %v76
  %v336 = vunpack.c.h.b16 %v76
  %v337 = vunpack.c.l.b16 %v77
  %v338 = vunpack.c.h.b16 %v77
  %v339 = vunpack.c.l.b16 %v78
  %v340 = vunpack.c.h.b16 %v78
  %v341 = vunpack.c.l.b16 %v79
  %v342 = vunpack.c.h.b16 %v79
  %v343 = vunpack.c.l.b16 %v80
  %v344 = vunpack.c.h.b16 %v80
  %v345 = vunpack.c.l.b16 %v81
  %v346 = vunpack.c.h.b16 %v81
  %v347 = vunpack.c.l.b16 %v82
  %v348 = vunpack.c.h.b16 %v82
  %v349 = vunpack.c.l.b16 %v83
  %v350 = vunpack.c.h.b16 %v83
  %v351 = vunpack.c.l.b16 %v84
  %v352 = vunpack.c.h.b16 %v84
  %v353 = vunpack.c.l.b16 %v85
  %v354 = vunpack.c.h.b16 %v85
  %v355 = vunpack.c.l.b16 %v86
  %v356 = vunpack.c.h.b16 %v86
  %v357 = vunpack.c.l.b16 %v87
  %v358 = vunpack.c.h.b16 %v87
  %v359 = vunpack.c.l.b16 %v88
  %v360 = vunpack.c.h.b16 %v88
  %v361 = vunpack.c.l.b16 %v89
  %v362 = vunpack.c.h.b16 %v89
  %v363 = vunpack.c.l.b16 %v90
  %v364 = vunpack.c.h.b16 %v90
  %v365 = vunpack.c.l.b16 %v91
  %v366 = vunpack.c.h.b16 %v91
  %v367 = vunpack.c.l.b16 %v92
  %v368 = vunpack.c.h.b16 %v92
  %v369 = vunpack.c.l.b16 %v93
  %v370 = vunpack.c.h.b16 %v93
  %v371 = vunpack.c.l.b16 %v94
  %v372 = vunpack.c.h.b16 %v94
  %v373 = vunpack.c.l.b16 %v95
  %v374 = vunpack.c.h.b16 %v95
  %v375 = vunpack.c.l.b16 %v96
  %v376 = vunpack.c.h.b16 %v96
  %v377 = vunpack.c.l.b16 %v97
  %v378 = vunpack.c.h.b16 %v97
  %v379 = vunpack.c.l.b16 %v98
  %v380 = vunpack.c.h.b16 %v98
  %v381 = vunpack.c.l.b16 %v99
  %v382 = vunpack.c.h.b16 %v99
  %v383 = vunpack.c.l.b16 %v100
  %v384 = vunpack.c.h.b16 %v100
  %v385 = vunpack.c.l.b16 %v101
  %v386 = vunpack.c.h.b16 %v101
  %v387 = vunpack.c.l.b16 %v102
  %v388 = vunpack.c.h.b16 %v102
  %v389 = vunpack.c.l.b16 %v103
  %v390 = vunpack.c.h.b16 %v103
  %v391 = vunpack.c.l.b16 %v104
  %v392 = vunpack.c.h.b16 %v104
  %v393 = vunpack.c.l.b16 %v105
  %v394 = vunpack.c.h.b16 %v105
  %v395 = vunpack.c.l.b16 %v106
  %v396 = vunpack.c.h.b16 %v106
  %v397 = vunpack.c.l.b16 %v107
  %v398 = vunpack.c.h.b16 %v107
  %v399 = vunpack.c.l.b16 %v108
  %v400 = vunpack.c.h.b16 %v108
  %v401 = vunpack.c.l.b16 %v109
  %v402 = vunpack.c.h.b16 %v109
  %v403 = vunpack.c.l.b16 %v110
  %v404 = vunpack.c.h.b16 %v110
  %v405 = vunpack.c.l.b16 %v111
  %v406 = vunpack.c.h.b16 %v111
  %v407 = vunpack.c.l.b16 %v112
  %v408 = vunpack.c.h.b16 %v112
  %v409 = vunpack.c.l.b16 %v113
  %v410 = vunpack.c.h.b16 %v113
  %v411 = vunpack.c.l.b16 %v114
  %v412 = vunpack.c.h.b16 %v114
  %v413 = vunpack.c.l.b16 %v115
  %v414 = vunpack.c.h.b16 %v115
  %v415 = vunpack.c.l.b16 %v116
  %v416 = vunpack.c.h.b16 %v116
  %v417 = vunpack.c.l.b16 %v117
  %v418 = vunpack.c.h.b16 %v117
  %v419 = vunpack.c.l.b16 %v118
  %v420 = vunpack.c.h.b16 %v118
  %v421 = vunpack.c.l.b16 %v119
  %v422 = vunpack.c.h.b16 %v119
  %v423 = vunpack.c.l.b16 %v120
  %v424 = vunpack.c.h.b16 %v120
  %v425 = vunpack.c.l.b16 %v121
  %v426 = vunpack.c.h.b16 %v121
  %v427 = vunpack.c.l.b16 %v122
  %v428 = vunpack.c.h.b16 %v122
  %v429 = vunpack.c.l.b16 %v123
  %v430 = vunpack.c.h.b16 %v123
  %v431 = vunpack.c.l.b16 %v124
  %v432 = vunpack.c.h.b16 %v124
  %v433 = vunpack.c.l.b16 %v125
  %v434 = vunpack.c.h.b16 %v125
  %v435 = vunpack.c.l.b16 %v126
  %v436 = vunpack.c.h.b16 %v126
  %v437 = vunpack.c.l.b16 %v127
  %v438 = vunpack.c.h.b16 %v127
  %v439 = vunpack.c.l.b16 %v128
  %v440 = vunpack.c.h.b16 %v128
  %v441 = vunpack.c.l.b16 %v129
  %v442 = vunpack.c.h.b16 %v129
  %v443 = vpack.c.b16 %v325, %v323
  %v444 = vpack.c.b16 %v326, %v324
  %v445 = vpack.c.b16 %v329, %v327
  %v446 = vpack.c.b16 %v330, %v328
  %v447 = vpack.c.b16 %v333, %v331
  %v448 = vpack.c.b16 %v334, %v332
  %v449 = vpack.c.b16 %v337, %v335
  %v450 = vpack.c.b16 %v338, %v336
  %v451 = vpack.c.b16 %v341, %v339
  %v452 = vpack.c.b16 %v342, %v340
  %v453 = vpack.c.b16 %v345, %v343
  %v454 = vpack.c.b16 %v346, %v344
  %v455 = vpack.c.b16 %v349, %v347
  %v456 = vpack.c.b16 %v350, %v348
  %v457 = vpack.c.b16 %v353, %v351
  %v458 = vpack.c.b16 %v354, %v352
  %v459 = vpack.c.b16 %v357, %v355
  %v460 = vpack.c.b16 %v358, %v356
  %v461 = vpack.c.b16 %v361, %v359
  %v462 = vpack.c.b16 %v362, %v360
  %v463 = vpack.c.b16 %v365, %v363
  %v464 = vpack.c.b16 %v366, %v364
  %v465 = vpack.c.b16 %v369, %v367
  %v466 = vpack.c.b16 %v370, %v368
  %v467 = vpack.c.b16 %v373, %v371
  %v468 = vpack.c.b16 %v374, %v372
  %v469 = vpack.c.b16 %v377, %v375
  %v470 = vpack.c.b16 %v378, %v376
  %v471 = vpack.c.b16 %v381, %v379
  %v472 = vpack.c.b16 %v382, %v380
  %v473 = vpack.c.b16 %v385, %v383
  %v474 = vpack.c.b16 %v386, %v384
  %v475 = vpack.c.b16 %v389, %v387
  %v476 = vpack.c.b16 %v390, %v388
  %v477 = vpack.c.b16 %v393, %v391
  %v478 = vpack.c.b16 %v394, %v392
  %v479 = vpack.c.b16 %v397, %v395
  %v480 = vpack.c.b16 %v398, %v396
  %v481 = vpack.c.b16 %v401, %v399
  %v482 = vpack.c.b16 %v402, %v400
  %v483 = vpack.c.b16 %v405, %v403
  %v484 = vpack.c.b16 %v406, %v404
  %v485 = vpack.c.b16 %v409, %v407
  %v486 = vpack.c.b16 %v410, %v408
  %v487 = vpack.c.b16 %v413, %v411
  %v488 = vpack.c.b16 %v414, %v412
  %v489 = vpack.c.b16 %v417, %v415
  %v490 = vpack.c.b16 %v418, %v416
  %v491 = vpack.c.b16 %v421, %v419
  %v492 = vpack.c.b16 %v422, %v420
  %v493 = vpack.c.b16 %v425, %v423
  %v494 = vpack.c.b16 %v426, %v424
  %v495 = vpack.c.b16 %v429, %v427
  %v496 = vpack.c.b16 %v430, %v428
  %v497 = vpack.c.b16 %v433, %v431
  %v498 = vpack.c.b16 %v434, %v432
  %v499 = vpack.c.b16 %v437, %v435
  %v500 = vpack.c.b16 %v438, %v436
  %v501 = vpack.c.b16 %v441, %v439
  %v502 = vpack.c.b16 %v442, %v440
  %vm563 = vcmask 785408
  %v565 = vsel %vm563, %v217, 0
  %v568 = vsel %vm563, %v221, 0
  %v571 = vsel %vm563, %v225, 0
  %v574 = vsel %vm563, %v229, 0
  %v577 = vsel %vm563, %v233, 0
  %v580 = vsel %vm563, %v237, 0
  %v583 = vsel %vm563, %v241, 0
  %585 = vmatpush.bf16.msra.mxu0 %v457
  %586 = vmatpush.bf16.msra.mxu0 %v455
  %587 = vmatpush.bf16.msra.mxu0 %v453
  %588 = vmatpush.bf16.msra.mxu0 %v451
  %589 = vmatpush.bf16.msra.mxu0 %v449
  %590 = vmatpush.bf16.msra.mxu0 %v447
  %591 = vmatpush.bf16.msra.mxu0 %v445
  %592 = vmatpush.bf16.msra.mxu0 %v443
  %593 = vmatmul.bf16.gmra.mxu0 %v214
  %v594 = vpop.f32.mrf.mxu0
  %v595 = vadd.f32 0.0, %v594
  %v596 = vpop.f32.mrf.mxu0
  %v597 = vadd.f32 0.0, %v596
  %598 = vmatmul.bf16.gmra.mxu0 %v218
  %v599 = vpop.f32.mrf.mxu0
  %v600 = vadd.f32 0.0, %v599
  %v601 = vpop.f32.mrf.mxu0
  %v602 = vadd.f32 0.0, %v601
  %603 = vmatmul.bf16.gmra.mxu0 %v222
  %v604 = vpop.f32.mrf.mxu0
  %v605 = vadd.f32 0.0, %v604
  %v606 = vpop.f32.mrf.mxu0
  %v607 = vadd.f32 0.0, %v606
  %608 = vmatmul.bf16.gmra.mxu0 %v226
  %v609 = vpop.f32.mrf.mxu0
  %v610 = vadd.f32 0.0, %v609
  %v611 = vpop.f32.mrf.mxu0
  %v612 = vadd.f32 0.0, %v611
  %613 = vmatmul.bf16.gmra.mxu0 %v230
  %v614 = vpop.f32.mrf.mxu0
  %v615 = vadd.f32 0.0, %v614
  %v616 = vpop.f32.mrf.mxu0
  %v617 = vadd.f32 0.0, %v616
  %618 = vmatmul.bf16.gmra.mxu0 %v234
  %v619 = vpop.f32.mrf.mxu0
  %v620 = vadd.f32 0.0, %v619
  %v621 = vpop.f32.mrf.mxu0
  %v622 = vadd.f32 0.0, %v621
  %623 = vmatmul.bf16.gmra.mxu0 %v238
  %v624 = vpop.f32.mrf.mxu0
  %v625 = vadd.f32 0.0, %v624
  %v626 = vpop.f32.mrf.mxu0
  %v627 = vadd.f32 0.0, %v626
  %628 = vdwg.mxu0
  %629 = vmatpush.bf16.msra.mxu0 %v473
  %630 = vmatpush.bf16.msra.mxu0 %v471
  %631 = vmatpush.bf16.msra.mxu0 %v469
  %632 = vmatpush.bf16.msra.mxu0 %v467
  %633 = vmatpush.bf16.msra.mxu0 %v465
  %634 = vmatpush.bf16.msra.mxu0 %v463
  %635 = vmatpush.bf16.msra.mxu0 %v461
  %636 = vmatpush.bf16.msra.mxu0 %v459
  %637 = vmatmul.bf16.gmra.mxu0 %v215
  %v638 = vpop.f32.mrf.mxu0
  %v639 = vadd.f32 %v595, %v638
  %v640 = vpop.f32.mrf.mxu0
  %v641 = vadd.f32 %v597, %v640
  %642 = vmatmul.bf16.gmra.mxu0 %v219
  %v643 = vpop.f32.mrf.mxu0
  %v644 = vadd.f32 %v600, %v643
  %v645 = vpop.f32.mrf.mxu0
  %v646 = vadd.f32 %v602, %v645
  %647 = vmatmul.bf16.gmra.mxu0 %v223
  %v648 = vpop.f32.mrf.mxu0
  %v649 = vadd.f32 %v605, %v648
  %v650 = vpop.f32.mrf.mxu0
  %v651 = vadd.f32 %v607, %v650
  %652 = vmatmul.bf16.gmra.mxu0 %v227
  %v653 = vpop.f32.mrf.mxu0
  %v654 = vadd.f32 %v610, %v653
  %v655 = vpop.f32.mrf.mxu0
  %v656 = vadd.f32 %v612, %v655
  %657 = vmatmul.bf16.gmra.mxu0 %v231
  %v658 = vpop.f32.mrf.mxu0
  %v659 = vadd.f32 %v615, %v658
  %v660 = vpop.f32.mrf.mxu0
  %v661 = vadd.f32 %v617, %v660
  %662 = vmatmul.bf16.gmra.mxu0 %v235
  %v663 = vpop.f32.mrf.mxu0
  %v664 = vadd.f32 %v620, %v663
  %v665 = vpop.f32.mrf.mxu0
  %v666 = vadd.f32 %v622, %v665
  %667 = vmatmul.bf16.gmra.mxu0 %v239
  %v668 = vpop.f32.mrf.mxu0
  %v669 = vadd.f32 %v625, %v668
  %v670 = vpop.f32.mrf.mxu0
  %v671 = vadd.f32 %v627, %v670
  %672 = vdwg.mxu0
  %673 = vmatpush.bf16.msra.mxu0 %v489
  %674 = vmatpush.bf16.msra.mxu0 %v487
  %675 = vmatpush.bf16.msra.mxu0 %v485
  %676 = vmatpush.bf16.msra.mxu0 %v483
  %677 = vmatpush.bf16.msra.mxu0 %v481
  %678 = vmatpush.bf16.msra.mxu0 %v479
  %679 = vmatpush.bf16.msra.mxu0 %v477
  %680 = vmatpush.bf16.msra.mxu0 %v475
  %681 = vmatmul.bf16.gmra.mxu0 %v216
  %v682 = vpop.f32.mrf.mxu0
  %v683 = vadd.f32 %v639, %v682
  %v684 = vpop.f32.mrf.mxu0
  %v685 = vadd.f32 %v641, %v684
  %686 = vmatmul.bf16.gmra.mxu0 %v220
  %v687 = vpop.f32.mrf.mxu0
  %v688 = vadd.f32 %v644, %v687
  %v689 = vpop.f32.mrf.mxu0
  %v690 = vadd.f32 %v646, %v689
  %691 = vmatmul.bf16.gmra.mxu0 %v224
  %v692 = vpop.f32.mrf.mxu0
  %v693 = vadd.f32 %v649, %v692
  %v694 = vpop.f32.mrf.mxu0
  %v695 = vadd.f32 %v651, %v694
  %696 = vmatmul.bf16.gmra.mxu0 %v228
  %v697 = vpop.f32.mrf.mxu0
  %v698 = vadd.f32 %v654, %v697
  %v699 = vpop.f32.mrf.mxu0
  %v700 = vadd.f32 %v656, %v699
  %701 = vmatmul.bf16.gmra.mxu0 %v232
  %v702 = vpop.f32.mrf.mxu0
  %v703 = vadd.f32 %v659, %v702
  %v704 = vpop.f32.mrf.mxu0
  %v705 = vadd.f32 %v661, %v704
  %706 = vmatmul.bf16.gmra.mxu0 %v236
  %v707 = vpop.f32.mrf.mxu0
  %v708 = vadd.f32 %v664, %v707
  %v709 = vpop.f32.mrf.mxu0
  %v710 = vadd.f32 %v666, %v709
  %711 = vmatmul.bf16.gmra.mxu0 %v240
  %v712 = vpop.f32.mrf.mxu0
  %v713 = vadd.f32 %v669, %v712
  %v714 = vpop.f32.mrf.mxu0
  %v715 = vadd.f32 %v671, %v714
  %716 = vdwg.mxu0
  %717 = vmatpush.bf16.msra.mxu0 0
  %718 = vmatpush.bf16.msra.mxu0 0
  %719 = vmatpush.bf16.msra.mxu0 %v501
  %720 = vmatpush.bf16.msra.mxu0 %v499
  %721 = vmatpush.bf16.msra.mxu0 %v497
  %722 = vmatpush.bf16.msra.mxu0 %v495
  %723 = vmatpush.bf16.msra.mxu0 %v493
  %724 = vmatpush.bf16.msra.mxu0 %v491
  %725 = vmatmul.bf16.gmra.mxu0 %v565
  %v726 = vpop.f32.mrf.mxu0
  %v727 = vadd.f32 %v683, %v726
  %v728 = vpop.f32.mrf.mxu0
  %v729 = vadd.f32 %v685, %v728
  %730 = vmatmul.bf16.gmra.mxu0 %v568
  %v731 = vpop.f32.mrf.mxu0
  %v732 = vadd.f32 %v688, %v731
  %v733 = vpop.f32.mrf.mxu0
  %v734 = vadd.f32 %v690, %v733
  %735 = vmatmul.bf16.gmra.mxu0 %v571
  %v736 = vpop.f32.mrf.mxu0
  %v737 = vadd.f32 %v693, %v736
  %v738 = vpop.f32.mrf.mxu0
  %v739 = vadd.f32 %v695, %v738
  %740 = vmatmul.bf16.gmra.mxu0 %v574
  %v741 = vpop.f32.mrf.mxu0
  %v742 = vadd.f32 %v698, %v741
  %v743 = vpop.f32.mrf.mxu0
  %v744 = vadd.f32 %v700, %v743
  %745 = vmatmul.bf16.gmra.mxu0 %v577
  %v746 = vpop.f32.mrf.mxu0
  %v747 = vadd.f32 %v703, %v746
  %v748 = vpop.f32.mrf.mxu0
  %v749 = vadd.f32 %v705, %v748
  %750 = vmatmul.bf16.gmra.mxu0 %v580
  %v751 = vpop.f32.mrf.mxu0
  %v752 = vadd.f32 %v708, %v751
  %v753 = vpop.f32.mrf.mxu0
  %v754 = vadd.f32 %v710, %v753
  %755 = vmatmul.bf16.gmra.mxu0 %v583
  %v756 = vpop.f32.mrf.mxu0
  %v757 = vadd.f32 %v713, %v756
  %v758 = vpop.f32.mrf.mxu0
  %v759 = vadd.f32 %v715, %v758
  %760 = vdwg.mxu0
  %761 = vmatpush.bf16.msra.mxu0 %v458
  %762 = vmatpush.bf16.msra.mxu0 %v456
  %763 = vmatpush.bf16.msra.mxu0 %v454
  %764 = vmatpush.bf16.msra.mxu0 %v452
  %765 = vmatpush.bf16.msra.mxu0 %v450
  %766 = vmatpush.bf16.msra.mxu0 %v448
  %767 = vmatpush.bf16.msra.mxu0 %v446
  %768 = vmatpush.bf16.msra.mxu0 %v444
  %769 = vmatmul.bf16.gmra.mxu0 %v214
  %v770 = vpop.f32.mrf.mxu0
  %v771 = vadd.f32 0.0, %v770
  %v772 = vpop.f32.mrf.mxu0
  %v773 = vadd.f32 0.0, %v772
  %774 = vmatmul.bf16.gmra.mxu0 %v218
  %v775 = vpop.f32.mrf.mxu0
  %v776 = vadd.f32 0.0, %v775
  %v777 = vpop.f32.mrf.mxu0
  %v778 = vadd.f32 0.0, %v777
  %779 = vmatmul.bf16.gmra.mxu0 %v222
  %v780 = vpop.f32.mrf.mxu0
  %v781 = vadd.f32 0.0, %v780
  %v782 = vpop.f32.mrf.mxu0
  %v783 = vadd.f32 0.0, %v782
  %784 = vmatmul.bf16.gmra.mxu0 %v226
  %v785 = vpop.f32.mrf.mxu0
  %v786 = vadd.f32 0.0, %v785
  %v787 = vpop.f32.mrf.mxu0
  %v788 = vadd.f32 0.0, %v787
  %789 = vmatmul.bf16.gmra.mxu0 %v230
  %v790 = vpop.f32.mrf.mxu0
  %v791 = vadd.f32 0.0, %v790
  %v792 = vpop.f32.mrf.mxu0
  %v793 = vadd.f32 0.0, %v792
  %794 = vmatmul.bf16.gmra.mxu0 %v234
  %v795 = vpop.f32.mrf.mxu0
  %v796 = vadd.f32 0.0, %v795
  %v797 = vpop.f32.mrf.mxu0
  %v798 = vadd.f32 0.0, %v797
  %799 = vmatmul.bf16.gmra.mxu0 %v238
  %v800 = vpop.f32.mrf.mxu0
  %v801 = vadd.f32 0.0, %v800
  %v802 = vpop.f32.mrf.mxu0
  %v803 = vadd.f32 0.0, %v802
  %804 = vdwg.mxu0
  %805 = vmatpush.bf16.msra.mxu0 %v474
  %806 = vmatpush.bf16.msra.mxu0 %v472
  %807 = vmatpush.bf16.msra.mxu0 %v470
  %808 = vmatpush.bf16.msra.mxu0 %v468
  %809 = vmatpush.bf16.msra.mxu0 %v466
  %810 = vmatpush.bf16.msra.mxu0 %v464
  %811 = vmatpush.bf16.msra.mxu0 %v462
  %812 = vmatpush.bf16.msra.mxu0 %v460
  %813 = vmatmul.bf16.gmra.mxu0 %v215
  %v814 = vpop.f32.mrf.mxu0
  %v815 = vadd.f32 %v771, %v814
  %v816 = vpop.f32.mrf.mxu0
  %v817 = vadd.f32 %v773, %v816
  %818 = vmatmul.bf16.gmra.mxu0 %v219
  %v819 = vpop.f32.mrf.mxu0
  %v820 = vadd.f32 %v776, %v819
  %v821 = vpop.f32.mrf.mxu0
  %v822 = vadd.f32 %v778, %v821
  %823 = vmatmul.bf16.gmra.mxu0 %v223
  %v824 = vpop.f32.mrf.mxu0
  %v825 = vadd.f32 %v781, %v824
  %v826 = vpop.f32.mrf.mxu0
  %v827 = vadd.f32 %v783, %v826
  %828 = vmatmul.bf16.gmra.mxu0 %v227
  %v829 = vpop.f32.mrf.mxu0
  %v830 = vadd.f32 %v786, %v829
  %v831 = vpop.f32.mrf.mxu0
  %v832 = vadd.f32 %v788, %v831
  %833 = vmatmul.bf16.gmra.mxu0 %v231
  %v834 = vpop.f32.mrf.mxu0
  %v835 = vadd.f32 %v791, %v834
  %v836 = vpop.f32.mrf.mxu0
  %v837 = vadd.f32 %v793, %v836
  %838 = vmatmul.bf16.gmra.mxu0 %v235
  %v839 = vpop.f32.mrf.mxu0
  %v840 = vadd.f32 %v796, %v839
  %v841 = vpop.f32.mrf.mxu0
  %v842 = vadd.f32 %v798, %v841
  %843 = vmatmul.bf16.gmra.mxu0 %v239
  %v844 = vpop.f32.mrf.mxu0
  %v845 = vadd.f32 %v801, %v844
  %v846 = vpop.f32.mrf.mxu0
  %v847 = vadd.f32 %v803, %v846
  %848 = vdwg.mxu0
  %849 = vmatpush.bf16.msra.mxu0 %v490
  %850 = vmatpush.bf16.msra.mxu0 %v488
  %851 = vmatpush.bf16.msra.mxu0 %v486
  %852 = vmatpush.bf16.msra.mxu0 %v484
  %853 = vmatpush.bf16.msra.mxu0 %v482
  %854 = vmatpush.bf16.msra.mxu0 %v480
  %855 = vmatpush.bf16.msra.mxu0 %v478
  %856 = vmatpush.bf16.msra.mxu0 %v476
  %857 = vmatmul.bf16.gmra.mxu0 %v216
  %v858 = vpop.f32.mrf.mxu0
  %v859 = vadd.f32 %v815, %v858
  %v860 = vpop.f32.mrf.mxu0
  %v861 = vadd.f32 %v817, %v860
  %862 = vmatmul.bf16.gmra.mxu0 %v220
  %v863 = vpop.f32.mrf.mxu0
  %v864 = vadd.f32 %v820, %v863
  %v865 = vpop.f32.mrf.mxu0
  %v866 = vadd.f32 %v822, %v865
  %867 = vmatmul.bf16.gmra.mxu0 %v224
  %v868 = vpop.f32.mrf.mxu0
  %v869 = vadd.f32 %v825, %v868
  %v870 = vpop.f32.mrf.mxu0
  %v871 = vadd.f32 %v827, %v870
  %872 = vmatmul.bf16.gmra.mxu0 %v228
  %v873 = vpop.f32.mrf.mxu0
  %v874 = vadd.f32 %v830, %v873
  %v875 = vpop.f32.mrf.mxu0
  %v876 = vadd.f32 %v832, %v875
  %877 = vmatmul.bf16.gmra.mxu0 %v232
  %v878 = vpop.f32.mrf.mxu0
  %v879 = vadd.f32 %v835, %v878
  %v880 = vpop.f32.mrf.mxu0
  %v881 = vadd.f32 %v837, %v880
  %882 = vmatmul.bf16.gmra.mxu0 %v236
  %v883 = vpop.f32.mrf.mxu0
  %v884 = vadd.f32 %v840, %v883
  %v885 = vpop.f32.mrf.mxu0
  %v886 = vadd.f32 %v842, %v885
  %887 = vmatmul.bf16.gmra.mxu0 %v240
  %v888 = vpop.f32.mrf.mxu0
  %v889 = vadd.f32 %v845, %v888
  %v890 = vpop.f32.mrf.mxu0
  %v891 = vadd.f32 %v847, %v890
  %892 = vdwg.mxu0
  %893 = vmatpush.bf16.msra.mxu0 0
  %894 = vmatpush.bf16.msra.mxu0 0
  %895 = vmatpush.bf16.msra.mxu0 %v502
  %896 = vmatpush.bf16.msra.mxu0 %v500
  %897 = vmatpush.bf16.msra.mxu0 %v498
  %898 = vmatpush.bf16.msra.mxu0 %v496
  %899 = vmatpush.bf16.msra.mxu0 %v494
  %900 = vmatpush.bf16.msra.mxu0 %v492
  %901 = vmatmul.bf16.gmra.mxu0 %v565
  %v902 = vpop.f32.mrf.mxu0
  %v903 = vadd.f32 %v859, %v902
  %v904 = vpop.f32.mrf.mxu0
  %v905 = vadd.f32 %v861, %v904
  %906 = vmatmul.bf16.gmra.mxu0 %v568
  %v907 = vpop.f32.mrf.mxu0
  %v908 = vadd.f32 %v864, %v907
  %v909 = vpop.f32.mrf.mxu0
  %v910 = vadd.f32 %v866, %v909
  %911 = vmatmul.bf16.gmra.mxu0 %v571
  %v912 = vpop.f32.mrf.mxu0
  %v913 = vadd.f32 %v869, %v912
  %v914 = vpop.f32.mrf.mxu0
  %v915 = vadd.f32 %v871, %v914
  %916 = vmatmul.bf16.gmra.mxu0 %v574
  %v917 = vpop.f32.mrf.mxu0
  %v918 = vadd.f32 %v874, %v917
  %v919 = vpop.f32.mrf.mxu0
  %v920 = vadd.f32 %v876, %v919
  %921 = vmatmul.bf16.gmra.mxu0 %v577
  %v922 = vpop.f32.mrf.mxu0
  %v923 = vadd.f32 %v879, %v922
  %v924 = vpop.f32.mrf.mxu0
  %v925 = vadd.f32 %v881, %v924
  %926 = vmatmul.bf16.gmra.mxu0 %v580
  %v927 = vpop.f32.mrf.mxu0
  %v928 = vadd.f32 %v884, %v927
  %v929 = vpop.f32.mrf.mxu0
  %v930 = vadd.f32 %v886, %v929
  %931 = vmatmul.bf16.gmra.mxu0 %v583
  %v932 = vpop.f32.mrf.mxu0
  %v933 = vadd.f32 %v889, %v932
  %v934 = vpop.f32.mrf.mxu0
  %v935 = vadd.f32 %v891, %v934
  %936 = vdwg.mxu0
  %v937 = vld [vmem:[%s1] sm:$0xff]
  %v938 = vld [vmem:[%s1 + $0x8] sm:$0xff]
  %v939 = vld [vmem:[%s1 + $0x10] sm:$0xff]
  %v940 = vld [vmem:[%s1 + $0x18] sm:$0xff]
  %v941 = vld [vmem:[%s1 + $0x20] sm:$0xff]
  %v942 = vld [vmem:[%s1 + $0x28] sm:$0xff]
  %v943 = vld [vmem:[%s1 + $0x30] sm:$0xff]
  %v944 = vld [vmem:[%s1 + $0x38] sm:$0xff]
  %v945 = vld [vmem:[%s1 + $0x40] sm:$0xff]
  %v946 = vld [vmem:[%s1 + $0x48] sm:$0xff]
  %v947 = vld [vmem:[%s1 + $0x50] sm:$0xff]
  %v948 = vld [vmem:[%s1 + $0x58] sm:$0xff]
  %v949 = vld [vmem:[%s1 + $0x60] sm:$0xff]
  %v950 = vld [vmem:[%s1 + $0x68] sm:$0xff]
  %v951 = vld [vmem:[%s1 + $0x70] sm:$0xff]
  %v952 = vld [vmem:[%s1 + $0x78] sm:$0xff]
  %v953 = vld [vmem:[%s1 + $0x80] sm:$0xff]
  %v954 = vld [vmem:[%s1 + $0x88] sm:$0xff]
  %v955 = vld [vmem:[%s1 + $0x90] sm:$0xff]
  %v956 = vld [vmem:[%s1 + $0x98] sm:$0xff]
  %v957 = vld [vmem:[%s1 + $0xa0] sm:$0xff]
  %v958 = vld [vmem:[%s1 + $0xa8] sm:$0xff]
  %v959 = vld [vmem:[%s1 + $0xb0] sm:$0xff]
  %v960 = vld [vmem:[%s1 + $0xb8] sm:$0xff]
  %v961 = vld [vmem:[%s1 + $0xc0] sm:$0xff]
  %v962 = vld [vmem:[%s1 + $0xc8] sm:$0xff]
  %v963 = vld [vmem:[%s1 + $0xd0] sm:$0xff]
  %v964 = vld [vmem:[%s1 + $0xd8] sm:$0xff]
  %v993 = vunpack.c.l.b16 %v937
  %v994 = vunpack.c.h.b16 %v937
  %v995 = vunpack.c.l.b16 %v938
  %v996 = vunpack.c.h.b16 %v938
  %v997 = vunpack.c.l.b16 %v939
  %v998 = vunpack.c.h.b16 %v939
  %v999 = vunpack.c.l.b16 %v940
  %v1000 = vunpack.c.h.b16 %v940
  %v1001 = vunpack.c.l.b16 %v941
  %v1002 = vunpack.c.h.b16 %v941
  %v1003 = vunpack.c.l.b16 %v942
  %v1004 = vunpack.c.h.b16 %v942
  %v1005 = vunpack.c.l.b16 %v943
  %v1006 = vunpack.c.h.b16 %v943
  %v1007 = vunpack.c.l.b16 %v944
  %v1008 = vunpack.c.h.b16 %v944
  %v1009 = vunpack.c.l.b16 %v945
  %v1010 = vunpack.c.h.b16 %v945
  %v1011 = vunpack.c.l.b16 %v946
  %v1012 = vunpack.c.h.b16 %v946
  %v1013 = vunpack.c.l.b16 %v947
  %v1014 = vunpack.c.h.b16 %v947
  %v1015 = vunpack.c.l.b16 %v948
  %v1016 = vunpack.c.h.b16 %v948
  %v1017 = vunpack.c.l.b16 %v949
  %v1018 = vunpack.c.h.b16 %v949
  %v1019 = vunpack.c.l.b16 %v950
  %v1020 = vunpack.c.h.b16 %v950
  %v1021 = vunpack.c.l.b16 %v951
  %v1022 = vunpack.c.h.b16 %v951
  %v1023 = vunpack.c.l.b16 %v952
  %v1024 = vunpack.c.h.b16 %v952
  %v1025 = vunpack.c.l.b16 %v953
  %v1026 = vunpack.c.h.b16 %v953
  %v1027 = vunpack.c.l.b16 %v954
  %v1028 = vunpack.c.h.b16 %v954
  %v1029 = vunpack.c.l.b16 %v955
  %v1030 = vunpack.c.h.b16 %v955
  %v1031 = vunpack.c.l.b16 %v956
  %v1032 = vunpack.c.h.b16 %v956
  %v1033 = vunpack.c.l.b16 %v957
  %v1034 = vunpack.c.h.b16 %v957
  %v1035 = vunpack.c.l.b16 %v958
  %v1036 = vunpack.c.h.b16 %v958
  %v1037 = vunpack.c.l.b16 %v959
  %v1038 = vunpack.c.h.b16 %v959
  %v1039 = vunpack.c.l.b16 %v960
  %v1040 = vunpack.c.h.b16 %v960
  %v1041 = vunpack.c.l.b16 %v961
  %v1042 = vunpack.c.h.b16 %v961
  %v1043 = vunpack.c.l.b16 %v962
  %v1044 = vunpack.c.h.b16 %v962
  %v1045 = vunpack.c.l.b16 %v963
  %v1046 = vunpack.c.h.b16 %v963
  %v1047 = vunpack.c.l.b16 %v964
  %v1048 = vunpack.c.h.b16 %v964
  %v1049 = vpack.c.b16 %v997, %v993
  %v1050 = vpack.c.b16 %v998, %v994
  %v1051 = vpack.c.b16 %v999, %v995
  %v1052 = vpack.c.b16 %v1000, %v996
  %v1053 = vpack.c.b16 %v1005, %v1001
  %v1054 = vpack.c.b16 %v1006, %v1002
  %v1055 = vpack.c.b16 %v1007, %v1003
  %v1056 = vpack.c.b16 %v1008, %v1004
  %v1057 = vpack.c.b16 %v1013, %v1009
  %v1058 = vpack.c.b16 %v1014, %v1010
  %v1059 = vpack.c.b16 %v1015, %v1011
  %v1060 = vpack.c.b16 %v1016, %v1012
  %v1061 = vpack.c.b16 %v1021, %v1017
  %v1062 = vpack.c.b16 %v1022, %v1018
  %v1063 = vpack.c.b16 %v1023, %v1019
  %v1064 = vpack.c.b16 %v1024, %v1020
  %v1065 = vpack.c.b16 %v1029, %v1025
  %v1066 = vpack.c.b16 %v1030, %v1026
  %v1067 = vpack.c.b16 %v1031, %v1027
  %v1068 = vpack.c.b16 %v1032, %v1028
  %v1069 = vpack.c.b16 %v1037, %v1033
  %v1070 = vpack.c.b16 %v1038, %v1034
  %v1071 = vpack.c.b16 %v1039, %v1035
  %v1072 = vpack.c.b16 %v1040, %v1036
  %v1073 = vpack.c.b16 %v1045, %v1041
  %v1074 = vpack.c.b16 %v1046, %v1042
  %v1075 = vpack.c.b16 %v1047, %v1043
  %v1076 = vpack.c.b16 %v1048, %v1044
  %v1099 = vsel %vm563, %v1052, 0
  %v1102 = vsel %vm563, %v1056, 0
  %v1105 = vsel %vm563, %v1060, 0
  %v1108 = vsel %vm563, %v1064, 0
  %v1111 = vsel %vm563, %v1068, 0
  %v1114 = vsel %vm563, %v1072, 0
  %v1117 = vsel %vm563, %v1076, 0
  %1119 = vmatpush.bf16.msra.mxu0 %v457
  %1120 = vmatpush.bf16.msra.mxu0 %v455
  %1121 = vmatpush.bf16.msra.mxu0 %v453
  %1122 = vmatpush.bf16.msra.mxu0 %v451
  %1123 = vmatpush.bf16.msra.mxu0 %v449
  %1124 = vmatpush.bf16.msra.mxu0 %v447
  %1125 = vmatpush.bf16.msra.mxu0 %v445
  %1126 = vmatpush.bf16.msra.mxu0 %v443
  %1127 = vmatmul.bf16.gmra.mxu0 %v1049
  %v1128 = vpop.f32.mrf.mxu0
  %v1129 = vadd.f32 0.0, %v1128
  %v1130 = vpop.f32.mrf.mxu0
  %v1131 = vadd.f32 0.0, %v1130
  %1132 = vmatmul.bf16.gmra.mxu0 %v1053
  %v1133 = vpop.f32.mrf.mxu0
  %v1134 = vadd.f32 0.0, %v1133
  %v1135 = vpop.f32.mrf.mxu0
  %v1136 = vadd.f32 0.0, %v1135
  %1137 = vmatmul.bf16.gmra.mxu0 %v1057
  %v1138 = vpop.f32.mrf.mxu0
  %v1139 = vadd.f32 0.0, %v1138
  %v1140 = vpop.f32.mrf.mxu0
  %v1141 = vadd.f32 0.0, %v1140
  %1142 = vmatmul.bf16.gmra.mxu0 %v1061
  %v1143 = vpop.f32.mrf.mxu0
  %v1144 = vadd.f32 0.0, %v1143
  %v1145 = vpop.f32.mrf.mxu0
  %v1146 = vadd.f32 0.0, %v1145
  %1147 = vmatmul.bf16.gmra.mxu0 %v1065
  %v1148 = vpop.f32.mrf.mxu0
  %v1149 = vadd.f32 0.0, %v1148
  %v1150 = vpop.f32.mrf.mxu0
  %v1151 = vadd.f32 0.0, %v1150
  %1152 = vmatmul.bf16.gmra.mxu0 %v1069
  %v1153 = vpop.f32.mrf.mxu0
  %v1154 = vadd.f32 0.0, %v1153
  %v1155 = vpop.f32.mrf.mxu0
  %v1156 = vadd.f32 0.0, %v1155
  %1157 = vmatmul.bf16.gmra.mxu0 %v1073
  %v1158 = vpop.f32.mrf.mxu0
  %v1159 = vadd.f32 0.0, %v1158
  %v1160 = vpop.f32.mrf.mxu0
  %v1161 = vadd.f32 0.0, %v1160
  %1162 = vdwg.mxu0
  %1163 = vmatpush.bf16.msra.mxu0 %v473
  %1164 = vmatpush.bf16.msra.mxu0 %v471
  %1165 = vmatpush.bf16.msra.mxu0 %v469
  %1166 = vmatpush.bf16.msra.mxu0 %v467
  %1167 = vmatpush.bf16.msra.mxu0 %v465
  %1168 = vmatpush.bf16.msra.mxu0 %v463
  %1169 = vmatpush.bf16.msra.mxu0 %v461
  %1170 = vmatpush.bf16.msra.mxu0 %v459
  %1171 = vmatmul.bf16.gmra.mxu0 %v1050
  %v1172 = vpop.f32.mrf.mxu0
  %v1173 = vadd.f32 %v1129, %v1172
  %v1174 = vpop.f32.mrf.mxu0
  %v1175 = vadd.f32 %v1131, %v1174
  %1176 = vmatmul.bf16.gmra.mxu0 %v1054
  %v1177 = vpop.f32.mrf.mxu0
  %v1178 = vadd.f32 %v1134, %v1177
  %v1179 = vpop.f32.mrf.mxu0
  %v1180 = vadd.f32 %v1136, %v1179
  %1181 = vmatmul.bf16.gmra.mxu0 %v1058
  %v1182 = vpop.f32.mrf.mxu0
  %v1183 = vadd.f32 %v1139, %v1182
  %v1184 = vpop.f32.mrf.mxu0
  %v1185 = vadd.f32 %v1141, %v1184
  %1186 = vmatmul.bf16.gmra.mxu0 %v1062
  %v1187 = vpop.f32.mrf.mxu0
  %v1188 = vadd.f32 %v1144, %v1187
  %v1189 = vpop.f32.mrf.mxu0
  %v1190 = vadd.f32 %v1146, %v1189
  %1191 = vmatmul.bf16.gmra.mxu0 %v1066
  %v1192 = vpop.f32.mrf.mxu0
  %v1193 = vadd.f32 %v1149, %v1192
  %v1194 = vpop.f32.mrf.mxu0
  %v1195 = vadd.f32 %v1151, %v1194
  %1196 = vmatmul.bf16.gmra.mxu0 %v1070
  %v1197 = vpop.f32.mrf.mxu0
  %v1198 = vadd.f32 %v1154, %v1197
  %v1199 = vpop.f32.mrf.mxu0
  %v1200 = vadd.f32 %v1156, %v1199
  %1201 = vmatmul.bf16.gmra.mxu0 %v1074
  %v1202 = vpop.f32.mrf.mxu0
  %v1203 = vadd.f32 %v1159, %v1202
  %v1204 = vpop.f32.mrf.mxu0
  %v1205 = vadd.f32 %v1161, %v1204
  %1206 = vdwg.mxu0
  %1207 = vmatpush.bf16.msra.mxu0 %v489
  %1208 = vmatpush.bf16.msra.mxu0 %v487
  %1209 = vmatpush.bf16.msra.mxu0 %v485
  %1210 = vmatpush.bf16.msra.mxu0 %v483
  %1211 = vmatpush.bf16.msra.mxu0 %v481
  %1212 = vmatpush.bf16.msra.mxu0 %v479
  %1213 = vmatpush.bf16.msra.mxu0 %v477
  %1214 = vmatpush.bf16.msra.mxu0 %v475
  %1215 = vmatmul.bf16.gmra.mxu0 %v1051
  %v1216 = vpop.f32.mrf.mxu0
  %v1217 = vadd.f32 %v1173, %v1216
  %v1218 = vpop.f32.mrf.mxu0
  %v1219 = vadd.f32 %v1175, %v1218
  %1220 = vmatmul.bf16.gmra.mxu0 %v1055
  %v1221 = vpop.f32.mrf.mxu0
  %v1222 = vadd.f32 %v1178, %v1221
  %v1223 = vpop.f32.mrf.mxu0
  %v1224 = vadd.f32 %v1180, %v1223
  %1225 = vmatmul.bf16.gmra.mxu0 %v1059
  %v1226 = vpop.f32.mrf.mxu0
  %v1227 = vadd.f32 %v1183, %v1226
  %v1228 = vpop.f32.mrf.mxu0
  %v1229 = vadd.f32 %v1185, %v1228
  %1230 = vmatmul.bf16.gmra.mxu0 %v1063
  %v1231 = vpop.f32.mrf.mxu0
  %v1232 = vadd.f32 %v1188, %v1231
  %v1233 = vpop.f32.mrf.mxu0
  %v1234 = vadd.f32 %v1190, %v1233
  %1235 = vmatmul.bf16.gmra.mxu0 %v1067
  %v1236 = vpop.f32.mrf.mxu0
  %v1237 = vadd.f32 %v1193, %v1236
  %v1238 = vpop.f32.mrf.mxu0
  %v1239 = vadd.f32 %v1195, %v1238
  %1240 = vmatmul.bf16.gmra.mxu0 %v1071
  %v1241 = vpop.f32.mrf.mxu0
  %v1242 = vadd.f32 %v1198, %v1241
  %v1243 = vpop.f32.mrf.mxu0
  %v1244 = vadd.f32 %v1200, %v1243
  %1245 = vmatmul.bf16.gmra.mxu0 %v1075
  %v1246 = vpop.f32.mrf.mxu0
  %v1247 = vadd.f32 %v1203, %v1246
  %v1248 = vpop.f32.mrf.mxu0
  %v1249 = vadd.f32 %v1205, %v1248
  %1250 = vdwg.mxu0
  %1251 = vmatpush.bf16.msra.mxu0 0
  %1252 = vmatpush.bf16.msra.mxu0 0
  %1253 = vmatpush.bf16.msra.mxu0 %v501
  %1254 = vmatpush.bf16.msra.mxu0 %v499
  %1255 = vmatpush.bf16.msra.mxu0 %v497
  %1256 = vmatpush.bf16.msra.mxu0 %v495
  %1257 = vmatpush.bf16.msra.mxu0 %v493
  %1258 = vmatpush.bf16.msra.mxu0 %v491
  %1259 = vmatmul.bf16.gmra.mxu0 %v1099
  %v1260 = vpop.f32.mrf.mxu0
  %v1261 = vadd.f32 %v1217, %v1260
  %v1262 = vpop.f32.mrf.mxu0
  %v1263 = vadd.f32 %v1219, %v1262
  %1264 = vmatmul.bf16.gmra.mxu0 %v1102
  %v1265 = vpop.f32.mrf.mxu0
  %v1266 = vadd.f32 %v1222, %v1265
  %v1267 = vpop.f32.mrf.mxu0
  %v1268 = vadd.f32 %v1224, %v1267
  %1269 = vmatmul.bf16.gmra.mxu0 %v1105
  %v1270 = vpop.f32.mrf.mxu0
  %v1271 = vadd.f32 %v1227, %v1270
  %v1272 = vpop.f32.mrf.mxu0
  %v1273 = vadd.f32 %v1229, %v1272
  %1274 = vmatmul.bf16.gmra.mxu0 %v1108
  %v1275 = vpop.f32.mrf.mxu0
  %v1276 = vadd.f32 %v1232, %v1275
  %v1277 = vpop.f32.mrf.mxu0
  %v1278 = vadd.f32 %v1234, %v1277
  %1279 = vmatmul.bf16.gmra.mxu0 %v1111
  %v1280 = vpop.f32.mrf.mxu0
  %v1281 = vadd.f32 %v1237, %v1280
  %v1282 = vpop.f32.mrf.mxu0
  %v1283 = vadd.f32 %v1239, %v1282
  %1284 = vmatmul.bf16.gmra.mxu0 %v1114
  %v1285 = vpop.f32.mrf.mxu0
  %v1286 = vadd.f32 %v1242, %v1285
  %v1287 = vpop.f32.mrf.mxu0
  %v1288 = vadd.f32 %v1244, %v1287
  %1289 = vmatmul.bf16.gmra.mxu0 %v1117
  %v1290 = vpop.f32.mrf.mxu0
  %v1291 = vadd.f32 %v1247, %v1290
  %v1292 = vpop.f32.mrf.mxu0
  %v1293 = vadd.f32 %v1249, %v1292
  %1294 = vdwg.mxu0
  %1295 = vmatpush.bf16.msra.mxu0 %v458
  %1296 = vmatpush.bf16.msra.mxu0 %v456
  %1297 = vmatpush.bf16.msra.mxu0 %v454
  %1298 = vmatpush.bf16.msra.mxu0 %v452
  %1299 = vmatpush.bf16.msra.mxu0 %v450
  %1300 = vmatpush.bf16.msra.mxu0 %v448
  %1301 = vmatpush.bf16.msra.mxu0 %v446
  %1302 = vmatpush.bf16.msra.mxu0 %v444
  %1303 = vmatmul.bf16.gmra.mxu0 %v1049
  %v1304 = vpop.f32.mrf.mxu0
  %v1305 = vadd.f32 0.0, %v1304
  %v1306 = vpop.f32.mrf.mxu0
  %v1307 = vadd.f32 0.0, %v1306
  %1308 = vmatmul.bf16.gmra.mxu0 %v1053
  %v1309 = vpop.f32.mrf.mxu0
  %v1310 = vadd.f32 0.0, %v1309
  %v1311 = vpop.f32.mrf.mxu0
  %v1312 = vadd.f32 0.0, %v1311
  %1313 = vmatmul.bf16.gmra.mxu0 %v1057
  %v1314 = vpop.f32.mrf.mxu0
  %v1315 = vadd.f32 0.0, %v1314
  %v1316 = vpop.f32.mrf.mxu0
  %v1317 = vadd.f32 0.0, %v1316
  %1318 = vmatmul.bf16.gmra.mxu0 %v1061
  %v1319 = vpop.f32.mrf.mxu0
  %v1320 = vadd.f32 0.0, %v1319
  %v1321 = vpop.f32.mrf.mxu0
  %v1322 = vadd.f32 0.0, %v1321
  %1323 = vmatmul.bf16.gmra.mxu0 %v1065
  %v1324 = vpop.f32.mrf.mxu0
  %v1325 = vadd.f32 0.0, %v1324
  %v1326 = vpop.f32.mrf.mxu0
  %v1327 = vadd.f32 0.0, %v1326
  %1328 = vmatmul.bf16.gmra.mxu0 %v1069
  %v1329 = vpop.f32.mrf.mxu0
  %v1330 = vadd.f32 0.0, %v1329
  %v1331 = vpop.f32.mrf.mxu0
  %v1332 = vadd.f32 0.0, %v1331
  %1333 = vmatmul.bf16.gmra.mxu0 %v1073
  %v1334 = vpop.f32.mrf.mxu0
  %v1335 = vadd.f32 0.0, %v1334
  %v1336 = vpop.f32.mrf.mxu0
  %v1337 = vadd.f32 0.0, %v1336
  %1338 = vdwg.mxu0
  %1339 = vmatpush.bf16.msra.mxu0 %v474
  %1340 = vmatpush.bf16.msra.mxu0 %v472
  %1341 = vmatpush.bf16.msra.mxu0 %v470
  %1342 = vmatpush.bf16.msra.mxu0 %v468
  %1343 = vmatpush.bf16.msra.mxu0 %v466
  %1344 = vmatpush.bf16.msra.mxu0 %v464
  %1345 = vmatpush.bf16.msra.mxu0 %v462
  %1346 = vmatpush.bf16.msra.mxu0 %v460
  %1347 = vmatmul.bf16.gmra.mxu0 %v1050
  %v1348 = vpop.f32.mrf.mxu0
  %v1349 = vadd.f32 %v1305, %v1348
  %v1350 = vpop.f32.mrf.mxu0
  %v1351 = vadd.f32 %v1307, %v1350
  %1352 = vmatmul.bf16.gmra.mxu0 %v1054
  %v1353 = vpop.f32.mrf.mxu0
  %v1354 = vadd.f32 %v1310, %v1353
  %v1355 = vpop.f32.mrf.mxu0
  %v1356 = vadd.f32 %v1312, %v1355
  %1357 = vmatmul.bf16.gmra.mxu0 %v1058
  %v1358 = vpop.f32.mrf.mxu0
  %v1359 = vadd.f32 %v1315, %v1358
  %v1360 = vpop.f32.mrf.mxu0
  %v1361 = vadd.f32 %v1317, %v1360
  %1362 = vmatmul.bf16.gmra.mxu0 %v1062
  %v1363 = vpop.f32.mrf.mxu0
  %v1364 = vadd.f32 %v1320, %v1363
  %v1365 = vpop.f32.mrf.mxu0
  %v1366 = vadd.f32 %v1322, %v1365
  %1367 = vmatmul.bf16.gmra.mxu0 %v1066
  %v1368 = vpop.f32.mrf.mxu0
  %v1369 = vadd.f32 %v1325, %v1368
  %v1370 = vpop.f32.mrf.mxu0
  %v1371 = vadd.f32 %v1327, %v1370
  %1372 = vmatmul.bf16.gmra.mxu0 %v1070
  %v1373 = vpop.f32.mrf.mxu0
  %v1374 = vadd.f32 %v1330, %v1373
  %v1375 = vpop.f32.mrf.mxu0
  %v1376 = vadd.f32 %v1332, %v1375
  %1377 = vmatmul.bf16.gmra.mxu0 %v1074
  %v1378 = vpop.f32.mrf.mxu0
  %v1379 = vadd.f32 %v1335, %v1378
  %v1380 = vpop.f32.mrf.mxu0
  %v1381 = vadd.f32 %v1337, %v1380
  %1382 = vdwg.mxu0
  %1383 = vmatpush.bf16.msra.mxu0 %v490
  %1384 = vmatpush.bf16.msra.mxu0 %v488
  %1385 = vmatpush.bf16.msra.mxu0 %v486
  %1386 = vmatpush.bf16.msra.mxu0 %v484
  %1387 = vmatpush.bf16.msra.mxu0 %v482
  %1388 = vmatpush.bf16.msra.mxu0 %v480
  %1389 = vmatpush.bf16.msra.mxu0 %v478
  %1390 = vmatpush.bf16.msra.mxu0 %v476
  %1391 = vmatmul.bf16.gmra.mxu0 %v1051
  %v1392 = vpop.f32.mrf.mxu0
  %v1393 = vadd.f32 %v1349, %v1392
  %v1394 = vpop.f32.mrf.mxu0
  %v1395 = vadd.f32 %v1351, %v1394
  %1396 = vmatmul.bf16.gmra.mxu0 %v1055
  %v1397 = vpop.f32.mrf.mxu0
  %v1398 = vadd.f32 %v1354, %v1397
  %v1399 = vpop.f32.mrf.mxu0
  %v1400 = vadd.f32 %v1356, %v1399
  %1401 = vmatmul.bf16.gmra.mxu0 %v1059
  %v1402 = vpop.f32.mrf.mxu0
  %v1403 = vadd.f32 %v1359, %v1402
  %v1404 = vpop.f32.mrf.mxu0
  %v1405 = vadd.f32 %v1361, %v1404
  %1406 = vmatmul.bf16.gmra.mxu0 %v1063
  %v1407 = vpop.f32.mrf.mxu0
  %v1408 = vadd.f32 %v1364, %v1407
  %v1409 = vpop.f32.mrf.mxu0
  %v1410 = vadd.f32 %v1366, %v1409
  %1411 = vmatmul.bf16.gmra.mxu0 %v1067
  %v1412 = vpop.f32.mrf.mxu0
  %v1413 = vadd.f32 %v1369, %v1412
  %v1414 = vpop.f32.mrf.mxu0
  %v1415 = vadd.f32 %v1371, %v1414
  %1416 = vmatmul.bf16.gmra.mxu0 %v1071
  %v1417 = vpop.f32.mrf.mxu0
  %v1418 = vadd.f32 %v1374, %v1417
  %v1419 = vpop.f32.mrf.mxu0
  %v1420 = vadd.f32 %v1376, %v1419
  %1421 = vmatmul.bf16.gmra.mxu0 %v1075
  %v1422 = vpop.f32.mrf.mxu0
  %v1423 = vadd.f32 %v1379, %v1422
  %v1424 = vpop.f32.mrf.mxu0
  %v1425 = vadd.f32 %v1381, %v1424
  %1426 = vdwg.mxu0
  %1427 = vmatpush.bf16.msra.mxu0 0
  %1428 = vmatpush.bf16.msra.mxu0 0
  %1429 = vmatpush.bf16.msra.mxu0 %v502
  %1430 = vmatpush.bf16.msra.mxu0 %v500
  %1431 = vmatpush.bf16.msra.mxu0 %v498
  %1432 = vmatpush.bf16.msra.mxu0 %v496
  %1433 = vmatpush.bf16.msra.mxu0 %v494
  %1434 = vmatpush.bf16.msra.mxu0 %v492
  %1435 = vmatmul.bf16.gmra.mxu0 %v1099
  %v1436 = vpop.f32.mrf.mxu0
  %v1437 = vadd.f32 %v1393, %v1436
  %v1438 = vpop.f32.mrf.mxu0
  %v1439 = vadd.f32 %v1395, %v1438
  %1440 = vmatmul.bf16.gmra.mxu0 %v1102
  %v1441 = vpop.f32.mrf.mxu0
  %v1442 = vadd.f32 %v1398, %v1441
  %v1443 = vpop.f32.mrf.mxu0
  %v1444 = vadd.f32 %v1400, %v1443
  %1445 = vmatmul.bf16.gmra.mxu0 %v1105
  %v1446 = vpop.f32.mrf.mxu0
  %v1447 = vadd.f32 %v1403, %v1446
  %v1448 = vpop.f32.mrf.mxu0
  %v1449 = vadd.f32 %v1405, %v1448
  %1450 = vmatmul.bf16.gmra.mxu0 %v1108
  %v1451 = vpop.f32.mrf.mxu0
  %v1452 = vadd.f32 %v1408, %v1451
  %v1453 = vpop.f32.mrf.mxu0
  %v1454 = vadd.f32 %v1410, %v1453
  %1455 = vmatmul.bf16.gmra.mxu0 %v1111
  %v1456 = vpop.f32.mrf.mxu0
  %v1457 = vadd.f32 %v1413, %v1456
  %v1458 = vpop.f32.mrf.mxu0
  %v1459 = vadd.f32 %v1415, %v1458
  %1460 = vmatmul.bf16.gmra.mxu0 %v1114
  %v1461 = vpop.f32.mrf.mxu0
  %v1462 = vadd.f32 %v1418, %v1461
  %v1463 = vpop.f32.mrf.mxu0
  %v1464 = vadd.f32 %v1420, %v1463
  %1465 = vmatmul.bf16.gmra.mxu0 %v1117
  %v1466 = vpop.f32.mrf.mxu0
  %v1467 = vadd.f32 %v1423, %v1466
  %v1468 = vpop.f32.mrf.mxu0
  %v1469 = vadd.f32 %v1425, %v1468
  %1470 = vdwg.mxu0
  %v1471 = vmax.f32 %v727, %v903
  %v1472 = vmax.f32 %v729, %v905
  %v1473 = vmax.f32 %v732, %v908
  %v1474 = vmax.f32 %v734, %v910
  %v1475 = vmax.f32 %v737, %v913
  %v1476 = vmax.f32 %v739, %v915
  %v1477 = vmax.f32 %v742, %v918
  %v1478 = vmax.f32 %v744, %v920
  %v1479 = vmax.f32 %v747, %v923
  %v1480 = vmax.f32 %v749, %v925
  %v1481 = vmax.f32 %v752, %v928
  %v1482 = vmax.f32 %v754, %v930
  %v1483 = vmax.f32 %v757, %v933
  %v1484 = vmax.f32 %v759, %v935
  %v1485 = vmax.f32 %v1261, %v1437
  %v1486 = vmax.f32 %v1263, %v1439
  %v1487 = vmax.f32 %v1266, %v1442
  %v1488 = vmax.f32 %v1268, %v1444
  %v1489 = vmax.f32 %v1271, %v1447
  %v1490 = vmax.f32 %v1273, %v1449
  %v1491 = vmax.f32 %v1276, %v1452
  %v1492 = vmax.f32 %v1278, %v1454
  %v1493 = vmax.f32 %v1281, %v1457
  %v1494 = vmax.f32 %v1283, %v1459
  %v1495 = vmax.f32 %v1286, %v1462
  %v1496 = vmax.f32 %v1288, %v1464
  %v1497 = vmax.f32 %v1291, %v1467
  %v1498 = vmax.f32 %v1293, %v1469
  %v1499 = vmax.f32 %v1471, %v1485
  %v1500 = vmax.f32 %v1472, %v1486
  %v1501 = vmax.f32 %v1473, %v1487
  %v1502 = vmax.f32 %v1474, %v1488
  %v1503 = vmax.f32 %v1475, %v1489
  %v1504 = vmax.f32 %v1476, %v1490
  %v1505 = vmax.f32 %v1477, %v1491
  %v1506 = vmax.f32 %v1478, %v1492
  %v1507 = vmax.f32 %v1479, %v1493
  %v1508 = vmax.f32 %v1480, %v1494
  %v1509 = vmax.f32 %v1481, %v1495
  %v1510 = vmax.f32 %v1482, %v1496
  %v1511 = vmax.f32 %v1483, %v1497
  %v1512 = vmax.f32 %v1484, %v1498
  %v1513 = vld [vmem:[%s3] sm:$0x1]
  %v1515 = vperm.slane %v1513, 0
  %v1517 = vadd.f32 %v1499, %v1515
  %v1518 = vadd.f32 %v1500, %v1515
  %v1519 = vadd.f32 %v1501, %v1515
  %v1520 = vadd.f32 %v1502, %v1515
  %v1521 = vadd.f32 %v1503, %v1515
  %v1522 = vadd.f32 %v1504, %v1515
  %v1523 = vadd.f32 %v1505, %v1515
  %v1524 = vadd.f32 %v1506, %v1515
  %v1525 = vadd.f32 %v1507, %v1515
  %v1526 = vadd.f32 %v1508, %v1515
  %v1527 = vadd.f32 %v1509, %v1515
  %v1528 = vadd.f32 %v1510, %v1515
  %v1529 = vadd.f32 %v1511, %v1515
  %v1530 = vadd.f32 %v1512, %v1515
  %v1531 = vmax.f32 %v1517, 0.0
  %v1532 = vmax.f32 %v1518, 0.0
  %v1533 = vmax.f32 %v1519, 0.0
  %v1534 = vmax.f32 %v1520, 0.0
  %v1535 = vmax.f32 %v1521, 0.0
  %v1536 = vmax.f32 %v1522, 0.0
  %v1537 = vmax.f32 %v1523, 0.0
  %v1538 = vmax.f32 %v1524, 0.0
  %v1539 = vmax.f32 %v1525, 0.0
  %v1540 = vmax.f32 %v1526, 0.0
  %v1541 = vmax.f32 %v1527, 0.0
  %v1542 = vmax.f32 %v1528, 0.0
  %v1543 = vmax.f32 %v1529, 0.0
  %v1544 = vmax.f32 %v1530, 0.0
  %1545 = vst [vmem:[#allocation2] sm:$0xff] %v1531
  %1546 = vst [vmem:[#allocation2 + $0x8] sm:$0xff] %v1532
  %1547 = vst [vmem:[#allocation2 + $0x10] sm:$0xff] %v1533
  %1548 = vst [vmem:[#allocation2 + $0x18] sm:$0xff] %v1534
  %1549 = vst [vmem:[#allocation2 + $0x20] sm:$0xff] %v1535
  %1550 = vst [vmem:[#allocation2 + $0x28] sm:$0xff] %v1536
  %1551 = vst [vmem:[#allocation2 + $0x30] sm:$0xff] %v1537
  %1552 = vst [vmem:[#allocation2 + $0x38] sm:$0xff] %v1538
  %1553 = vst [vmem:[#allocation2 + $0x40] sm:$0xff] %v1539
  %1554 = vst [vmem:[#allocation2 + $0x48] sm:$0xff] %v1540
  %1555 = vst [vmem:[#allocation2 + $0x50] sm:$0xff] %v1541
  %1556 = vst [vmem:[#allocation2 + $0x58] sm:$0xff] %v1542
  %1557 = vst [vmem:[#allocation2 + $0x60] sm:$0xff] %v1543
  %1558 = vst [vmem:[#allocation2 + $0x68] sm:$0xff] %v1544
  %v1559 = vld [vmem:[%s4] sm:$0xff]
  %v1560 = vld [vmem:[%s4 + $0x8] sm:$0xff]
  %v1561 = vld [vmem:[%s4 + $0x10] sm:$0xff]
  %v1562 = vld [vmem:[%s4 + $0x18] sm:$0xff]
  %v1563 = vld [vmem:[%s4 + $0x20] sm:$0xff]
  %v1564 = vld [vmem:[%s4 + $0x28] sm:$0xff]
  %v1565 = vld [vmem:[%s4 + $0x30] sm:$0xff]
  %v1566 = vld [vmem:[%s4 + $0x38] sm:$0xff]
  %v1567 = vld [vmem:[%s4 + $0x40] sm:$0xff]
  %v1568 = vld [vmem:[%s4 + $0x48] sm:$0xff]
  %v1569 = vld [vmem:[%s4 + $0x50] sm:$0xff]
  %v1570 = vld [vmem:[%s4 + $0x58] sm:$0xff]
  %v1571 = vld [vmem:[%s4 + $0x60] sm:$0xff]
  %v1572 = vld [vmem:[%s4 + $0x68] sm:$0xff]
  %v1573 = vld [vmem:[%s4 + $0x70] sm:$0xff]
  %v1574 = vld [vmem:[%s4 + $0x78] sm:$0xff]
  %v1575 = vld [vmem:[#allocation2] ss:$2 sm:$0xff]
  %s1576 = scalar_lea.vmem [#allocation2], 16
  %v1577 = vld [vmem:[%s1576] ss:$2 sm:$0xff]
  %s1578 = scalar_lea.vmem [#allocation2], 32
  %v1579 = vld [vmem:[%s1578] ss:$2 sm:$0xff]
  %s1580 = scalar_lea.vmem [#allocation2], 48
  %v1581 = vld [vmem:[%s1580] ss:$2 sm:$0xff]
  %s1582 = scalar_lea.vmem [#allocation2], 64
  %v1583 = vld [vmem:[%s1582] ss:$2 sm:$0xff]
  %s1584 = scalar_lea.vmem [#allocation2], 80
  %v1585 = vld [vmem:[%s1584] ss:$2 sm:$0xff]
  %s1586 = scalar_lea.vmem [#allocation2], 96
  %v1587 = vld [vmem:[%s1586] ss:$2 sm:$0x3f]
  %v1588 = vpack.c.bf16 %v1577, %v1575
  %v1589 = vpack.c.bf16 %v1581, %v1579
  %v1590 = vpack.c.bf16 %v1585, %v1583
  %v1591 = vpack.c.bf16 %v1587, %v1587
  %s1592 = scalar_lea.vmem [#allocation2], 1
  %v1593 = vld [vmem:[%s1592] ss:$2 sm:$0xff]
  %s1594 = scalar_lea.vmem [#allocation2], 17
  %v1595 = vld [vmem:[%s1594] ss:$2 sm:$0xff]
  %s1596 = scalar_lea.vmem [#allocation2], 33
  %v1597 = vld [vmem:[%s1596] ss:$2 sm:$0xff]
  %s1598 = scalar_lea.vmem [#allocation2], 49
  %v1599 = vld [vmem:[%s1598] ss:$2 sm:$0xff]
  %s1600 = scalar_lea.vmem [#allocation2], 65
  %v1601 = vld [vmem:[%s1600] ss:$2 sm:$0xff]
  %s1602 = scalar_lea.vmem [#allocation2], 81
  %v1603 = vld [vmem:[%s1602] ss:$2 sm:$0xff]
  %s1604 = scalar_lea.vmem [#allocation2], 97
  %v1605 = vld [vmem:[%s1604] ss:$2 sm:$0x3f]
  %v1606 = vpack.c.bf16 %v1595, %v1593
  %v1607 = vpack.c.bf16 %v1599, %v1597
  %v1608 = vpack.c.bf16 %v1603, %v1601
  %v1609 = vpack.c.bf16 %v1605, %v1605
  %s1610 = scalar_lea.vmem %s4, 128
  %v1611 = vld [vmem:[%s1610] sm:$0xff]
  %v1612 = vld [vmem:[%s1610 + $0x8] sm:$0xff]
  %v1613 = vld [vmem:[%s1610 + $0x10] sm:$0xff]
  %v1614 = vld [vmem:[%s1610 + $0x18] sm:$0xff]
  %v1615 = vld [vmem:[%s1610 + $0x20] sm:$0xff]
  %v1616 = vld [vmem:[%s1610 + $0x28] sm:$0xff]
  %v1617 = vld [vmem:[%s1610 + $0x30] sm:$0xff]
  %v1618 = vld [vmem:[%s1610 + $0x38] sm:$0xff]
  %v1619 = vld [vmem:[%s1610 + $0x40] sm:$0xff]
  %v1620 = vld [vmem:[%s1610 + $0x48] sm:$0xff]
  %v1621 = vld [vmem:[%s1610 + $0x50] sm:$0xff]
  %v1622 = vld [vmem:[%s1610 + $0x58] sm:$0xff]
  %v1623 = vld [vmem:[%s1610 + $0x60] sm:$0xff]
  %v1624 = vld [vmem:[%s1610 + $0x68] sm:$0xff]
  %v1625 = vld [vmem:[%s1610 + $0x70] sm:$0xff]
  %v1626 = vld [vmem:[%s1610 + $0x78] sm:$0xff]
  %s1627 = scalar_lea.vmem [#allocation2], 2
  %v1628 = vld [vmem:[%s1627] ss:$2 sm:$0xff]
  %s1629 = scalar_lea.vmem [#allocation2], 18
  %v1630 = vld [vmem:[%s1629] ss:$2 sm:$0xff]
  %s1631 = scalar_lea.vmem [#allocation2], 34
  %v1632 = vld [vmem:[%s1631] ss:$2 sm:$0xff]
  %s1633 = scalar_lea.vmem [#allocation2], 50
  %v1634 = vld [vmem:[%s1633] ss:$2 sm:$0xff]
  %s1635 = scalar_lea.vmem [#allocation2], 66
  %v1636 = vld [vmem:[%s1635] ss:$2 sm:$0xff]
  %s1637 = scalar_lea.vmem [#allocation2], 82
  %v1638 = vld [vmem:[%s1637] ss:$2 sm:$0xff]
  %s1639 = scalar_lea.vmem [#allocation2], 98
  %v1640 = vld [vmem:[%s1639] ss:$2 sm:$0x3f]
  %v1641 = vpack.c.bf16 %v1630, %v1628
  %v1642 = vpack.c.bf16 %v1634, %v1632
  %v1643 = vpack.c.bf16 %v1638, %v1636
  %v1644 = vpack.c.bf16 %v1640, %v1640
  %v1661 = vunpack.c.l.b16 %v1611
  %v1662 = vunpack.c.h.b16 %v1611
  %v1663 = vunpack.c.l.b16 %v1612
  %v1664 = vunpack.c.h.b16 %v1612
  %v1665 = vunpack.c.l.b16 %v1613
  %v1666 = vunpack.c.h.b16 %v1613
  %v1667 = vunpack.c.l.b16 %v1614
  %v1668 = vunpack.c.h.b16 %v1614
  %v1669 = vunpack.c.l.b16 %v1615
  %v1670 = vunpack.c.h.b16 %v1615
  %v1671 = vunpack.c.l.b16 %v1616
  %v1672 = vunpack.c.h.b16 %v1616
  %v1673 = vunpack.c.l.b16 %v1617
  %v1674 = vunpack.c.h.b16 %v1617
  %v1675 = vunpack.c.l.b16 %v1618
  %v1676 = vunpack.c.h.b16 %v1618
  %v1677 = vunpack.c.l.b16 %v1619
  %v1678 = vunpack.c.h.b16 %v1619
  %v1679 = vunpack.c.l.b16 %v1620
  %v1680 = vunpack.c.h.b16 %v1620
  %v1681 = vunpack.c.l.b16 %v1621
  %v1682 = vunpack.c.h.b16 %v1621
  %v1683 = vunpack.c.l.b16 %v1622
  %v1684 = vunpack.c.h.b16 %v1622
  %v1685 = vunpack.c.l.b16 %v1623
  %v1686 = vunpack.c.h.b16 %v1623
  %v1687 = vunpack.c.l.b16 %v1624
  %v1688 = vunpack.c.h.b16 %v1624
  %v1689 = vunpack.c.l.b16 %v1625
  %v1690 = vunpack.c.h.b16 %v1625
  %v1691 = vunpack.c.l.b16 %v1626
  %v1692 = vunpack.c.h.b16 %v1626
  %v1693 = vpack.c.b16 %v1663, %v1661
  %v1694 = vpack.c.b16 %v1664, %v1662
  %v1695 = vpack.c.b16 %v1667, %v1665
  %v1696 = vpack.c.b16 %v1668, %v1666
  %v1697 = vpack.c.b16 %v1671, %v1669
  %v1698 = vpack.c.b16 %v1672, %v1670
  %v1699 = vpack.c.b16 %v1675, %v1673
  %v1700 = vpack.c.b16 %v1676, %v1674
  %v1701 = vpack.c.b16 %v1679, %v1677
  %v1702 = vpack.c.b16 %v1680, %v1678
  %v1703 = vpack.c.b16 %v1683, %v1681
  %v1704 = vpack.c.b16 %v1684, %v1682
  %v1705 = vpack.c.b16 %v1687, %v1685
  %v1706 = vpack.c.b16 %v1688, %v1686
  %v1707 = vpack.c.b16 %v1691, %v1689
  %v1708 = vpack.c.b16 %v1692, %v1690
  %1725 = vmatpush.bf16.msra.mxu0 %v1707
  %1726 = vmatpush.bf16.msra.mxu0 %v1705
  %1727 = vmatpush.bf16.msra.mxu0 %v1703
  %1728 = vmatpush.bf16.msra.mxu0 %v1701
  %1729 = vmatpush.bf16.msra.mxu0 %v1699
  %1730 = vmatpush.bf16.msra.mxu0 %v1697
  %1731 = vmatpush.bf16.msra.mxu0 %v1695
  %1732 = vmatpush.bf16.msra.mxu0 %v1693
  %1733 = vmatmul.bf16.gmra.mxu0 %v1606
  %v1734 = vpop.f32.mrf.mxu0
  %v1735 = vadd.f32 0.0, %v1734
  %v1736 = vpop.f32.mrf.mxu0
  %v1737 = vadd.f32 0.0, %v1736
  %1738 = vmatmul.bf16.gmra.mxu0 %v1607
  %v1739 = vpop.f32.mrf.mxu0
  %v1740 = vadd.f32 0.0, %v1739
  %v1741 = vpop.f32.mrf.mxu0
  %v1742 = vadd.f32 0.0, %v1741
  %1743 = vmatmul.bf16.gmra.mxu0 %v1608
  %v1744 = vpop.f32.mrf.mxu0
  %v1745 = vadd.f32 0.0, %v1744
  %v1746 = vpop.f32.mrf.mxu0
  %v1747 = vadd.f32 0.0, %v1746
  %1748 = vmatmul.bf16.gmra.mxu0 %v1609
  %v1749 = vpop.f32.mrf.mxu0
  %v1750 = vadd.f32 0.0, %v1749
  %v1751 = vpop.f32.mrf.mxu0
  %1752 = vdwg.mxu0
  %1753 = vmatpush.bf16.msra.mxu0 %v1708
  %1754 = vmatpush.bf16.msra.mxu0 %v1706
  %1755 = vmatpush.bf16.msra.mxu0 %v1704
  %1756 = vmatpush.bf16.msra.mxu0 %v1702
  %1757 = vmatpush.bf16.msra.mxu0 %v1700
  %1758 = vmatpush.bf16.msra.mxu0 %v1698
  %1759 = vmatpush.bf16.msra.mxu0 %v1696
  %1760 = vmatpush.bf16.msra.mxu0 %v1694
  %1761 = vmatmul.bf16.gmra.mxu0 %v1606
  %v1762 = vpop.f32.mrf.mxu0
  %v1763 = vadd.f32 0.0, %v1762
  %v1764 = vpop.f32.mrf.mxu0
  %v1765 = vadd.f32 0.0, %v1764
  %1766 = vmatmul.bf16.gmra.mxu0 %v1607
  %v1767 = vpop.f32.mrf.mxu0
  %v1768 = vadd.f32 0.0, %v1767
  %v1769 = vpop.f32.mrf.mxu0
  %v1770 = vadd.f32 0.0, %v1769
  %1771 = vmatmul.bf16.gmra.mxu0 %v1608
  %v1772 = vpop.f32.mrf.mxu0
  %v1773 = vadd.f32 0.0, %v1772
  %v1774 = vpop.f32.mrf.mxu0
  %v1775 = vadd.f32 0.0, %v1774
  %1776 = vmatmul.bf16.gmra.mxu0 %v1609
  %v1777 = vpop.f32.mrf.mxu0
  %v1778 = vadd.f32 0.0, %v1777
  %v1779 = vpop.f32.mrf.mxu0
  %1780 = vdwg.mxu0
  %v1797 = vunpack.c.l.b16 %v1559
  %v1798 = vunpack.c.h.b16 %v1559
  %v1799 = vunpack.c.l.b16 %v1560
  %v1800 = vunpack.c.h.b16 %v1560
  %v1801 = vunpack.c.l.b16 %v1561
  %v1802 = vunpack.c.h.b16 %v1561
  %v1803 = vunpack.c.l.b16 %v1562
  %v1804 = vunpack.c.h.b16 %v1562
  %v1805 = vunpack.c.l.b16 %v1563
  %v1806 = vunpack.c.h.b16 %v1563
  %v1807 = vunpack.c.l.b16 %v1564
  %v1808 = vunpack.c.h.b16 %v1564
  %v1809 = vunpack.c.l.b16 %v1565
  %v1810 = vunpack.c.h.b16 %v1565
  %v1811 = vunpack.c.l.b16 %v1566
  %v1812 = vunpack.c.h.b16 %v1566
  %v1813 = vunpack.c.l.b16 %v1567
  %v1814 = vunpack.c.h.b16 %v1567
  %v1815 = vunpack.c.l.b16 %v1568
  %v1816 = vunpack.c.h.b16 %v1568
  %v1817 = vunpack.c.l.b16 %v1569
  %v1818 = vunpack.c.h.b16 %v1569
  %v1819 = vunpack.c.l.b16 %v1570
  %v1820 = vunpack.c.h.b16 %v1570
  %v1821 = vunpack.c.l.b16 %v1571
  %v1822 = vunpack.c.h.b16 %v1571
  %v1823 = vunpack.c.l.b16 %v1572
  %v1824 = vunpack.c.h.b16 %v1572
  %v1825 = vunpack.c.l.b16 %v1573
  %v1826 = vunpack.c.h.b16 %v1573
  %v1827 = vunpack.c.l.b16 %v1574
  %v1828 = vunpack.c.h.b16 %v1574
  %v1829 = vpack.c.b16 %v1799, %v1797
  %v1830 = vpack.c.b16 %v1800, %v1798
  %v1831 = vpack.c.b16 %v1803, %v1801
  %v1832 = vpack.c.b16 %v1804, %v1802
  %v1833 = vpack.c.b16 %v1807, %v1805
  %v1834 = vpack.c.b16 %v1808, %v1806
  %v1835 = vpack.c.b16 %v1811, %v1809
  %v1836 = vpack.c.b16 %v1812, %v1810
  %v1837 = vpack.c.b16 %v1815, %v1813
  %v1838 = vpack.c.b16 %v1816, %v1814
  %v1839 = vpack.c.b16 %v1819, %v1817
  %v1840 = vpack.c.b16 %v1820, %v1818
  %v1841 = vpack.c.b16 %v1823, %v1821
  %v1842 = vpack.c.b16 %v1824, %v1822
  %v1843 = vpack.c.b16 %v1827, %v1825
  %v1844 = vpack.c.b16 %v1828, %v1826
  %1861 = vmatpush.bf16.msra.mxu0 %v1843
  %1862 = vmatpush.bf16.msra.mxu0 %v1841
  %1863 = vmatpush.bf16.msra.mxu0 %v1839
  %1864 = vmatpush.bf16.msra.mxu0 %v1837
  %1865 = vmatpush.bf16.msra.mxu0 %v1835
  %1866 = vmatpush.bf16.msra.mxu0 %v1833
  %1867 = vmatpush.bf16.msra.mxu0 %v1831
  %1868 = vmatpush.bf16.msra.mxu0 %v1829
  %1869 = vmatmul.bf16.gmra.mxu0 %v1588
  %v1870 = vpop.f32.mrf.mxu0
  %v1871 = vadd.f32 %v1735, %v1870
  %v1872 = vpop.f32.mrf.mxu0
  %v1873 = vadd.f32 %v1737, %v1872
  %1874 = vmatmul.bf16.gmra.mxu0 %v1589
  %v1875 = vpop.f32.mrf.mxu0
  %v1876 = vadd.f32 %v1740, %v1875
  %v1877 = vpop.f32.mrf.mxu0
  %v1878 = vadd.f32 %v1742, %v1877
  %1879 = vmatmul.bf16.gmra.mxu0 %v1590
  %v1880 = vpop.f32.mrf.mxu0
  %v1881 = vadd.f32 %v1745, %v1880
  %v1882 = vpop.f32.mrf.mxu0
  %v1883 = vadd.f32 %v1747, %v1882
  %1884 = vmatmul.bf16.gmra.mxu0 %v1591
  %v1885 = vpop.f32.mrf.mxu0
  %v1886 = vadd.f32 %v1750, %v1885
  %v1887 = vpop.f32.mrf.mxu0
  %1888 = vdwg.mxu0
  %1889 = vmatpush.bf16.msra.mxu0 %v1844
  %1890 = vmatpush.bf16.msra.mxu0 %v1842
  %1891 = vmatpush.bf16.msra.mxu0 %v1840
  %1892 = vmatpush.bf16.msra.mxu0 %v1838
  %1893 = vmatpush.bf16.msra.mxu0 %v1836
  %1894 = vmatpush.bf16.msra.mxu0 %v1834
  %1895 = vmatpush.bf16.msra.mxu0 %v1832
  %1896 = vmatpush.bf16.msra.mxu0 %v1830
  %1897 = vmatmul.bf16.gmra.mxu0 %v1588
  %v1898 = vpop.f32.mrf.mxu0
  %v1899 = vadd.f32 %v1763, %v1898
  %v1900 = vpop.f32.mrf.mxu0
  %v1901 = vadd.f32 %v1765, %v1900
  %1902 = vmatmul.bf16.gmra.mxu0 %v1589
  %v1903 = vpop.f32.mrf.mxu0
  %v1904 = vadd.f32 %v1768, %v1903
  %v1905 = vpop.f32.mrf.mxu0
  %v1906 = vadd.f32 %v1770, %v1905
  %1907 = vmatmul.bf16.gmra.mxu0 %v1590
  %v1908 = vpop.f32.mrf.mxu0
  %v1909 = vadd.f32 %v1773, %v1908
  %v1910 = vpop.f32.mrf.mxu0
  %v1911 = vadd.f32 %v1775, %v1910
  %1912 = vmatmul.bf16.gmra.mxu0 %v1591
  %v1913 = vpop.f32.mrf.mxu0
  %v1914 = vadd.f32 %v1778, %v1913
  %v1915 = vpop.f32.mrf.mxu0
  %1916 = vdwg.mxu0
  %1917 = vmatpush.bf16.msra.mxu0 %v1707
  %1918 = vmatpush.bf16.msra.mxu0 %v1705
  %1919 = vmatpush.bf16.msra.mxu0 %v1703
  %1920 = vmatpush.bf16.msra.mxu0 %v1701
  %1921 = vmatpush.bf16.msra.mxu0 %v1699
  %1922 = vmatpush.bf16.msra.mxu0 %v1697
  %1923 = vmatpush.bf16.msra.mxu0 %v1695
  %1924 = vmatpush.bf16.msra.mxu0 %v1693
  %1925 = vmatmul.bf16.gmra.mxu0 %v1641
  %v1926 = vpop.f32.mrf.mxu0
  %v1927 = vadd.f32 0.0, %v1926
  %v1928 = vpop.f32.mrf.mxu0
  %v1929 = vadd.f32 0.0, %v1928
  %1930 = vmatmul.bf16.gmra.mxu0 %v1642
  %v1931 = vpop.f32.mrf.mxu0
  %v1932 = vadd.f32 0.0, %v1931
  %v1933 = vpop.f32.mrf.mxu0
  %v1934 = vadd.f32 0.0, %v1933
  %1935 = vmatmul.bf16.gmra.mxu0 %v1643
  %v1936 = vpop.f32.mrf.mxu0
  %v1937 = vadd.f32 0.0, %v1936
  %v1938 = vpop.f32.mrf.mxu0
  %v1939 = vadd.f32 0.0, %v1938
  %1940 = vmatmul.bf16.gmra.mxu0 %v1644
  %v1941 = vpop.f32.mrf.mxu0
  %v1942 = vadd.f32 0.0, %v1941
  %v1943 = vpop.f32.mrf.mxu0
  %1944 = vdwg.mxu0
  %1945 = vmatpush.bf16.msra.mxu0 %v1708
  %1946 = vmatpush.bf16.msra.mxu0 %v1706
  %1947 = vmatpush.bf16.msra.mxu0 %v1704
  %1948 = vmatpush.bf16.msra.mxu0 %v1702
  %1949 = vmatpush.bf16.msra.mxu0 %v1700
  %1950 = vmatpush.bf16.msra.mxu0 %v1698
  %1951 = vmatpush.bf16.msra.mxu0 %v1696
  %1952 = vmatpush.bf16.msra.mxu0 %v1694
  %1953 = vmatmul.bf16.gmra.mxu0 %v1641
  %v1954 = vpop.f32.mrf.mxu0
  %v1955 = vadd.f32 0.0, %v1954
  %v1956 = vpop.f32.mrf.mxu0
  %v1957 = vadd.f32 0.0, %v1956
  %1958 = vmatmul.bf16.gmra.mxu0 %v1642
  %v1959 = vpop.f32.mrf.mxu0
  %v1960 = vadd.f32 0.0, %v1959
  %v1961 = vpop.f32.mrf.mxu0
  %v1962 = vadd.f32 0.0, %v1961
  %1963 = vmatmul.bf16.gmra.mxu0 %v1643
  %v1964 = vpop.f32.mrf.mxu0
  %v1965 = vadd.f32 0.0, %v1964
  %v1966 = vpop.f32.mrf.mxu0
  %v1967 = vadd.f32 0.0, %v1966
  %1968 = vmatmul.bf16.gmra.mxu0 %v1644
  %v1969 = vpop.f32.mrf.mxu0
  %v1970 = vadd.f32 0.0, %v1969
  %v1971 = vpop.f32.mrf.mxu0
  %1972 = vdwg.mxu0
  %1973 = vmatpush.bf16.msra.mxu0 %v1843
  %1974 = vmatpush.bf16.msra.mxu0 %v1841
  %1975 = vmatpush.bf16.msra.mxu0 %v1839
  %1976 = vmatpush.bf16.msra.mxu0 %v1837
  %1977 = vmatpush.bf16.msra.mxu0 %v1835
  %1978 = vmatpush.bf16.msra.mxu0 %v1833
  %1979 = vmatpush.bf16.msra.mxu0 %v1831
  %1980 = vmatpush.bf16.msra.mxu0 %v1829
  %1981 = vmatmul.bf16.gmra.mxu0 %v1606
  %v1982 = vpop.f32.mrf.mxu0
  %v1983 = vadd.f32 %v1927, %v1982
  %v1984 = vpop.f32.mrf.mxu0
  %v1985 = vadd.f32 %v1929, %v1984
  %1986 = vmatmul.bf16.gmra.mxu0 %v1607
  %v1987 = vpop.f32.mrf.mxu0
  %v1988 = vadd.f32 %v1932, %v1987
  %v1989 = vpop.f32.mrf.mxu0
  %v1990 = vadd.f32 %v1934, %v1989
  %1991 = vmatmul.bf16.gmra.mxu0 %v1608
  %v1992 = vpop.f32.mrf.mxu0
  %v1993 = vadd.f32 %v1937, %v1992
  %v1994 = vpop.f32.mrf.mxu0
  %v1995 = vadd.f32 %v1939, %v1994
  %1996 = vmatmul.bf16.gmra.mxu0 %v1609
  %v1997 = vpop.f32.mrf.mxu0
  %v1998 = vadd.f32 %v1942, %v1997
  %v1999 = vpop.f32.mrf.mxu0
  %2000 = vdwg.mxu0
  %2001 = vmatpush.bf16.msra.mxu0 %v1844
  %2002 = vmatpush.bf16.msra.mxu0 %v1842
  %2003 = vmatpush.bf16.msra.mxu0 %v1840
  %2004 = vmatpush.bf16.msra.mxu0 %v1838
  %2005 = vmatpush.bf16.msra.mxu0 %v1836
  %2006 = vmatpush.bf16.msra.mxu0 %v1834
  %2007 = vmatpush.bf16.msra.mxu0 %v1832
  %2008 = vmatpush.bf16.msra.mxu0 %v1830
  %2009 = vmatmul.bf16.gmra.mxu0 %v1606
  %v2010 = vpop.f32.mrf.mxu0
  %v2011 = vadd.f32 %v1955, %v2010
  %v2012 = vpop.f32.mrf.mxu0
  %v2013 = vadd.f32 %v1957, %v2012
  %2014 = vmatmul.bf16.gmra.mxu0 %v1607
  %v2015 = vpop.f32.mrf.mxu0
  %v2016 = vadd.f32 %v1960, %v2015
  %v2017 = vpop.f32.mrf.mxu0
  %v2018 = vadd.f32 %v1962, %v2017
  %2019 = vmatmul.bf16.gmra.mxu0 %v1608
  %v2020 = vpop.f32.mrf.mxu0
  %v2021 = vadd.f32 %v1965, %v2020
  %v2022 = vpop.f32.mrf.mxu0
  %v2023 = vadd.f32 %v1967, %v2022
  %2024 = vmatmul.bf16.gmra.mxu0 %v1609
  %v2025 = vpop.f32.mrf.mxu0
  %v2026 = vadd.f32 %v1970, %v2025
  %v2027 = vpop.f32.mrf.mxu0
  %2028 = vdwg.mxu0
  %s2029 = scalar_lea.vmem %s4, 256
  %v2030 = vld [vmem:[%s2029] sm:$0xff]
  %v2031 = vld [vmem:[%s2029 + $0x8] sm:$0xff]
  %v2032 = vld [vmem:[%s2029 + $0x10] sm:$0xff]
  %v2033 = vld [vmem:[%s2029 + $0x18] sm:$0xff]
  %v2034 = vld [vmem:[%s2029 + $0x20] sm:$0xff]
  %v2035 = vld [vmem:[%s2029 + $0x28] sm:$0xff]
  %v2036 = vld [vmem:[%s2029 + $0x30] sm:$0xff]
  %v2037 = vld [vmem:[%s2029 + $0x38] sm:$0xff]
  %v2038 = vld [vmem:[%s2029 + $0x40] sm:$0xff]
  %v2039 = vld [vmem:[%s2029 + $0x48] sm:$0xff]
  %v2040 = vld [vmem:[%s2029 + $0x50] sm:$0xff]
  %v2041 = vld [vmem:[%s2029 + $0x58] sm:$0xff]
  %v2042 = vld [vmem:[%s2029 + $0x60] sm:$0xff]
  %v2043 = vld [vmem:[%s2029 + $0x68] sm:$0xff]
  %v2044 = vld [vmem:[%s2029 + $0x70] sm:$0xff]
  %v2045 = vld [vmem:[%s2029 + $0x78] sm:$0xff]
  %s2046 = scalar_lea.vmem [#allocation2], 3
  %v2047 = vld [vmem:[%s2046] ss:$2 sm:$0xff]
  %s2048 = scalar_lea.vmem [#allocation2], 19
  %v2049 = vld [vmem:[%s2048] ss:$2 sm:$0xff]
  %s2050 = scalar_lea.vmem [#allocation2], 35
  %v2051 = vld [vmem:[%s2050] ss:$2 sm:$0xff]
  %s2052 = scalar_lea.vmem [#allocation2], 51
  %v2053 = vld [vmem:[%s2052] ss:$2 sm:$0xff]
  %s2054 = scalar_lea.vmem [#allocation2], 67
  %v2055 = vld [vmem:[%s2054] ss:$2 sm:$0xff]
  %s2056 = scalar_lea.vmem [#allocation2], 83
  %v2057 = vld [vmem:[%s2056] ss:$2 sm:$0xff]
  %s2058 = scalar_lea.vmem [#allocation2], 99
  %v2059 = vld [vmem:[%s2058] ss:$2 sm:$0x3f]
  %v2060 = vpack.c.bf16 %v2049, %v2047
  %v2061 = vpack.c.bf16 %v2053, %v2051
  %v2062 = vpack.c.bf16 %v2057, %v2055
  %v2063 = vpack.c.bf16 %v2059, %v2059
  %v2080 = vunpack.c.l.b16 %v2030
  %v2081 = vunpack.c.h.b16 %v2030
  %v2082 = vunpack.c.l.b16 %v2031
  %v2083 = vunpack.c.h.b16 %v2031
  %v2084 = vunpack.c.l.b16 %v2032
  %v2085 = vunpack.c.h.b16 %v2032
  %v2086 = vunpack.c.l.b16 %v2033
  %v2087 = vunpack.c.h.b16 %v2033
  %v2088 = vunpack.c.l.b16 %v2034
  %v2089 = vunpack.c.h.b16 %v2034
  %v2090 = vunpack.c.l.b16 %v2035
  %v2091 = vunpack.c.h.b16 %v2035
  %v2092 = vunpack.c.l.b16 %v2036
  %v2093 = vunpack.c.h.b16 %v2036
  %v2094 = vunpack.c.l.b16 %v2037
  %v2095 = vunpack.c.h.b16 %v2037
  %v2096 = vunpack.c.l.b16 %v2038
  %v2097 = vunpack.c.h.b16 %v2038
  %v2098 = vunpack.c.l.b16 %v2039
  %v2099 = vunpack.c.h.b16 %v2039
  %v2100 = vunpack.c.l.b16 %v2040
  %v2101 = vunpack.c.h.b16 %v2040
  %v2102 = vunpack.c.l.b16 %v2041
  %v2103 = vunpack.c.h.b16 %v2041
  %v2104 = vunpack.c.l.b16 %v2042
  %v2105 = vunpack.c.h.b16 %v2042
  %v2106 = vunpack.c.l.b16 %v2043
  %v2107 = vunpack.c.h.b16 %v2043
  %v2108 = vunpack.c.l.b16 %v2044
  %v2109 = vunpack.c.h.b16 %v2044
  %v2110 = vunpack.c.l.b16 %v2045
  %v2111 = vunpack.c.h.b16 %v2045
  %v2112 = vpack.c.b16 %v2082, %v2080
  %v2113 = vpack.c.b16 %v2083, %v2081
  %v2114 = vpack.c.b16 %v2086, %v2084
  %v2115 = vpack.c.b16 %v2087, %v2085
  %v2116 = vpack.c.b16 %v2090, %v2088
  %v2117 = vpack.c.b16 %v2091, %v2089
  %v2118 = vpack.c.b16 %v2094, %v2092
  %v2119 = vpack.c.b16 %v2095, %v2093
  %v2120 = vpack.c.b16 %v2098, %v2096
  %v2121 = vpack.c.b16 %v2099, %v2097
  %v2122 = vpack.c.b16 %v2102, %v2100
  %v2123 = vpack.c.b16 %v2103, %v2101
  %v2124 = vpack.c.b16 %v2106, %v2104
  %v2125 = vpack.c.b16 %v2107, %v2105
  %v2126 = vpack.c.b16 %v2110, %v2108
  %v2127 = vpack.c.b16 %v2111, %v2109
  %2144 = vmatpush.bf16.msra.mxu0 %v2126
  %2145 = vmatpush.bf16.msra.mxu0 %v2124
  %2146 = vmatpush.bf16.msra.mxu0 %v2122
  %2147 = vmatpush.bf16.msra.mxu0 %v2120
  %2148 = vmatpush.bf16.msra.mxu0 %v2118
  %2149 = vmatpush.bf16.msra.mxu0 %v2116
  %2150 = vmatpush.bf16.msra.mxu0 %v2114
  %2151 = vmatpush.bf16.msra.mxu0 %v2112
  %2152 = vmatmul.bf16.gmra.mxu0 %v1641
  %v2153 = vpop.f32.mrf.mxu0
  %v2154 = vadd.f32 0.0, %v2153
  %v2155 = vpop.f32.mrf.mxu0
  %v2156 = vadd.f32 0.0, %v2155
  %2157 = vmatmul.bf16.gmra.mxu0 %v1642
  %v2158 = vpop.f32.mrf.mxu0
  %v2159 = vadd.f32 0.0, %v2158
  %v2160 = vpop.f32.mrf.mxu0
  %v2161 = vadd.f32 0.0, %v2160
  %2162 = vmatmul.bf16.gmra.mxu0 %v1643
  %v2163 = vpop.f32.mrf.mxu0
  %v2164 = vadd.f32 0.0, %v2163
  %v2165 = vpop.f32.mrf.mxu0
  %v2166 = vadd.f32 0.0, %v2165
  %2167 = vmatmul.bf16.gmra.mxu0 %v1644
  %v2168 = vpop.f32.mrf.mxu0
  %v2169 = vadd.f32 0.0, %v2168
  %v2170 = vpop.f32.mrf.mxu0
  %2171 = vdwg.mxu0
  %2172 = vmatpush.bf16.msra.mxu0 %v2127
  %2173 = vmatpush.bf16.msra.mxu0 %v2125
  %2174 = vmatpush.bf16.msra.mxu0 %v2123
  %2175 = vmatpush.bf16.msra.mxu0 %v2121
  %2176 = vmatpush.bf16.msra.mxu0 %v2119
  %2177 = vmatpush.bf16.msra.mxu0 %v2117
  %2178 = vmatpush.bf16.msra.mxu0 %v2115
  %2179 = vmatpush.bf16.msra.mxu0 %v2113
  %2180 = vmatmul.bf16.gmra.mxu0 %v1641
  %v2181 = vpop.f32.mrf.mxu0
  %v2182 = vadd.f32 0.0, %v2181
  %v2183 = vpop.f32.mrf.mxu0
  %v2184 = vadd.f32 0.0, %v2183
  %2185 = vmatmul.bf16.gmra.mxu0 %v1642
  %v2186 = vpop.f32.mrf.mxu0
  %v2187 = vadd.f32 0.0, %v2186
  %v2188 = vpop.f32.mrf.mxu0
  %v2189 = vadd.f32 0.0, %v2188
  %2190 = vmatmul.bf16.gmra.mxu0 %v1643
  %v2191 = vpop.f32.mrf.mxu0
  %v2192 = vadd.f32 0.0, %v2191
  %v2193 = vpop.f32.mrf.mxu0
  %v2194 = vadd.f32 0.0, %v2193
  %2195 = vmatmul.bf16.gmra.mxu0 %v1644
  %v2196 = vpop.f32.mrf.mxu0
  %v2197 = vadd.f32 0.0, %v2196
  %v2198 = vpop.f32.mrf.mxu0
  %2199 = vdwg.mxu0
  %v2200 = vadd.f32 %v1871, %v2154
  %v2201 = vadd.f32 %v1899, %v2182
  %v2202 = vadd.f32 %v1873, %v2156
  %v2203 = vadd.f32 %v1901, %v2184
  %v2204 = vadd.f32 %v1876, %v2159
  %v2205 = vadd.f32 %v1904, %v2187
  %v2206 = vadd.f32 %v1878, %v2161
  %v2207 = vadd.f32 %v1906, %v2189
  %v2208 = vadd.f32 %v1881, %v2164
  %v2209 = vadd.f32 %v1909, %v2192
  %v2210 = vadd.f32 %v1883, %v2166
  %v2211 = vadd.f32 %v1911, %v2194
  %v2212 = vadd.f32 %v1886, %v2169
  %v2213 = vadd.f32 %v1914, %v2197
  %2214 = vmatpush.bf16.msra.mxu0 %v2126
  %2215 = vmatpush.bf16.msra.mxu0 %v2124
  %2216 = vmatpush.bf16.msra.mxu0 %v2122
  %2217 = vmatpush.bf16.msra.mxu0 %v2120
  %2218 = vmatpush.bf16.msra.mxu0 %v2118
  %2219 = vmatpush.bf16.msra.mxu0 %v2116
  %2220 = vmatpush.bf16.msra.mxu0 %v2114
  %2221 = vmatpush.bf16.msra.mxu0 %v2112
  %2222 = vmatmul.bf16.gmra.mxu0 %v2060
  %v2223 = vpop.f32.mrf.mxu0
  %v2224 = vadd.f32 0.0, %v2223
  %v2225 = vpop.f32.mrf.mxu0
  %v2226 = vadd.f32 0.0, %v2225
  %2227 = vmatmul.bf16.gmra.mxu0 %v2061
  %v2228 = vpop.f32.mrf.mxu0
  %v2229 = vadd.f32 0.0, %v2228
  %v2230 = vpop.f32.mrf.mxu0
  %v2231 = vadd.f32 0.0, %v2230
  %2232 = vmatmul.bf16.gmra.mxu0 %v2062
  %v2233 = vpop.f32.mrf.mxu0
  %v2234 = vadd.f32 0.0, %v2233
  %v2235 = vpop.f32.mrf.mxu0
  %v2236 = vadd.f32 0.0, %v2235
  %2237 = vmatmul.bf16.gmra.mxu0 %v2063
  %v2238 = vpop.f32.mrf.mxu0
  %v2239 = vadd.f32 0.0, %v2238
  %v2240 = vpop.f32.mrf.mxu0
  %2241 = vdwg.mxu0
  %2242 = vmatpush.bf16.msra.mxu0 %v2127
  %2243 = vmatpush.bf16.msra.mxu0 %v2125
  %2244 = vmatpush.bf16.msra.mxu0 %v2123
  %2245 = vmatpush.bf16.msra.mxu0 %v2121
  %2246 = vmatpush.bf16.msra.mxu0 %v2119
  %2247 = vmatpush.bf16.msra.mxu0 %v2117
  %2248 = vmatpush.bf16.msra.mxu0 %v2115
  %2249 = vmatpush.bf16.msra.mxu0 %v2113
  %2250 = vmatmul.bf16.gmra.mxu0 %v2060
  %v2251 = vpop.f32.mrf.mxu0
  %v2252 = vadd.f32 0.0, %v2251
  %v2253 = vpop.f32.mrf.mxu0
  %v2254 = vadd.f32 0.0, %v2253
  %2255 = vmatmul.bf16.gmra.mxu0 %v2061
  %v2256 = vpop.f32.mrf.mxu0
  %v2257 = vadd.f32 0.0, %v2256
  %v2258 = vpop.f32.mrf.mxu0
  %v2259 = vadd.f32 0.0, %v2258
  %2260 = vmatmul.bf16.gmra.mxu0 %v2062
  %v2261 = vpop.f32.mrf.mxu0
  %v2262 = vadd.f32 0.0, %v2261
  %v2263 = vpop.f32.mrf.mxu0
  %v2264 = vadd.f32 0.0, %v2263
  %2265 = vmatmul.bf16.gmra.mxu0 %v2063
  %v2266 = vpop.f32.mrf.mxu0
  %v2267 = vadd.f32 0.0, %v2266
  %v2268 = vpop.f32.mrf.mxu0
  %2269 = vdwg.mxu0
  %v2270 = vadd.f32 %v1983, %v2224
  %v2271 = vadd.f32 %v2011, %v2252
  %v2272 = vadd.f32 %v1985, %v2226
  %v2273 = vadd.f32 %v2013, %v2254
  %v2274 = vadd.f32 %v1988, %v2229
  %v2275 = vadd.f32 %v2016, %v2257
  %v2276 = vadd.f32 %v1990, %v2231
  %v2277 = vadd.f32 %v2018, %v2259
  %v2278 = vadd.f32 %v1993, %v2234
  %v2279 = vadd.f32 %v2021, %v2262
  %v2280 = vadd.f32 %v1995, %v2236
  %v2281 = vadd.f32 %v2023, %v2264
  %v2282 = vadd.f32 %v1998, %v2239
  %v2283 = vadd.f32 %v2026, %v2267
  %s2284 = scalar_lea.vmem %s4, 384
  %v2285 = vld [vmem:[%s2284] sm:$0xff]
  %v2286 = vld [vmem:[%s2284 + $0x8] sm:$0xff]
  %v2287 = vld [vmem:[%s2284 + $0x10] sm:$0xff]
  %v2288 = vld [vmem:[%s2284 + $0x18] sm:$0xff]
  %v2289 = vld [vmem:[%s2284 + $0x20] sm:$0xff]
  %v2290 = vld [vmem:[%s2284 + $0x28] sm:$0xff]
  %v2291 = vld [vmem:[%s2284 + $0x30] sm:$0xff]
  %v2292 = vld [vmem:[%s2284 + $0x38] sm:$0xff]
  %v2293 = vld [vmem:[%s2284 + $0x40] sm:$0xff]
  %v2294 = vld [vmem:[%s2284 + $0x48] sm:$0xff]
  %v2295 = vld [vmem:[%s2284 + $0x50] sm:$0xff]
  %v2296 = vld [vmem:[%s2284 + $0x58] sm:$0xff]
  %v2297 = vld [vmem:[%s2284 + $0x60] sm:$0xff]
  %v2298 = vld [vmem:[%s2284 + $0x68] sm:$0xff]
  %v2299 = vld [vmem:[%s2284 + $0x70] sm:$0xff]
  %v2300 = vld [vmem:[%s2284 + $0x78] sm:$0xff]
  %s2301 = scalar_lea.vmem [#allocation2], 4
  %v2302 = vld [vmem:[%s2301] ss:$2 sm:$0xff]
  %s2303 = scalar_lea.vmem [#allocation2], 20
  %v2304 = vld [vmem:[%s2303] ss:$2 sm:$0xff]
  %s2305 = scalar_lea.vmem [#allocation2], 36
  %v2306 = vld [vmem:[%s2305] ss:$2 sm:$0xff]
  %s2307 = scalar_lea.vmem [#allocation2], 52
  %v2308 = vld [vmem:[%s2307] ss:$2 sm:$0xff]
  %s2309 = scalar_lea.vmem [#allocation2], 68
  %v2310 = vld [vmem:[%s2309] ss:$2 sm:$0xff]
  %s2311 = scalar_lea.vmem [#allocation2], 84
  %v2312 = vld [vmem:[%s2311] ss:$2 sm:$0xff]
  %s2313 = scalar_lea.vmem [#allocation2], 100
  %v2314 = vld [vmem:[%s2313] ss:$2 sm:$0x3f]
  %v2315 = vpack.c.bf16 %v2304, %v2302
  %v2316 = vpack.c.bf16 %v2308, %v2306
  %v2317 = vpack.c.bf16 %v2312, %v2310
  %v2318 = vpack.c.bf16 %v2314, %v2314
  %v2335 = vunpack.c.l.b16 %v2285
  %v2336 = vunpack.c.h.b16 %v2285
  %v2337 = vunpack.c.l.b16 %v2286
  %v2338 = vunpack.c.h.b16 %v2286
  %v2339 = vunpack.c.l.b16 %v2287
  %v2340 = vunpack.c.h.b16 %v2287
  %v2341 = vunpack.c.l.b16 %v2288
  %v2342 = vunpack.c.h.b16 %v2288
  %v2343 = vunpack.c.l.b16 %v2289
  %v2344 = vunpack.c.h.b16 %v2289
  %v2345 = vunpack.c.l.b16 %v2290
  %v2346 = vunpack.c.h.b16 %v2290
  %v2347 = vunpack.c.l.b16 %v2291
  %v2348 = vunpack.c.h.b16 %v2291
  %v2349 = vunpack.c.l.b16 %v2292
  %v2350 = vunpack.c.h.b16 %v2292
  %v2351 = vunpack.c.l.b16 %v2293
  %v2352 = vunpack.c.h.b16 %v2293
  %v2353 = vunpack.c.l.b16 %v2294
  %v2354 = vunpack.c.h.b16 %v2294
  %v2355 = vunpack.c.l.b16 %v2295
  %v2356 = vunpack.c.h.b16 %v2295
  %v2357 = vunpack.c.l.b16 %v2296
  %v2358 = vunpack.c.h.b16 %v2296
  %v2359 = vunpack.c.l.b16 %v2297
  %v2360 = vunpack.c.h.b16 %v2297
  %v2361 = vunpack.c.l.b16 %v2298
  %v2362 = vunpack.c.h.b16 %v2298
  %v2363 = vunpack.c.l.b16 %v2299
  %v2364 = vunpack.c.h.b16 %v2299
  %v2365 = vunpack.c.l.b16 %v2300
  %v2366 = vunpack.c.h.b16 %v2300
  %v2367 = vpack.c.b16 %v2337, %v2335
  %v2368 = vpack.c.b16 %v2338, %v2336
  %v2369 = vpack.c.b16 %v2341, %v2339
  %v2370 = vpack.c.b16 %v2342, %v2340
  %v2371 = vpack.c.b16 %v2345, %v2343
  %v2372 = vpack.c.b16 %v2346, %v2344
  %v2373 = vpack.c.b16 %v2349, %v2347
  %v2374 = vpack.c.b16 %v2350, %v2348
  %v2375 = vpack.c.b16 %v2353, %v2351
  %v2376 = vpack.c.b16 %v2354, %v2352
  %v2377 = vpack.c.b16 %v2357, %v2355
  %v2378 = vpack.c.b16 %v2358, %v2356
  %v2379 = vpack.c.b16 %v2361, %v2359
  %v2380 = vpack.c.b16 %v2362, %v2360
  %v2381 = vpack.c.b16 %v2365, %v2363
  %v2382 = vpack.c.b16 %v2366, %v2364
  %2399 = vmatpush.bf16.msra.mxu0 %v2381
  %2400 = vmatpush.bf16.msra.mxu0 %v2379
  %2401 = vmatpush.bf16.msra.mxu0 %v2377
  %2402 = vmatpush.bf16.msra.mxu0 %v2375
  %2403 = vmatpush.bf16.msra.mxu0 %v2373
  %2404 = vmatpush.bf16.msra.mxu0 %v2371
  %2405 = vmatpush.bf16.msra.mxu0 %v2369
  %2406 = vmatpush.bf16.msra.mxu0 %v2367
  %2407 = vmatmul.bf16.gmra.mxu0 %v2060
  %v2408 = vpop.f32.mrf.mxu0
  %v2409 = vadd.f32 0.0, %v2408
  %v2410 = vpop.f32.mrf.mxu0
  %v2411 = vadd.f32 0.0, %v2410
  %2412 = vmatmul.bf16.gmra.mxu0 %v2061
  %v2413 = vpop.f32.mrf.mxu0
  %v2414 = vadd.f32 0.0, %v2413
  %v2415 = vpop.f32.mrf.mxu0
  %v2416 = vadd.f32 0.0, %v2415
  %2417 = vmatmul.bf16.gmra.mxu0 %v2062
  %v2418 = vpop.f32.mrf.mxu0
  %v2419 = vadd.f32 0.0, %v2418
  %v2420 = vpop.f32.mrf.mxu0
  %v2421 = vadd.f32 0.0, %v2420
  %2422 = vmatmul.bf16.gmra.mxu0 %v2063
  %v2423 = vpop.f32.mrf.mxu0
  %v2424 = vadd.f32 0.0, %v2423
  %v2425 = vpop.f32.mrf.mxu0
  %2426 = vdwg.mxu0
  %2427 = vmatpush.bf16.msra.mxu0 %v2382
  %2428 = vmatpush.bf16.msra.mxu0 %v2380
  %2429 = vmatpush.bf16.msra.mxu0 %v2378
  %2430 = vmatpush.bf16.msra.mxu0 %v2376
  %2431 = vmatpush.bf16.msra.mxu0 %v2374
  %2432 = vmatpush.bf16.msra.mxu0 %v2372
  %2433 = vmatpush.bf16.msra.mxu0 %v2370
  %2434 = vmatpush.bf16.msra.mxu0 %v2368
  %2435 = vmatmul.bf16.gmra.mxu0 %v2060
  %v2436 = vpop.f32.mrf.mxu0
  %v2437 = vadd.f32 0.0, %v2436
  %v2438 = vpop.f32.mrf.mxu0
  %v2439 = vadd.f32 0.0, %v2438
  %2440 = vmatmul.bf16.gmra.mxu0 %v2061
  %v2441 = vpop.f32.mrf.mxu0
  %v2442 = vadd.f32 0.0, %v2441
  %v2443 = vpop.f32.mrf.mxu0
  %v2444 = vadd.f32 0.0, %v2443
  %2445 = vmatmul.bf16.gmra.mxu0 %v2062
  %v2446 = vpop.f32.mrf.mxu0
  %v2447 = vadd.f32 0.0, %v2446
  %v2448 = vpop.f32.mrf.mxu0
  %v2449 = vadd.f32 0.0, %v2448
  %2450 = vmatmul.bf16.gmra.mxu0 %v2063
  %v2451 = vpop.f32.mrf.mxu0
  %v2452 = vadd.f32 0.0, %v2451
  %v2453 = vpop.f32.mrf.mxu0
  %2454 = vdwg.mxu0
  %v2455 = vadd.f32 %v2200, %v2409
  %v2456 = vadd.f32 %v2201, %v2437
  %v2457 = vadd.f32 %v2202, %v2411
  %v2458 = vadd.f32 %v2203, %v2439
  %v2459 = vadd.f32 %v2204, %v2414
  %v2460 = vadd.f32 %v2205, %v2442
  %v2461 = vadd.f32 %v2206, %v2416
  %v2462 = vadd.f32 %v2207, %v2444
  %v2463 = vadd.f32 %v2208, %v2419
  %v2464 = vadd.f32 %v2209, %v2447
  %v2465 = vadd.f32 %v2210, %v2421
  %v2466 = vadd.f32 %v2211, %v2449
  %v2467 = vadd.f32 %v2212, %v2424
  %v2468 = vadd.f32 %v2213, %v2452
  %2469 = vmatpush.bf16.msra.mxu0 %v2381
  %2470 = vmatpush.bf16.msra.mxu0 %v2379
  %2471 = vmatpush.bf16.msra.mxu0 %v2377
  %2472 = vmatpush.bf16.msra.mxu0 %v2375
  %2473 = vmatpush.bf16.msra.mxu0 %v2373
  %2474 = vmatpush.bf16.msra.mxu0 %v2371
  %2475 = vmatpush.bf16.msra.mxu0 %v2369
  %2476 = vmatpush.bf16.msra.mxu0 %v2367
  %2477 = vmatmul.bf16.gmra.mxu0 %v2315
  %v2478 = vpop.f32.mrf.mxu0
  %v2479 = vadd.f32 0.0, %v2478
  %v2480 = vpop.f32.mrf.mxu0
  %v2481 = vadd.f32 0.0, %v2480
  %2482 = vmatmul.bf16.gmra.mxu0 %v2316
  %v2483 = vpop.f32.mrf.mxu0
  %v2484 = vadd.f32 0.0, %v2483
  %v2485 = vpop.f32.mrf.mxu0
  %v2486 = vadd.f32 0.0, %v2485
  %2487 = vmatmul.bf16.gmra.mxu0 %v2317
  %v2488 = vpop.f32.mrf.mxu0
  %v2489 = vadd.f32 0.0, %v2488
  %v2490 = vpop.f32.mrf.mxu0
  %v2491 = vadd.f32 0.0, %v2490
  %2492 = vmatmul.bf16.gmra.mxu0 %v2318
  %v2493 = vpop.f32.mrf.mxu0
  %v2494 = vadd.f32 0.0, %v2493
  %v2495 = vpop.f32.mrf.mxu0
  %2496 = vdwg.mxu0
  %2497 = vmatpush.bf16.msra.mxu0 %v2382
  %2498 = vmatpush.bf16.msra.mxu0 %v2380
  %2499 = vmatpush.bf16.msra.mxu0 %v2378
  %2500 = vmatpush.bf16.msra.mxu0 %v2376
  %2501 = vmatpush.bf16.msra.mxu0 %v2374
  %2502 = vmatpush.bf16.msra.mxu0 %v2372
  %2503 = vmatpush.bf16.msra.mxu0 %v2370
  %2504 = vmatpush.bf16.msra.mxu0 %v2368
  %2505 = vmatmul.bf16.gmra.mxu0 %v2315
  %v2506 = vpop.f32.mrf.mxu0
  %v2507 = vadd.f32 0.0, %v2506
  %v2508 = vpop.f32.mrf.mxu0
  %v2509 = vadd.f32 0.0, %v2508
  %2510 = vmatmul.bf16.gmra.mxu0 %v2316
  %v2511 = vpop.f32.mrf.mxu0
  %v2512 = vadd.f32 0.0, %v2511
  %v2513 = vpop.f32.mrf.mxu0
  %v2514 = vadd.f32 0.0, %v2513
  %2515 = vmatmul.bf16.gmra.mxu0 %v2317
  %v2516 = vpop.f32.mrf.mxu0
  %v2517 = vadd.f32 0.0, %v2516
  %v2518 = vpop.f32.mrf.mxu0
  %v2519 = vadd.f32 0.0, %v2518
  %2520 = vmatmul.bf16.gmra.mxu0 %v2318
  %v2521 = vpop.f32.mrf.mxu0
  %v2522 = vadd.f32 0.0, %v2521
  %v2523 = vpop.f32.mrf.mxu0
  %2524 = vdwg.mxu0
  %v2525 = vadd.f32 %v2270, %v2479
  %v2526 = vadd.f32 %v2271, %v2507
  %v2527 = vadd.f32 %v2272, %v2481
  %v2528 = vadd.f32 %v2273, %v2509
  %v2529 = vadd.f32 %v2274, %v2484
  %v2530 = vadd.f32 %v2275, %v2512
  %v2531 = vadd.f32 %v2276, %v2486
  %v2532 = vadd.f32 %v2277, %v2514
  %v2533 = vadd.f32 %v2278, %v2489
  %v2534 = vadd.f32 %v2279, %v2517
  %v2535 = vadd.f32 %v2280, %v2491
  %v2536 = vadd.f32 %v2281, %v2519
  %v2537 = vadd.f32 %v2282, %v2494
  %v2538 = vadd.f32 %v2283, %v2522
  %s2539 = scalar_lea.vmem %s4, 512
  %v2540 = vld [vmem:[%s2539] sm:$0xff]
  %v2541 = vld [vmem:[%s2539 + $0x8] sm:$0xff]
  %v2542 = vld [vmem:[%s2539 + $0x10] sm:$0xff]
  %v2543 = vld [vmem:[%s2539 + $0x18] sm:$0xff]
  %v2544 = vld [vmem:[%s2539 + $0x20] sm:$0xff]
  %v2545 = vld [vmem:[%s2539 + $0x28] sm:$0xff]
  %v2546 = vld [vmem:[%s2539 + $0x30] sm:$0xff]
  %v2547 = vld [vmem:[%s2539 + $0x38] sm:$0xff]
  %v2548 = vld [vmem:[%s2539 + $0x40] sm:$0xff]
  %v2549 = vld [vmem:[%s2539 + $0x48] sm:$0xff]
  %v2550 = vld [vmem:[%s2539 + $0x50] sm:$0xff]
  %v2551 = vld [vmem:[%s2539 + $0x58] sm:$0xff]
  %v2552 = vld [vmem:[%s2539 + $0x60] sm:$0xff]
  %v2553 = vld [vmem:[%s2539 + $0x68] sm:$0xff]
  %v2554 = vld [vmem:[%s2539 + $0x70] sm:$0xff]
  %v2555 = vld [vmem:[%s2539 + $0x78] sm:$0xff]
  %s2556 = scalar_lea.vmem [#allocation2], 5
  %v2557 = vld [vmem:[%s2556] ss:$2 sm:$0xff]
  %s2558 = scalar_lea.vmem [#allocation2], 21
  %v2559 = vld [vmem:[%s2558] ss:$2 sm:$0xff]
  %s2560 = scalar_lea.vmem [#allocation2], 37
  %v2561 = vld [vmem:[%s2560] ss:$2 sm:$0xff]
  %s2562 = scalar_lea.vmem [#allocation2], 53
  %v2563 = vld [vmem:[%s2562] ss:$2 sm:$0xff]
  %s2564 = scalar_lea.vmem [#allocation2], 69
  %v2565 = vld [vmem:[%s2564] ss:$2 sm:$0xff]
  %s2566 = scalar_lea.vmem [#allocation2], 85
  %v2567 = vld [vmem:[%s2566] ss:$2 sm:$0xff]
  %s2568 = scalar_lea.vmem [#allocation2], 101
  %v2569 = vld [vmem:[%s2568] ss:$2 sm:$0x3f]
  %v2570 = vpack.c.bf16 %v2559, %v2557
  %v2571 = vpack.c.bf16 %v2563, %v2561
  %v2572 = vpack.c.bf16 %v2567, %v2565
  %v2573 = vpack.c.bf16 %v2569, %v2569
  %v2590 = vunpack.c.l.b16 %v2540
  %v2591 = vunpack.c.h.b16 %v2540
  %v2592 = vunpack.c.l.b16 %v2541
  %v2593 = vunpack.c.h.b16 %v2541
  %v2594 = vunpack.c.l.b16 %v2542
  %v2595 = vunpack.c.h.b16 %v2542
  %v2596 = vunpack.c.l.b16 %v2543
  %v2597 = vunpack.c.h.b16 %v2543
  %v2598 = vunpack.c.l.b16 %v2544
  %v2599 = vunpack.c.h.b16 %v2544
  %v2600 = vunpack.c.l.b16 %v2545
  %v2601 = vunpack.c.h.b16 %v2545
  %v2602 = vunpack.c.l.b16 %v2546
  %v2603 = vunpack.c.h.b16 %v2546
  %v2604 = vunpack.c.l.b16 %v2547
  %v2605 = vunpack.c.h.b16 %v2547
  %v2606 = vunpack.c.l.b16 %v2548
  %v2607 = vunpack.c.h.b16 %v2548
  %v2608 = vunpack.c.l.b16 %v2549
  %v2609 = vunpack.c.h.b16 %v2549
  %v2610 = vunpack.c.l.b16 %v2550
  %v2611 = vunpack.c.h.b16 %v2550
  %v2612 = vunpack.c.l.b16 %v2551
  %v2613 = vunpack.c.h.b16 %v2551
  %v2614 = vunpack.c.l.b16 %v2552
  %v2615 = vunpack.c.h.b16 %v2552
  %v2616 = vunpack.c.l.b16 %v2553
  %v2617 = vunpack.c.h.b16 %v2553
  %v2618 = vunpack.c.l.b16 %v2554
  %v2619 = vunpack.c.h.b16 %v2554
  %v2620 = vunpack.c.l.b16 %v2555
  %v2621 = vunpack.c.h.b16 %v2555
  %v2622 = vpack.c.b16 %v2592, %v2590
  %v2623 = vpack.c.b16 %v2593, %v2591
  %v2624 = vpack.c.b16 %v2596, %v2594
  %v2625 = vpack.c.b16 %v2597, %v2595
  %v2626 = vpack.c.b16 %v2600, %v2598
  %v2627 = vpack.c.b16 %v2601, %v2599
  %v2628 = vpack.c.b16 %v2604, %v2602
  %v2629 = vpack.c.b16 %v2605, %v2603
  %v2630 = vpack.c.b16 %v2608, %v2606
  %v2631 = vpack.c.b16 %v2609, %v2607
  %v2632 = vpack.c.b16 %v2612, %v2610
  %v2633 = vpack.c.b16 %v2613, %v2611
  %v2634 = vpack.c.b16 %v2616, %v2614
  %v2635 = vpack.c.b16 %v2617, %v2615
  %v2636 = vpack.c.b16 %v2620, %v2618
  %v2637 = vpack.c.b16 %v2621, %v2619
  %2654 = vmatpush.bf16.msra.mxu0 %v2636
  %2655 = vmatpush.bf16.msra.mxu0 %v2634
  %2656 = vmatpush.bf16.msra.mxu0 %v2632
  %2657 = vmatpush.bf16.msra.mxu0 %v2630
  %2658 = vmatpush.bf16.msra.mxu0 %v2628
  %2659 = vmatpush.bf16.msra.mxu0 %v2626
  %2660 = vmatpush.bf16.msra.mxu0 %v2624
  %2661 = vmatpush.bf16.msra.mxu0 %v2622
  %2662 = vmatmul.bf16.gmra.mxu0 %v2315
  %v2663 = vpop.f32.mrf.mxu0
  %v2664 = vadd.f32 0.0, %v2663
  %v2665 = vpop.f32.mrf.mxu0
  %v2666 = vadd.f32 0.0, %v2665
  %2667 = vmatmul.bf16.gmra.mxu0 %v2316
  %v2668 = vpop.f32.mrf.mxu0
  %v2669 = vadd.f32 0.0, %v2668
  %v2670 = vpop.f32.mrf.mxu0
  %v2671 = vadd.f32 0.0, %v2670
  %2672 = vmatmul.bf16.gmra.mxu0 %v2317
  %v2673 = vpop.f32.mrf.mxu0
  %v2674 = vadd.f32 0.0, %v2673
  %v2675 = vpop.f32.mrf.mxu0
  %v2676 = vadd.f32 0.0, %v2675
  %2677 = vmatmul.bf16.gmra.mxu0 %v2318
  %v2678 = vpop.f32.mrf.mxu0
  %v2679 = vadd.f32 0.0, %v2678
  %v2680 = vpop.f32.mrf.mxu0
  %2681 = vdwg.mxu0
  %2682 = vmatpush.bf16.msra.mxu0 %v2637
  %2683 = vmatpush.bf16.msra.mxu0 %v2635
  %2684 = vmatpush.bf16.msra.mxu0 %v2633
  %2685 = vmatpush.bf16.msra.mxu0 %v2631
  %2686 = vmatpush.bf16.msra.mxu0 %v2629
  %2687 = vmatpush.bf16.msra.mxu0 %v2627
  %2688 = vmatpush.bf16.msra.mxu0 %v2625
  %2689 = vmatpush.bf16.msra.mxu0 %v2623
  %2690 = vmatmul.bf16.gmra.mxu0 %v2315
  %v2691 = vpop.f32.mrf.mxu0
  %v2692 = vadd.f32 0.0, %v2691
  %v2693 = vpop.f32.mrf.mxu0
  %v2694 = vadd.f32 0.0, %v2693
  %2695 = vmatmul.bf16.gmra.mxu0 %v2316
  %v2696 = vpop.f32.mrf.mxu0
  %v2697 = vadd.f32 0.0, %v2696
  %v2698 = vpop.f32.mrf.mxu0
  %v2699 = vadd.f32 0.0, %v2698
  %2700 = vmatmul.bf16.gmra.mxu0 %v2317
  %v2701 = vpop.f32.mrf.mxu0
  %v2702 = vadd.f32 0.0, %v2701
  %v2703 = vpop.f32.mrf.mxu0
  %v2704 = vadd.f32 0.0, %v2703
  %2705 = vmatmul.bf16.gmra.mxu0 %v2318
  %v2706 = vpop.f32.mrf.mxu0
  %v2707 = vadd.f32 0.0, %v2706
  %v2708 = vpop.f32.mrf.mxu0
  %2709 = vdwg.mxu0
  %v2710 = vadd.f32 %v2455, %v2664
  %v2711 = vadd.f32 %v2456, %v2692
  %v2712 = vadd.f32 %v2457, %v2666
  %v2713 = vadd.f32 %v2458, %v2694
  %v2714 = vadd.f32 %v2459, %v2669
  %v2715 = vadd.f32 %v2460, %v2697
  %v2716 = vadd.f32 %v2461, %v2671
  %v2717 = vadd.f32 %v2462, %v2699
  %v2718 = vadd.f32 %v2463, %v2674
  %v2719 = vadd.f32 %v2464, %v2702
  %v2720 = vadd.f32 %v2465, %v2676
  %v2721 = vadd.f32 %v2466, %v2704
  %v2722 = vadd.f32 %v2467, %v2679
  %v2723 = vadd.f32 %v2468, %v2707
  %2724 = vmatpush.bf16.msra.mxu0 %v2636
  %2725 = vmatpush.bf16.msra.mxu0 %v2634
  %2726 = vmatpush.bf16.msra.mxu0 %v2632
  %2727 = vmatpush.bf16.msra.mxu0 %v2630
  %2728 = vmatpush.bf16.msra.mxu0 %v2628
  %2729 = vmatpush.bf16.msra.mxu0 %v2626
  %2730 = vmatpush.bf16.msra.mxu0 %v2624
  %2731 = vmatpush.bf16.msra.mxu0 %v2622
  %2732 = vmatmul.bf16.gmra.mxu0 %v2570
  %v2733 = vpop.f32.mrf.mxu0
  %v2734 = vadd.f32 0.0, %v2733
  %v2735 = vpop.f32.mrf.mxu0
  %v2736 = vadd.f32 0.0, %v2735
  %2737 = vmatmul.bf16.gmra.mxu0 %v2571
  %v2738 = vpop.f32.mrf.mxu0
  %v2739 = vadd.f32 0.0, %v2738
  %v2740 = vpop.f32.mrf.mxu0
  %v2741 = vadd.f32 0.0, %v2740
  %2742 = vmatmul.bf16.gmra.mxu0 %v2572
  %v2743 = vpop.f32.mrf.mxu0
  %v2744 = vadd.f32 0.0, %v2743
  %v2745 = vpop.f32.mrf.mxu0
  %v2746 = vadd.f32 0.0, %v2745
  %2747 = vmatmul.bf16.gmra.mxu0 %v2573
  %v2748 = vpop.f32.mrf.mxu0
  %v2749 = vadd.f32 0.0, %v2748
  %v2750 = vpop.f32.mrf.mxu0
  %2751 = vdwg.mxu0
  %2752 = vmatpush.bf16.msra.mxu0 %v2637
  %2753 = vmatpush.bf16.msra.mxu0 %v2635
  %2754 = vmatpush.bf16.msra.mxu0 %v2633
  %2755 = vmatpush.bf16.msra.mxu0 %v2631
  %2756 = vmatpush.bf16.msra.mxu0 %v2629
  %2757 = vmatpush.bf16.msra.mxu0 %v2627
  %2758 = vmatpush.bf16.msra.mxu0 %v2625
  %2759 = vmatpush.bf16.msra.mxu0 %v2623
  %2760 = vmatmul.bf16.gmra.mxu0 %v2570
  %v2761 = vpop.f32.mrf.mxu0
  %v2762 = vadd.f32 0.0, %v2761
  %v2763 = vpop.f32.mrf.mxu0
  %v2764 = vadd.f32 0.0, %v2763
  %2765 = vmatmul.bf16.gmra.mxu0 %v2571
  %v2766 = vpop.f32.mrf.mxu0
  %v2767 = vadd.f32 0.0, %v2766
  %v2768 = vpop.f32.mrf.mxu0
  %v2769 = vadd.f32 0.0, %v2768
  %2770 = vmatmul.bf16.gmra.mxu0 %v2572
  %v2771 = vpop.f32.mrf.mxu0
  %v2772 = vadd.f32 0.0, %v2771
  %v2773 = vpop.f32.mrf.mxu0
  %v2774 = vadd.f32 0.0, %v2773
  %2775 = vmatmul.bf16.gmra.mxu0 %v2573
  %v2776 = vpop.f32.mrf.mxu0
  %v2777 = vadd.f32 0.0, %v2776
  %v2778 = vpop.f32.mrf.mxu0
  %2779 = vdwg.mxu0
  %v2780 = vadd.f32 %v2525, %v2734
  %v2781 = vadd.f32 %v2526, %v2762
  %v2782 = vadd.f32 %v2527, %v2736
  %v2783 = vadd.f32 %v2528, %v2764
  %v2784 = vadd.f32 %v2529, %v2739
  %v2785 = vadd.f32 %v2530, %v2767
  %v2786 = vadd.f32 %v2531, %v2741
  %v2787 = vadd.f32 %v2532, %v2769
  %v2788 = vadd.f32 %v2533, %v2744
  %v2789 = vadd.f32 %v2534, %v2772
  %v2790 = vadd.f32 %v2535, %v2746
  %v2791 = vadd.f32 %v2536, %v2774
  %v2792 = vadd.f32 %v2537, %v2749
  %v2793 = vadd.f32 %v2538, %v2777
  %v2794 = vmax.f32 %v2710, %v2711
  %v2795 = vmax.f32 %v2712, %v2713
  %v2796 = vmax.f32 %v2714, %v2715
  %v2797 = vmax.f32 %v2716, %v2717
  %v2798 = vmax.f32 %v2718, %v2719
  %v2799 = vmax.f32 %v2720, %v2721
  %v2800 = vmax.f32 %v2722, %v2723
  %v2801 = vmax.f32 %v2780, %v2781
  %v2802 = vmax.f32 %v2782, %v2783
  %v2803 = vmax.f32 %v2784, %v2785
  %v2804 = vmax.f32 %v2786, %v2787
  %v2805 = vmax.f32 %v2788, %v2789
  %v2806 = vmax.f32 %v2790, %v2791
  %v2807 = vmax.f32 %v2792, %v2793
  %v2808 = vmax.f32 %v2794, %v2801
  %v2809 = vmax.f32 %v2795, %v2802
  %v2810 = vmax.f32 %v2796, %v2803
  %v2811 = vmax.f32 %v2797, %v2804
  %v2812 = vmax.f32 %v2798, %v2805
  %v2813 = vmax.f32 %v2799, %v2806
  %v2814 = vmax.f32 %v2800, %v2807
  %v2815 = vld [vmem:[%s5] sm:$0x1]
  %v2817 = vperm.slane %v2815, 0
  %v2819 = vadd.f32 %v2808, %v2817
  %v2820 = vadd.f32 %v2809, %v2817
  %v2821 = vadd.f32 %v2810, %v2817
  %v2822 = vadd.f32 %v2811, %v2817
  %v2823 = vadd.f32 %v2812, %v2817
  %v2824 = vadd.f32 %v2813, %v2817
  %v2825 = vadd.f32 %v2814, %v2817
  %v2826 = vmax.f32 %v2819, 0.0
  %v2827 = vmax.f32 %v2820, 0.0
  %v2828 = vmax.f32 %v2821, 0.0
  %v2829 = vmax.f32 %v2822, 0.0
  %v2830 = vmax.f32 %v2823, 0.0
  %v2831 = vmax.f32 %v2824, 0.0
  %v2832 = vmax.f32 %v2825, 0.0
  %2833 = vst [vmem:[#allocation3] sm:$0xff] %v2826
  %2834 = vst [vmem:[#allocation3 + $0x8] sm:$0xff] %v2827
  %2835 = vst [vmem:[#allocation3 + $0x10] sm:$0xff] %v2828
  %2836 = vst [vmem:[#allocation3 + $0x18] sm:$0xff] %v2829
  %2837 = vst [vmem:[#allocation3 + $0x20] sm:$0xff] %v2830
  %2838 = vst [vmem:[#allocation3 + $0x28] sm:$0xff] %v2831
  %2839 = vst [vmem:[#allocation3 + $0x30] sm:$0x3f] %v2832
  %v2840 = vld [vmem:[%s7] sm:$0x1]
  %v2841 = vld [vmem:[#allocation3] ss:$7 sm:$0xff]
  %v2842 = vpack.c.bf16 %v2841, %v2841
  %v2843 = vld [vmem:[%s6] sm:$0xf]
  %v2844 = vld [vmem:[%s6 + $0x4] sm:$0xf]
  %v2845 = vld [vmem:[%s6 + $0x8] sm:$0xf]
  %v2846 = vld [vmem:[%s6 + $0xc] sm:$0xf]
  %v2847 = vld [vmem:[%s6 + $0x10] sm:$0xf]
  %v2848 = vld [vmem:[%s6 + $0x14] sm:$0xf]
  %v2849 = vld [vmem:[%s6 + $0x18] sm:$0xf]
  %v2850 = vld [vmem:[%s6 + $0x1c] sm:$0xf]
  %v2851 = vld [vmem:[%s6 + $0x20] sm:$0xf]
  %v2852 = vld [vmem:[%s6 + $0x24] sm:$0xf]
  %v2853 = vld [vmem:[%s6 + $0x28] sm:$0xf]
  %v2854 = vld [vmem:[%s6 + $0x2c] sm:$0xf]
  %v2855 = vld [vmem:[%s6 + $0x30] sm:$0xf]
  %v2856 = vld [vmem:[%s6 + $0x34] sm:$0xf]
  %v2857 = vld [vmem:[%s6 + $0x38] sm:$0xf]
  %v2858 = vld [vmem:[%s6 + $0x3c] sm:$0xf]
  %v2875 = vunpack.c.l.b16 %v2843
  %v2876 = vunpack.c.l.b16 %v2844
  %v2877 = vunpack.c.l.b16 %v2845
  %v2878 = vunpack.c.l.b16 %v2846
  %v2879 = vunpack.c.l.b16 %v2847
  %v2880 = vunpack.c.l.b16 %v2848
  %v2881 = vunpack.c.l.b16 %v2849
  %v2882 = vunpack.c.l.b16 %v2850
  %v2883 = vunpack.c.l.b16 %v2851
  %v2884 = vunpack.c.l.b16 %v2852
  %v2885 = vunpack.c.l.b16 %v2853
  %v2886 = vunpack.c.l.b16 %v2854
  %v2887 = vunpack.c.l.b16 %v2855
  %v2888 = vunpack.c.l.b16 %v2856
  %v2889 = vunpack.c.l.b16 %v2857
  %v2890 = vunpack.c.l.b16 %v2858
  %v2891 = vpack.c.b16 %v2876, %v2875
  %v2892 = vpack.c.b16 %v2878, %v2877
  %v2893 = vpack.c.b16 %v2880, %v2879
  %v2894 = vpack.c.b16 %v2882, %v2881
  %v2895 = vpack.c.b16 %v2884, %v2883
  %v2896 = vpack.c.b16 %v2886, %v2885
  %v2897 = vpack.c.b16 %v2888, %v2887
  %v2898 = vpack.c.b16 %v2890, %v2889
  %2907 = vmatpush.bf16.msra.mxu0 %v2898
  %2908 = vmatpush.bf16.msra.mxu0 %v2897
  %2909 = vmatpush.bf16.msra.mxu0 %v2896
  %2910 = vmatpush.bf16.msra.mxu0 %v2895
  %2911 = vmatpush.bf16.msra.mxu0 %v2894
  %2912 = vmatpush.bf16.msra.mxu0 %v2893
  %2913 = vmatpush.bf16.msra.mxu0 %v2892
  %2914 = vmatpush.bf16.msra.mxu0 %v2891
  %2915 = vmatmul.bf16.gmra.mxu0 %v2842
  %v2916 = vpop.f32.mrf.mxu0
  %v2917 = vadd.f32 0.0, %v2916
  %v2918 = vpop.f32.mrf.mxu0
  %2919 = vdwg.mxu0
  %v2921 = vperm.slane %v2840, 0
  %v2923 = vadd.f32 %v2921, %v2917
  %s2924 = scalar_lea.vmem [#allocation3], 1
  %v2925 = vld [vmem:[%s2924] ss:$7 sm:$0xff]
  %v2926 = vpack.c.bf16 %v2925, %v2925
  %s2927 = scalar_lea.vmem %s6, 64
  %v2928 = vld [vmem:[%s2927] sm:$0xf]
  %v2929 = vld [vmem:[%s2927 + $0x4] sm:$0xf]
  %v2930 = vld [vmem:[%s2927 + $0x8] sm:$0xf]
  %v2931 = vld [vmem:[%s2927 + $0xc] sm:$0xf]
  %v2932 = vld [vmem:[%s2927 + $0x10] sm:$0xf]
  %v2933 = vld [vmem:[%s2927 + $0x14] sm:$0xf]
  %v2934 = vld [vmem:[%s2927 + $0x18] sm:$0xf]
  %v2935 = vld [vmem:[%s2927 + $0x1c] sm:$0xf]
  %v2936 = vld [vmem:[%s2927 + $0x20] sm:$0xf]
  %v2937 = vld [vmem:[%s2927 + $0x24] sm:$0xf]
  %v2938 = vld [vmem:[%s2927 + $0x28] sm:$0xf]
  %v2939 = vld [vmem:[%s2927 + $0x2c] sm:$0xf]
  %v2940 = vld [vmem:[%s2927 + $0x30] sm:$0xf]
  %v2941 = vld [vmem:[%s2927 + $0x34] sm:$0xf]
  %v2942 = vld [vmem:[%s2927 + $0x38] sm:$0xf]
  %v2943 = vld [vmem:[%s2927 + $0x3c] sm:$0xf]
  %v2960 = vunpack.c.l.b16 %v2928
  %v2961 = vunpack.c.l.b16 %v2929
  %v2962 = vunpack.c.l.b16 %v2930
  %v2963 = vunpack.c.l.b16 %v2931
  %v2964 = vunpack.c.l.b16 %v2932
  %v2965 = vunpack.c.l.b16 %v2933
  %v2966 = vunpack.c.l.b16 %v2934
  %v2967 = vunpack.c.l.b16 %v2935
  %v2968 = vunpack.c.l.b16 %v2936
  %v2969 = vunpack.c.l.b16 %v2937
  %v2970 = vunpack.c.l.b16 %v2938
  %v2971 = vunpack.c.l.b16 %v2939
  %v2972 = vunpack.c.l.b16 %v2940
  %v2973 = vunpack.c.l.b16 %v2941
  %v2974 = vunpack.c.l.b16 %v2942
  %v2975 = vunpack.c.l.b16 %v2943
  %v2976 = vpack.c.b16 %v2961, %v2960
  %v2977 = vpack.c.b16 %v2963, %v2962
  %v2978 = vpack.c.b16 %v2965, %v2964
  %v2979 = vpack.c.b16 %v2967, %v2966
  %v2980 = vpack.c.b16 %v2969, %v2968
  %v2981 = vpack.c.b16 %v2971, %v2970
  %v2982 = vpack.c.b16 %v2973, %v2972
  %v2983 = vpack.c.b16 %v2975, %v2974
  %2992 = vmatpush.bf16.msra.mxu0 %v2983
  %2993 = vmatpush.bf16.msra.mxu0 %v2982
  %2994 = vmatpush.bf16.msra.mxu0 %v2981
  %2995 = vmatpush.bf16.msra.mxu0 %v2980
  %2996 = vmatpush.bf16.msra.mxu0 %v2979
  %2997 = vmatpush.bf16.msra.mxu0 %v2978
  %2998 = vmatpush.bf16.msra.mxu0 %v2977
  %2999 = vmatpush.bf16.msra.mxu0 %v2976
  %3000 = vmatmul.bf16.gmra.mxu0 %v2926
  %v3001 = vpop.f32.mrf.mxu0
  %v3002 = vadd.f32 0.0, %v3001
  %v3003 = vpop.f32.mrf.mxu0
  %3004 = vdwg.mxu0
  %v3005 = vadd.f32 %v2923, %v3002
  %s3006 = scalar_lea.vmem [#allocation3], 2
  %v3007 = vld [vmem:[%s3006] ss:$7 sm:$0xff]
  %v3008 = vpack.c.bf16 %v3007, %v3007
  %s3009 = scalar_lea.vmem %s6, 128
  %v3010 = vld [vmem:[%s3009] sm:$0xf]
  %v3011 = vld [vmem:[%s3009 + $0x4] sm:$0xf]
  %v3012 = vld [vmem:[%s3009 + $0x8] sm:$0xf]
  %v3013 = vld [vmem:[%s3009 + $0xc] sm:$0xf]
  %v3014 = vld [vmem:[%s3009 + $0x10] sm:$0xf]
  %v3015 = vld [vmem:[%s3009 + $0x14] sm:$0xf]
  %v3016 = vld [vmem:[%s3009 + $0x18] sm:$0xf]
  %v3017 = vld [vmem:[%s3009 + $0x1c] sm:$0xf]
  %v3018 = vld [vmem:[%s3009 + $0x20] sm:$0xf]
  %v3019 = vld [vmem:[%s3009 + $0x24] sm:$0xf]
  %v3020 = vld [vmem:[%s3009 + $0x28] sm:$0xf]
  %v3021 = vld [vmem:[%s3009 + $0x2c] sm:$0xf]
  %v3022 = vld [vmem:[%s3009 + $0x30] sm:$0xf]
  %v3023 = vld [vmem:[%s3009 + $0x34] sm:$0xf]
  %v3024 = vld [vmem:[%s3009 + $0x38] sm:$0xf]
  %v3025 = vld [vmem:[%s3009 + $0x3c] sm:$0xf]
  %v3042 = vunpack.c.l.b16 %v3010
  %v3043 = vunpack.c.l.b16 %v3011
  %v3044 = vunpack.c.l.b16 %v3012
  %v3045 = vunpack.c.l.b16 %v3013
  %v3046 = vunpack.c.l.b16 %v3014
  %v3047 = vunpack.c.l.b16 %v3015
  %v3048 = vunpack.c.l.b16 %v3016
  %v3049 = vunpack.c.l.b16 %v3017
  %v3050 = vunpack.c.l.b16 %v3018
  %v3051 = vunpack.c.l.b16 %v3019
  %v3052 = vunpack.c.l.b16 %v3020
  %v3053 = vunpack.c.l.b16 %v3021
  %v3054 = vunpack.c.l.b16 %v3022
  %v3055 = vunpack.c.l.b16 %v3023
  %v3056 = vunpack.c.l.b16 %v3024
  %v3057 = vunpack.c.l.b16 %v3025
  %v3058 = vpack.c.b16 %v3043, %v3042
  %v3059 = vpack.c.b16 %v3045, %v3044
  %v3060 = vpack.c.b16 %v3047, %v3046
  %v3061 = vpack.c.b16 %v3049, %v3048
  %v3062 = vpack.c.b16 %v3051, %v3050
  %v3063 = vpack.c.b16 %v3053, %v3052
  %v3064 = vpack.c.b16 %v3055, %v3054
  %v3065 = vpack.c.b16 %v3057, %v3056
  %3074 = vmatpush.bf16.msra.mxu0 %v3065
  %3075 = vmatpush.bf16.msra.mxu0 %v3064
  %3076 = vmatpush.bf16.msra.mxu0 %v3063
  %3077 = vmatpush.bf16.msra.mxu0 %v3062
  %3078 = vmatpush.bf16.msra.mxu0 %v3061
  %3079 = vmatpush.bf16.msra.mxu0 %v3060
  %3080 = vmatpush.bf16.msra.mxu0 %v3059
  %3081 = vmatpush.bf16.msra.mxu0 %v3058
  %3082 = vmatmul.bf16.gmra.mxu0 %v3008
  %v3083 = vpop.f32.mrf.mxu0
  %v3084 = vadd.f32 0.0, %v3083
  %v3085 = vpop.f32.mrf.mxu0
  %3086 = vdwg.mxu0
  %v3087 = vadd.f32 %v3005, %v3084
  %s3088 = scalar_lea.vmem [#allocation3], 3
  %v3089 = vld [vmem:[%s3088] ss:$7 sm:$0xff]
  %v3090 = vpack.c.bf16 %v3089, %v3089
  %s3091 = scalar_lea.vmem %s6, 192
  %v3092 = vld [vmem:[%s3091] sm:$0xf]
  %v3093 = vld [vmem:[%s3091 + $0x4] sm:$0xf]
  %v3094 = vld [vmem:[%s3091 + $0x8] sm:$0xf]
  %v3095 = vld [vmem:[%s3091 + $0xc] sm:$0xf]
  %v3096 = vld [vmem:[%s3091 + $0x10] sm:$0xf]
  %v3097 = vld [vmem:[%s3091 + $0x14] sm:$0xf]
  %v3098 = vld [vmem:[%s3091 + $0x18] sm:$0xf]
  %v3099 = vld [vmem:[%s3091 + $0x1c] sm:$0xf]
  %v3100 = vld [vmem:[%s3091 + $0x20] sm:$0xf]
  %v3101 = vld [vmem:[%s3091 + $0x24] sm:$0xf]
  %v3102 = vld [vmem:[%s3091 + $0x28] sm:$0xf]
  %v3103 = vld [vmem:[%s3091 + $0x2c] sm:$0xf]
  %v3104 = vld [vmem:[%s3091 + $0x30] sm:$0xf]
  %v3105 = vld [vmem:[%s3091 + $0x34] sm:$0xf]
  %v3106 = vld [vmem:[%s3091 + $0x38] sm:$0xf]
  %v3107 = vld [vmem:[%s3091 + $0x3c] sm:$0xf]
  %v3124 = vunpack.c.l.b16 %v3092
  %v3125 = vunpack.c.l.b16 %v3093
  %v3126 = vunpack.c.l.b16 %v3094
  %v3127 = vunpack.c.l.b16 %v3095
  %v3128 = vunpack.c.l.b16 %v3096
  %v3129 = vunpack.c.l.b16 %v3097
  %v3130 = vunpack.c.l.b16 %v3098
  %v3131 = vunpack.c.l.b16 %v3099
  %v3132 = vunpack.c.l.b16 %v3100
  %v3133 = vunpack.c.l.b16 %v3101
  %v3134 = vunpack.c.l.b16 %v3102
  %v3135 = vunpack.c.l.b16 %v3103
  %v3136 = vunpack.c.l.b16 %v3104
  %v3137 = vunpack.c.l.b16 %v3105
  %v3138 = vunpack.c.l.b16 %v3106
  %v3139 = vunpack.c.l.b16 %v3107
  %v3140 = vpack.c.b16 %v3125, %v3124
  %v3141 = vpack.c.b16 %v3127, %v3126
  %v3142 = vpack.c.b16 %v3129, %v3128
  %v3143 = vpack.c.b16 %v3131, %v3130
  %v3144 = vpack.c.b16 %v3133, %v3132
  %v3145 = vpack.c.b16 %v3135, %v3134
  %v3146 = vpack.c.b16 %v3137, %v3136
  %v3147 = vpack.c.b16 %v3139, %v3138
  %3156 = vmatpush.bf16.msra.mxu0 %v3147
  %3157 = vmatpush.bf16.msra.mxu0 %v3146
  %3158 = vmatpush.bf16.msra.mxu0 %v3145
  %3159 = vmatpush.bf16.msra.mxu0 %v3144
  %3160 = vmatpush.bf16.msra.mxu0 %v3143
  %3161 = vmatpush.bf16.msra.mxu0 %v3142
  %3162 = vmatpush.bf16.msra.mxu0 %v3141
  %3163 = vmatpush.bf16.msra.mxu0 %v3140
  %3164 = vmatmul.bf16.gmra.mxu0 %v3090
  %v3165 = vpop.f32.mrf.mxu0
  %v3166 = vadd.f32 0.0, %v3165
  %v3167 = vpop.f32.mrf.mxu0
  %3168 = vdwg.mxu0
  %v3169 = vadd.f32 %v3087, %v3166
  %s3170 = scalar_lea.vmem [#allocation3], 4
  %v3171 = vld [vmem:[%s3170] ss:$7 sm:$0xff]
  %v3172 = vpack.c.bf16 %v3171, %v3171
  %s3173 = scalar_lea.vmem %s6, 256
  %v3174 = vld [vmem:[%s3173] sm:$0xf]
  %v3175 = vld [vmem:[%s3173 + $0x4] sm:$0xf]
  %v3176 = vld [vmem:[%s3173 + $0x8] sm:$0xf]
  %v3177 = vld [vmem:[%s3173 + $0xc] sm:$0xf]
  %v3178 = vld [vmem:[%s3173 + $0x10] sm:$0xf]
  %v3179 = vld [vmem:[%s3173 + $0x14] sm:$0xf]
  %v3180 = vld [vmem:[%s3173 + $0x18] sm:$0xf]
  %v3181 = vld [vmem:[%s3173 + $0x1c] sm:$0xf]
  %v3182 = vld [vmem:[%s3173 + $0x20] sm:$0xf]
  %v3183 = vld [vmem:[%s3173 + $0x24] sm:$0xf]
  %v3184 = vld [vmem:[%s3173 + $0x28] sm:$0xf]
  %v3185 = vld [vmem:[%s3173 + $0x2c] sm:$0xf]
  %v3186 = vld [vmem:[%s3173 + $0x30] sm:$0xf]
  %v3187 = vld [vmem:[%s3173 + $0x34] sm:$0xf]
  %v3188 = vld [vmem:[%s3173 + $0x38] sm:$0xf]
  %v3189 = vld [vmem:[%s3173 + $0x3c] sm:$0xf]
  %v3206 = vunpack.c.l.b16 %v3174
  %v3207 = vunpack.c.l.b16 %v3175
  %v3208 = vunpack.c.l.b16 %v3176
  %v3209 = vunpack.c.l.b16 %v3177
  %v3210 = vunpack.c.l.b16 %v3178
  %v3211 = vunpack.c.l.b16 %v3179
  %v3212 = vunpack.c.l.b16 %v3180
  %v3213 = vunpack.c.l.b16 %v3181
  %v3214 = vunpack.c.l.b16 %v3182
  %v3215 = vunpack.c.l.b16 %v3183
  %v3216 = vunpack.c.l.b16 %v3184
  %v3217 = vunpack.c.l.b16 %v3185
  %v3218 = vunpack.c.l.b16 %v3186
  %v3219 = vunpack.c.l.b16 %v3187
  %v3220 = vunpack.c.l.b16 %v3188
  %v3221 = vunpack.c.l.b16 %v3189
  %v3222 = vpack.c.b16 %v3207, %v3206
  %v3223 = vpack.c.b16 %v3209, %v3208
  %v3224 = vpack.c.b16 %v3211, %v3210
  %v3225 = vpack.c.b16 %v3213, %v3212
  %v3226 = vpack.c.b16 %v3215, %v3214
  %v3227 = vpack.c.b16 %v3217, %v3216
  %v3228 = vpack.c.b16 %v3219, %v3218
  %v3229 = vpack.c.b16 %v3221, %v3220
  %3238 = vmatpush.bf16.msra.mxu0 %v3229
  %3239 = vmatpush.bf16.msra.mxu0 %v3228
  %3240 = vmatpush.bf16.msra.mxu0 %v3227
  %3241 = vmatpush.bf16.msra.mxu0 %v3226
  %3242 = vmatpush.bf16.msra.mxu0 %v3225
  %3243 = vmatpush.bf16.msra.mxu0 %v3224
  %3244 = vmatpush.bf16.msra.mxu0 %v3223
  %3245 = vmatpush.bf16.msra.mxu0 %v3222
  %3246 = vmatmul.bf16.gmra.mxu0 %v3172
  %v3247 = vpop.f32.mrf.mxu0
  %v3248 = vadd.f32 0.0, %v3247
  %v3249 = vpop.f32.mrf.mxu0
  %3250 = vdwg.mxu0
  %v3251 = vadd.f32 %v3169, %v3248
  %v3252 = vmax.f32 %v3251, 0.0
  %v3253 = vpack.c.bf16 %v3252, %v3252
  %v3254 = vld [vmem:[%s8] sm:$0xf]
  %v3255 = vld [vmem:[%s8 + $0x4] sm:$0xf]
  %v3256 = vld [vmem:[%s8 + $0x8] sm:$0xf]
  %v3257 = vld [vmem:[%s8 + $0xc] sm:$0xf]
  %v3258 = vld [vmem:[%s8 + $0x10] sm:$0xf]
  %v3259 = vld [vmem:[%s8 + $0x14] sm:$0xf]
  %v3260 = vld [vmem:[%s8 + $0x18] sm:$0xf]
  %v3261 = vld [vmem:[%s8 + $0x1c] sm:$0xf]
  %v3262 = vld [vmem:[%s8 + $0x20] sm:$0xf]
  %v3263 = vld [vmem:[%s8 + $0x24] sm:$0xf]
  %v3264 = vld [vmem:[%s8 + $0x28] sm:$0xf]
  %v3265 = vld [vmem:[%s8 + $0x2c] sm:$0xf]
  %v3266 = vld [vmem:[%s8 + $0x30] sm:$0xf]
  %v3267 = vld [vmem:[%s8 + $0x34] sm:$0xf]
  %v3268 = vld [vmem:[%s8 + $0x38] sm:$0xf]
  %v3269 = vld [vmem:[%s8 + $0x3c] sm:$0xf]
  %v3270 = vld [vmem:[%s9] sm:$0x1]
  %v3272 = vperm.slane %v3270, 0
  %v3290 = vunpack.c.l.b16 %v3254
  %v3291 = vunpack.c.l.b16 %v3255
  %v3292 = vunpack.c.l.b16 %v3256
  %v3293 = vunpack.c.l.b16 %v3257
  %v3294 = vunpack.c.l.b16 %v3258
  %v3295 = vunpack.c.l.b16 %v3259
  %v3296 = vunpack.c.l.b16 %v3260
  %v3297 = vunpack.c.l.b16 %v3261
  %v3298 = vunpack.c.l.b16 %v3262
  %v3299 = vunpack.c.l.b16 %v3263
  %v3300 = vunpack.c.l.b16 %v3264
  %v3301 = vunpack.c.l.b16 %v3265
  %v3302 = vunpack.c.l.b16 %v3266
  %v3303 = vunpack.c.l.b16 %v3267
  %v3304 = vunpack.c.l.b16 %v3268
  %v3305 = vunpack.c.l.b16 %v3269
  %v3306 = vpack.c.b16 %v3291, %v3290
  %v3307 = vpack.c.b16 %v3293, %v3292
  %v3308 = vpack.c.b16 %v3295, %v3294
  %v3309 = vpack.c.b16 %v3297, %v3296
  %v3310 = vpack.c.b16 %v3299, %v3298
  %v3311 = vpack.c.b16 %v3301, %v3300
  %v3312 = vpack.c.b16 %v3303, %v3302
  %v3313 = vpack.c.b16 %v3305, %v3304
  %3322 = vmatpush.bf16.msra.mxu0 %v3313
  %3323 = vmatpush.bf16.msra.mxu0 %v3312
  %3324 = vmatpush.bf16.msra.mxu0 %v3311
  %3325 = vmatpush.bf16.msra.mxu0 %v3310
  %3326 = vmatpush.bf16.msra.mxu0 %v3309
  %3327 = vmatpush.bf16.msra.mxu0 %v3308
  %3328 = vmatpush.bf16.msra.mxu0 %v3307
  %3329 = vmatpush.bf16.msra.mxu0 %v3306
  %3330 = vmatmul.bf16.gmra.mxu0 %v3253
  %v3331 = vpop.f32.mrf.mxu0
  %v3332 = vadd.f32 %v3272, %v3331
  %v3333 = vpop.f32.mrf.mxu0
  %3334 = vdwg.mxu0
  %v3335 = vmax.f32 %v3332, 0.0
  %v3336 = vpack.c.bf16 %v3335, %v3335
  %v3337 = vld [vmem:[%s10] sm:$0xf]
  %v3338 = vld [vmem:[%s10 + $0x4] sm:$0xf]
  %v3339 = vld [vmem:[%s10 + $0x8] sm:$0xf]
  %v3340 = vld [vmem:[%s10 + $0xc] sm:$0xf]
  %v3341 = vld [vmem:[%s10 + $0x10] sm:$0xf]
  %v3342 = vld [vmem:[%s10 + $0x14] sm:$0xf]
  %v3343 = vld [vmem:[%s10 + $0x18] sm:$0xf]
  %v3344 = vld [vmem:[%s10 + $0x1c] sm:$0xf]
  %v3345 = vld [vmem:[%s10 + $0x20] sm:$0xf]
  %v3346 = vld [vmem:[%s10 + $0x24] sm:$0xf]
  %v3347 = vld [vmem:[%s10 + $0x28] sm:$0xf]
  %v3348 = vld [vmem:[%s10 + $0x2c] sm:$0xf]
  %v3349 = vld [vmem:[%s10 + $0x30] sm:$0xf]
  %v3350 = vld [vmem:[%s10 + $0x34] sm:$0xf]
  %v3351 = vld [vmem:[%s10 + $0x38] sm:$0xf]
  %v3352 = vld [vmem:[%s10 + $0x3c] sm:$0xf]
  %v3353 = vld [vmem:[%s11] sm:$0x1]
  %v3355 = vperm.slane %v3353, 0
  %v3373 = vunpack.c.l.b16 %v3337
  %v3374 = vunpack.c.l.b16 %v3338
  %v3375 = vunpack.c.l.b16 %v3339
  %v3376 = vunpack.c.l.b16 %v3340
  %v3377 = vunpack.c.l.b16 %v3341
  %v3378 = vunpack.c.l.b16 %v3342
  %v3379 = vunpack.c.l.b16 %v3343
  %v3380 = vunpack.c.l.b16 %v3344
  %v3381 = vunpack.c.l.b16 %v3345
  %v3382 = vunpack.c.l.b16 %v3346
  %v3383 = vunpack.c.l.b16 %v3347
  %v3384 = vunpack.c.l.b16 %v3348
  %v3385 = vunpack.c.l.b16 %v3349
  %v3386 = vunpack.c.l.b16 %v3350
  %v3387 = vunpack.c.l.b16 %v3351
  %v3388 = vunpack.c.l.b16 %v3352
  %v3389 = vpack.c.b16 %v3374, %v3373
  %v3390 = vpack.c.b16 %v3376, %v3375
  %v3391 = vpack.c.b16 %v3378, %v3377
  %v3392 = vpack.c.b16 %v3380, %v3379
  %v3393 = vpack.c.b16 %v3382, %v3381
  %v3394 = vpack.c.b16 %v3384, %v3383
  %v3395 = vpack.c.b16 %v3386, %v3385
  %v3396 = vpack.c.b16 %v3388, %v3387
  %3405 = vmatpush.bf16.msra.mxu0 %v3396
  %3406 = vmatpush.bf16.msra.mxu0 %v3395
  %3407 = vmatpush.bf16.msra.mxu0 %v3394
  %3408 = vmatpush.bf16.msra.mxu0 %v3393
  %3409 = vmatpush.bf16.msra.mxu0 %v3392
  %3410 = vmatpush.bf16.msra.mxu0 %v3391
  %3411 = vmatpush.bf16.msra.mxu0 %v3390
  %3412 = vmatpush.bf16.msra.mxu0 %v3389
  %3413 = vmatmul.bf16.gmra.mxu0 %v3336
  %v3414 = vpop.f32.mrf.mxu0
  %v3415 = vadd.f32 %v3355, %v3414
  %v3416 = vpop.f32.mrf.mxu0
  %3417 = vdwg.mxu0
  %3418 = vst [vmem:[%s12] sm:$0xff] %v3415
  // Predicated region
  $region50: #{cnn_cifar_forward.1} parent=0 // pred_check
    _
  $region51: #{cnn_cifar_forward.1} parent=0 // pred_check_branch
    %3420 = sbr.rel (0) target = $region53
  $region52: #{cnn_cifar_forward.1} parent=0 // pred_region
    _
  $region53: #{cnn_cifar_forward.1} parent=0 // pred_fallthru
    _
  // Predicated region
  $region54: #{cnn_cifar_forward.1} parent=0 // pred_check
    _
  $region55: #{cnn_cifar_forward.1} parent=0 // pred_check_branch
    %3422 = sbr.rel (0) target = $region57
  $region56: #{cnn_cifar_forward.1} parent=0 // pred_region
    _
  $region57: #{cnn_cifar_forward.1} parent=0 // pred_fallthru
    _

</llo_original>
